<compile_context>
chip_gen: v6e
topology: v6e:2x2x1
jax: 0.10.0
libtpu: 0.0.40
codegen_flags: <defaults>
</compile_context>

<pallas_src>
import math

import jax
import jax.numpy as jnp
from jax import lax
from jax.experimental import pallas as pl
from jax.experimental.pallas import tpu as pltpu


# ----------------------------- Pallas kernel --------------------------------


def _lstm_model_kernel(
    x_ref,        # (T, Bt, Dp)        time-major padded input block
    tw_ref,       # (Dp, Hp)           trans weight, pre-transposed
    tb_ref,       # (1, Hp)
    wih_ref,      # (L, Hp, 4Hp)       gate-reordered, pre-transposed
    whh_ref,      # (L, Hp, 4Hp)
    bg_ref,       # (L, 1, 4Hp)        b_ih + b_hh, gate-reordered
    pw1_ref,      # (Hp, Hp)
    pb1_ref,      # (1, Hp)
    pw2_ref,      # (Hp, Pp)
    pb2_ref,      # (1, Pp)
    out_ref,      # (Bt, Pp)
    seq_scr,      # VMEM (T, Bt, Hp)   current layer's hidden sequence
    gx_scr,       # VMEM (T, Bt, 4Hp)  hoisted input-path gates
):
    T, Bt, Dp = x_ref.shape
    Hp = tw_ref.shape[1]
    L = wih_ref.shape[0]
    TB = T * Bt
    unroll = T <= 16

    # Fused `trans` Linear over every (t, b) position: one lane-dense GEMM.
    x_flat = x_ref[...].reshape(TB, Dp)
    seq_scr[...] = (
        jnp.dot(x_flat, tw_ref[...], preferred_element_type=jnp.float32)
        + tb_ref[...]
    ).reshape(T, Bt, Hp)

    h = jnp.zeros((Bt, Hp), jnp.float32)
    c = jnp.zeros((Bt, Hp), jnp.float32)

    for layer in range(L):
        # Hoisted input-path projection for ALL timesteps (bias folded in here,
        # so the recurrent body has no per-step broadcast of b).
        seq_flat = seq_scr[...].reshape(TB, Hp)
        gx_scr[...] = (
            jnp.dot(seq_flat, wih_ref[layer], preferred_element_type=jnp.float32)
            + bg_ref[layer]
        ).reshape(T, Bt, 4 * Hp)

        w_hh = whh_ref[layer]              # (Hp, 4Hp) loaded once per layer
        write_seq = layer < L - 1          # last layer only needs h[T-1]

        def step(t, carry, w_hh=w_hh, write_seq=write_seq):
            h, c = carry
            gates = gx_scr[t] + jnp.dot(
                h, w_hh, preferred_element_type=jnp.float32
            )
            # Gates are pre-reordered to [i | f | o | g]: one contiguous sigmoid
            # slab + one tanh slab, all slices on 128-lane boundaries.
            ifo = jax.nn.sigmoid(gates[:, : 3 * Hp])
            g_g = jnp.tanh(gates[:, 3 * Hp:])
            i_g = ifo[:, :Hp]
            f_g = ifo[:, Hp:2 * Hp]
            o_g = ifo[:, 2 * Hp:3 * Hp]
            c_new = f_g * c + i_g * g_g
            h_new = o_g * jnp.tanh(c_new)
            if write_seq:
                seq_scr[t] = h_new
            return h_new, c_new

        h, c = lax.fori_loop(
            0, T, step,
            (jnp.zeros((Bt, Hp), jnp.float32), jnp.zeros((Bt, Hp), jnp.float32)),
            unroll=unroll,
        )

    # Fused predictor MLP on the last timestep's hidden state.
    z = jnp.maximum(
        jnp.dot(h, pw1_ref[...], preferred_element_type=jnp.float32) + pb1_ref[...],
        0.0,
    )
    out_ref[...] = (
        jnp.dot(z, pw2_ref[...], preferred_element_type=jnp.float32) + pb2_ref[...]
    )


# --------------------------- layout / padding prep ---------------------------


def _round_up(n, m):
    return ((n + m - 1) // m) * m


def _pad_axis(a, axis, target):
    pad = target - a.shape[axis]
    if pad == 0:
        return a
    widths = [(0, 0)] * a.ndim
    widths[axis] = (0, pad)
    return jnp.pad(a, widths)


def _prep_gate_matrix(w, Hp, in_target):
    # w: (4H, I) in PyTorch gate order [i; f; g; o]. Reorder to [i; f; o; g],
    # zero-pad each gate block to Hp rows and the input dim to in_target cols,
    # then transpose so the kernel does x @ W directly (no in-kernel transpose).
    i, f, g, o = jnp.split(w, 4, axis=0)
    blocks = [_pad_axis(p, 0, Hp) for p in (i, f, o, g)]
    w4 = jnp.concatenate(blocks, axis=0)       # (4Hp, I)
    w4 = _pad_axis(w4, 1, in_target)           # (4Hp, in_target)
    return w4.T                                # (in_target, 4Hp)


def _prep_gate_bias(b_ih, b_hh, Hp):
    b = b_ih + b_hh
    i, f, g, o = jnp.split(b, 4)
    parts = [_pad_axis(p, 0, Hp) for p in (i, f, o, g)]
    return jnp.concatenate(parts).reshape(1, 4 * Hp)


# ------------------------------ model ---------------------------------------


def init_params(key, input_size, hidden_size, num_layers, num_preds):
    def uniform(k, shape, fan_in):
        bound = 1.0 / math.sqrt(fan_in)
        return jax.random.uniform(k, shape, jnp.float32, -bound, bound)

    keys = iter(jax.random.split(key, 8 + 4 * num_layers))
    params = {}
    params["trans_w"] = uniform(next(keys), (hidden_size, input_size), input_size)
    params["trans_b"] = uniform(next(keys), (hidden_size,), input_size)
    lstm = []
    for _ in range(num_layers):
        in_dim = hidden_size  # layer-0 input is already hidden_size (after trans)
        lstm.append(
            dict(
                w_ih=uniform(next(keys), (4 * hidden_size, in_dim), hidden_size),
                w_hh=uniform(next(keys), (4 * hidden_size, hidden_size), hidden_size),
                b_ih=uniform(next(keys), (4 * hidden_size,), hidden_size),
                b_hh=uniform(next(keys), (4 * hidden_size,), hidden_size),
            )
        )
    params["lstm"] = lstm
    params["pred_w1"] = uniform(next(keys), (hidden_size, hidden_size), hidden_size)
    params["pred_b1"] = uniform(next(keys), (hidden_size,), hidden_size)
    params["pred_w2"] = uniform(next(keys), (num_preds, hidden_size), hidden_size)
    params["pred_b2"] = uniform(next(keys), (num_preds,), hidden_size)
    return params


@jax.jit
def lstm_forward(params, x):
    # x: (B, T, input_size) -- batch_first, like PyTorch
    x = x.astype(jnp.float32)
    B, T, D = x.shape
    H = params["trans_w"].shape[0]
    P = params["pred_w2"].shape[0]
    L = len(params["lstm"])

    # Lane/sublane-dense padded sizes.
    Hp = _round_up(H, 128)
    Dp = _round_up(D, 128)
    Pp = _round_up(P, 128)
    Bp = _round_up(B, 8)
    block_b = Bp if Bp <= 64 else 64
    Bp = _round_up(Bp, block_b)

    # ---- layout prep: time-major, padded, weights pre-transposed ----
    x_tm = _pad_axis(_pad_axis(jnp.transpose(x, (1, 0, 2)), 1, Bp), 2, Dp)

    tw = _pad_axis(_pad_axis(params["trans_w"], 0, Hp), 1, Dp).T        # (Dp, Hp)
    tb = _pad_axis(params["trans_b"], 0, Hp).reshape(1, Hp)

    wih = jnp.stack([_prep_gate_matrix(l["w_ih"], Hp, Hp) for l in params["lstm"]])
    whh = jnp.stack([_prep_gate_matrix(l["w_hh"], Hp, Hp) for l in params["lstm"]])
    bg = jnp.stack([_prep_gate_bias(l["b_ih"], l["b_hh"], Hp) for l in params["lstm"]])

    pw1 = _pad_axis(_pad_axis(params["pred_w1"], 0, Hp), 1, Hp).T       # (Hp, Hp)
    pb1 = _pad_axis(params["pred_b1"], 0, Hp).reshape(1, Hp)
    pw2 = _pad_axis(_pad_axis(params["pred_w2"], 0, Pp), 1, Hp).T       # (Hp, Pp)
    pb2 = _pad_axis(params["pred_b2"], 0, Pp).reshape(1, Pp)

    grid = (Bp // block_b,)

    # Explicit VMEM budget (inputs double-buffered) with headroom, clamped to a
    # value safe on all of v5e / v6e / v7x.
    vmem_bytes = 4 * (
        2 * T * block_b * Dp
        + 2 * (Dp * Hp + Hp)
        + 2 * (2 * L * Hp * 4 * Hp + L * 4 * Hp)
        + 2 * (Hp * Hp + Hp + Hp * Pp + Pp)
        + T * block_b * Hp
        + T * block_b * 4 * Hp
        + 2 * block_b * Pp
    )
    vmem_limit = int(min(max(vmem_bytes * 3 // 2, 16 * 2**20), 64 * 2**20))

    out = pl.pallas_call(
        _lstm_model_kernel,
        out_shape=jax.ShapeDtypeStruct((Bp, Pp), jnp.float32),
        grid_spec=pltpu.PrefetchScalarGridSpec(
            num_scalar_prefetch=0,
            grid=grid,
            in_specs=[
                pl.BlockSpec((T, block_b, Dp), lambda b: (0, b, 0)),   # x
                pl.BlockSpec((Dp, Hp), lambda b: (0, 0)),              # trans W^T
                pl.BlockSpec((1, Hp), lambda b: (0, 0)),               # trans b
                pl.BlockSpec((L, Hp, 4 * Hp), lambda b: (0, 0, 0)),    # W_ih^T
                pl.BlockSpec((L, Hp, 4 * Hp), lambda b: (0, 0, 0)),    # W_hh^T
                pl.BlockSpec((L, 1, 4 * Hp), lambda b: (0, 0, 0)),     # gate bias
                pl.BlockSpec((Hp, Hp), lambda b: (0, 0)),              # pred W1^T
                pl.BlockSpec((1, Hp), lambda b: (0, 0)),               # pred b1
                pl.BlockSpec((Hp, Pp), lambda b: (0, 0)),              # pred W2^T
                pl.BlockSpec((1, Pp), lambda b: (0, 0)),               # pred b2
            ],
            out_specs=pl.BlockSpec((block_b, Pp), lambda b: (b, 0)),
            scratch_shapes=[
                pltpu.VMEM((T, block_b, Hp), jnp.float32),        # hidden sequence
                pltpu.VMEM((T, block_b, 4 * Hp), jnp.float32),    # hoisted gates_x
            ],
        ),
        compiler_params=pltpu.CompilerParams(
            dimension_semantics=("parallel",),
            vmem_limit_bytes=vmem_limit,
        ),
    )(x_tm, tw, tb, wih, whh, bg, pw1, pb1, pw2, pb2)

    return out[:B, :P]


# ------------------------------ reference (pure JAX) -------------------------


def reference_forward(params, x):
    x = x.astype(jnp.float32)
    h = x @ params["trans_w"].T + params["trans_b"]
    B, T, H = h.shape
    out = h
    for layer in params["lstm"]:
        w_ih, w_hh = layer["w_ih"], layer["w_hh"]
        b = layer["b_ih"] + layer["b_hh"]
        hs = jnp.zeros((B, H), jnp.float32)
        cs = jnp.zeros((B, H), jnp.float32)
        ys = []
        for t in range(T):
            g = out[:, t, :] @ w_ih.T + hs @ w_hh.T + b
            i = jax.nn.sigmoid(g[:, 0 * H:1 * H])
            f = jax.nn.sigmoid(g[:, 1 * H:2 * H])
            gg = jnp.tanh(g[:, 2 * H:3 * H])
            o = jax.nn.sigmoid(g[:, 3 * H:4 * H])
            cs = f * cs + i * gg
            hs = o * jnp.tanh(cs)
            ys.append(hs)
        out = jnp.stack(ys, axis=1)
    last = out[:, -1, :]
    p = jnp.maximum(last @ params["pred_w1"].T + params["pred_b1"], 0.0)
    return p @ params["pred_w2"].T + params["pred_b2"]


# ------------------------------ main -----------------------------------------

if __name__ == "__main__":
    B, T = 2, 8
    input_size, hidden_size, num_layers, num_preds = 4, 32, 2, 3

    key = jax.random.PRNGKey(0)
    pkey, xkey = jax.random.split(key)
    params = init_params(pkey, input_size, hidden_size, num_layers, num_preds)
    x = jax.random.normal(xkey, (B, T, input_size), jnp.float32)

    y = lstm_forward(params, x)
    y = jax.block_until_ready(y)

    y_ref = reference_forward(params, x)
    assert y.shape == (B, num_preds), y.shape
    assert jnp.allclose(y, y_ref, atol=2e-4, rtol=2e-4), "mismatch vs reference"

    print("KERNEL_OK")
</pallas_src>

<mosaic_0001>
module attributes {stable_mosaic.version = 11 : i64} {
  func.func @_lstm_model_kernel(%arg0: i32, %arg1: memref<8x8x128xf32, #tpu.memory_space<vmem>>, %arg2: memref<128x128xf32, #tpu.memory_space<vmem>>, %arg3: memref<1x128xf32, #tpu.memory_space<vmem>>, %arg4: memref<2x128x512xf32, #tpu.memory_space<vmem>>, %arg5: memref<2x128x512xf32, #tpu.memory_space<vmem>>, %arg6: memref<2x1x512xf32, #tpu.memory_space<vmem>>, %arg7: memref<128x128xf32, #tpu.memory_space<vmem>>, %arg8: memref<1x128xf32, #tpu.memory_space<vmem>>, %arg9: memref<128x128xf32, #tpu.memory_space<vmem>>, %arg10: memref<1x128xf32, #tpu.memory_space<vmem>>, %arg11: memref<8x128xf32, #tpu.memory_space<vmem>>, %arg12: memref<8x8x128xf32, #tpu.memory_space<vmem>>, %arg13: memref<8x8x512xf32, #tpu.memory_space<vmem>>) attributes {dimension_semantics = [#tpu.dimension_semantics<parallel>], iteration_bounds = array<i64: 1>, scalar_prefetch = 0 : i64, scratch_operands = 2 : i64, tpu.core_type = #tpu.core_type<tc>, window_params = [{transform_indices = @transform_0, window_bounds = array<i64: 8, 8, 128>}, {pipeline_mode = #tpu.pipeline_mode<synchronous>, transform_indices = @transform_1, window_bounds = array<i64: 128, 128>}, {pipeline_mode = #tpu.pipeline_mode<synchronous>, transform_indices = @transform_2, window_bounds = array<i64: 1, 128>}, {pipeline_mode = #tpu.pipeline_mode<synchronous>, transform_indices = @transform_3, window_bounds = array<i64: 2, 128, 512>}, {pipeline_mode = #tpu.pipeline_mode<synchronous>, transform_indices = @transform_4, window_bounds = array<i64: 2, 128, 512>}, {pipeline_mode = #tpu.pipeline_mode<synchronous>, transform_indices = @transform_5, window_bounds = array<i64: 2, 1, 512>}, {pipeline_mode = #tpu.pipeline_mode<synchronous>, transform_indices = @transform_6, window_bounds = array<i64: 128, 128>}, {pipeline_mode = #tpu.pipeline_mode<synchronous>, transform_indices = @transform_7, window_bounds = array<i64: 1, 128>}, {pipeline_mode = #tpu.pipeline_mode<synchronous>, transform_indices = @transform_8, window_bounds = array<i64: 128, 128>}, {pipeline_mode = #tpu.pipeline_mode<synchronous>, transform_indices = @transform_9, window_bounds = array<i64: 1, 128>}, {transform_indices = @transform_10, window_bounds = array<i64: 8, 128>}]} {
    %c0 = arith.constant 0 : index
    %c0_0 = arith.constant 0 : index
    %c0_1 = arith.constant 0 : index
    %0 = vector.load %arg1[%c0, %c0_0, %c0_1] : memref<8x8x128xf32, #tpu.memory_space<vmem>>, vector<8x8x128xf32>
    %1 = vector.shape_cast %0 : vector<8x8x128xf32> to vector<64x128xf32>
    %c0_2 = arith.constant 0 : index
    %c0_3 = arith.constant 0 : index
    %2 = vector.load %arg2[%c0_2, %c0_3] : memref<128x128xf32, #tpu.memory_space<vmem>>, vector<128x128xf32>
    %cst = arith.constant dense<0.000000e+00> : vector<64x128xf32>
    %3 = tpu.matmul %1, %2, %cst {dimension_numbers = #tpu.dot_dimension_numbers<[1], [0], [0], [1], [0, 0, 1, 1], [], []>} : vector<64x128xf32>, vector<128x128xf32>, vector<64x128xf32> -> vector<64x128xf32>
    %c0_4 = arith.constant 0 : index
    %c0_5 = arith.constant 0 : index
    %4 = vector.load %arg3[%c0_4, %c0_5] : memref<1x128xf32, #tpu.memory_space<vmem>>, vector<1x128xf32>
    %5 = vector.broadcast %4 : vector<1x128xf32> to vector<64x128xf32>
    %6 = arith.addf %3, %5 : vector<64x128xf32>
    %7 = vector.shape_cast %6 : vector<64x128xf32> to vector<8x8x128xf32>
    %c0_6 = arith.constant 0 : index
    %c0_7 = arith.constant 0 : index
    %c0_8 = arith.constant 0 : index
    %8 = vector.load %arg12[%c0_6, %c0_7, %c0_8] : memref<8x8x128xf32, #tpu.memory_space<vmem>>, vector<8x8x128xf32>
    tpu.vector_store %arg12[%c0_6, %c0_7, %c0_8], %7 {strides = array<i32>} : memref<8x8x128xf32, #tpu.memory_space<vmem>>, vector<8x8x128xf32>,
    %c0_9 = arith.constant 0 : index
    %c0_10 = arith.constant 0 : index
    %c0_11 = arith.constant 0 : index
    %9 = vector.load %arg12[%c0_9, %c0_10, %c0_11] : memref<8x8x128xf32, #tpu.memory_space<vmem>>, vector<8x8x128xf32>
    %10 = vector.shape_cast %9 : vector<8x8x128xf32> to vector<64x128xf32>
    %c0_12 = arith.constant 0 : index
    %c0_13 = arith.constant 0 : index
    %c0_14 = arith.constant 0 : index
    %11 = vector.load %arg4[%c0_12, %c0_13, %c0_14] : memref<2x128x512xf32, #tpu.memory_space<vmem>>, vector<1x128x512xf32>
    %12 = vector.shape_cast %11 : vector<1x128x512xf32> to vector<128x512xf32>
    %cst_15 = arith.constant dense<0.000000e+00> : vector<64x512xf32>
    %13 = tpu.matmul %10, %12, %cst_15 {dimension_numbers = #tpu.dot_dimension_numbers<[1], [0], [0], [1], [0, 0, 1, 1], [], []>} : vector<64x128xf32>, vector<128x512xf32>, vector<64x512xf32> -> vector<64x512xf32>
    %c0_16 = arith.constant 0 : index
    %c0_17 = arith.constant 0 : index
    %c0_18 = arith.constant 0 : index
    %14 = vector.load %arg6[%c0_16, %c0_17, %c0_18] : memref<2x1x512xf32, #tpu.memory_space<vmem>>, vector<1x1x512xf32>
    %15 = vector.shape_cast %14 : vector<1x1x512xf32> to vector<1x512xf32>
    %16 = vector.broadcast %15 : vector<1x512xf32> to vector<64x512xf32>
    %17 = arith.addf %13, %16 : vector<64x512xf32>
    %18 = vector.shape_cast %17 : vector<64x512xf32> to vector<8x8x512xf32>
    %c0_19 = arith.constant 0 : index
    %c0_20 = arith.constant 0 : index
    %c0_21 = arith.constant 0 : index
    %19 = vector.load %arg13[%c0_19, %c0_20, %c0_21] : memref<8x8x512xf32, #tpu.memory_space<vmem>>, vector<8x8x512xf32>
    tpu.vector_store %arg13[%c0_19, %c0_20, %c0_21], %18 {strides = array<i32>} : memref<8x8x512xf32, #tpu.memory_space<vmem>>, vector<8x8x512xf32>,
    %c0_22 = arith.constant 0 : index
    %c0_23 = arith.constant 0 : index
    %c0_24 = arith.constant 0 : index
    %20 = vector.load %arg5[%c0_22, %c0_23, %c0_24] : memref<2x128x512xf32, #tpu.memory_space<vmem>>, vector<1x128x512xf32>
    %21 = vector.shape_cast %20 : vector<1x128x512xf32> to vector<128x512xf32>
    %cst_25 = arith.constant 0.000000e+00 : f32
    %22 = vector.broadcast %cst_25 : f32 to vector<8x128xf32>
    %cst_26 = arith.constant 0.000000e+00 : f32
    %23 = vector.broadcast %cst_26 : f32 to vector<8x128xf32>
    %c0_i32 = arith.constant 0 : i32
    %24 = arith.index_cast %c0_i32 : i32 to index
    %c0_27 = arith.constant 0 : index
    %c0_28 = arith.constant 0 : index
    %25 = vector.load %arg13[%24, %c0_27, %c0_28] : memref<8x8x512xf32, #tpu.memory_space<vmem>>, vector<1x8x512xf32>
    %26 = vector.shape_cast %25 : vector<1x8x512xf32> to vector<8x512xf32>
    %cst_29 = arith.constant dense<0.000000e+00> : vector<8x512xf32>
    %27 = tpu.matmul %22, %21, %cst_29 {dimension_numbers = #tpu.dot_dimension_numbers<[1], [0], [0], [1], [0, 0, 1, 1], [], []>} : vector<8x128xf32>, vector<128x512xf32>, vector<8x512xf32> -> vector<8x512xf32>
    %28 = arith.addf %26, %27 : vector<8x512xf32>
    %29 = vector.extract_strided_slice %28 {offsets = [0, 0], sizes = [8, 384], strides = [1, 1]} : vector<8x512xf32> to vector<8x384xf32>
    %30 = arith.negf %29 : vector<8x384xf32>
    %31 = math.exp %30 : vector<8x384xf32>
    %cst_30 = arith.constant 1.000000e+00 : f32
    %32 = vector.broadcast %cst_30 : f32 to vector<8x384xf32>
    %33 = arith.addf %32, %31 : vector<8x384xf32>
    %34 = arith.divf %32, %33 : vector<8x384xf32>
    %35 = vector.extract_strided_slice %28 {offsets = [0, 384], sizes = [8, 128], strides = [1, 1]} : vector<8x512xf32> to vector<8x128xf32>
    %36 = math.tanh %35 : vector<8x128xf32>
    %37 = vector.extract_strided_slice %34 {offsets = [0, 0], sizes = [8, 128], strides = [1, 1]} : vector<8x384xf32> to vector<8x128xf32>
    %38 = vector.extract_strided_slice %34 {offsets = [0, 128], sizes = [8, 128], strides = [1, 1]} : vector<8x384xf32> to vector<8x128xf32>
    %39 = vector.extract_strided_slice %34 {offsets = [0, 256], sizes = [8, 128], strides = [1, 1]} : vector<8x384xf32> to vector<8x128xf32>
    %40 = arith.mulf %38, %23 : vector<8x128xf32>
    %41 = arith.mulf %37, %36 : vector<8x128xf32>
    %42 = arith.addf %40, %41 : vector<8x128xf32>
    %43 = math.tanh %42 : vector<8x128xf32>
    %44 = arith.mulf %39, %43 : vector<8x128xf32>
    %45 = arith.index_cast %c0_i32 : i32 to index
    %c0_31 = arith.constant 0 : index
    %c0_32 = arith.constant 0 : index
    %46 = vector.load %arg12[%45, %c0_31, %c0_32] : memref<8x8x128xf32, #tpu.memory_space<vmem>>, vector<1x8x128xf32>
    %47 = vector.shape_cast %46 : vector<1x8x128xf32> to vector<8x128xf32>
    %48 = vector.shape_cast %44 : vector<8x128xf32> to vector<1x8x128xf32>
    tpu.vector_store %arg12[%45, %c0_31, %c0_32], %48 {strides = array<i32>} : memref<8x8x128xf32, #tpu.memory_space<vmem>>, vector<1x8x128xf32>,
    %c1_i32 = arith.constant 1 : i32
    %49 = arith.index_cast %c1_i32 : i32 to index
    %c0_33 = arith.constant 0 : index
    %c0_34 = arith.constant 0 : index
    %50 = vector.load %arg13[%49, %c0_33, %c0_34] : memref<8x8x512xf32, #tpu.memory_space<vmem>>, vector<1x8x512xf32>
    %51 = vector.shape_cast %50 : vector<1x8x512xf32> to vector<8x512xf32>
    %cst_35 = arith.constant dense<0.000000e+00> : vector<8x512xf32>
    %52 = tpu.matmul %44, %21, %cst_35 {dimension_numbers = #tpu.dot_dimension_numbers<[1], [0], [0], [1], [0, 0, 1, 1], [], []>} : vector<8x128xf32>, vector<128x512xf32>, vector<8x512xf32> -> vector<8x512xf32>
    %53 = arith.addf %51, %52 : vector<8x512xf32>
    %54 = vector.extract_strided_slice %53 {offsets = [0, 0], sizes = [8, 384], strides = [1, 1]} : vector<8x512xf32> to vector<8x384xf32>
    %55 = arith.negf %54 : vector<8x384xf32>
    %56 = math.exp %55 : vector<8x384xf32>
    %cst_36 = arith.constant 1.000000e+00 : f32
    %57 = vector.broadcast %cst_36 : f32 to vector<8x384xf32>
    %58 = arith.addf %57, %56 : vector<8x384xf32>
    %59 = arith.divf %57, %58 : vector<8x384xf32>
    %60 = vector.extract_strided_slice %53 {offsets = [0, 384], sizes = [8, 128], strides = [1, 1]} : vector<8x512xf32> to vector<8x128xf32>
    %61 = math.tanh %60 : vector<8x128xf32>
    %62 = vector.extract_strided_slice %59 {offsets = [0, 0], sizes = [8, 128], strides = [1, 1]} : vector<8x384xf32> to vector<8x128xf32>
    %63 = vector.extract_strided_slice %59 {offsets = [0, 128], sizes = [8, 128], strides = [1, 1]} : vector<8x384xf32> to vector<8x128xf32>
    %64 = vector.extract_strided_slice %59 {offsets = [0, 256], sizes = [8, 128], strides = [1, 1]} : vector<8x384xf32> to vector<8x128xf32>
    %65 = arith.mulf %63, %42 : vector<8x128xf32>
    %66 = arith.mulf %62, %61 : vector<8x128xf32>
    %67 = arith.addf %65, %66 : vector<8x128xf32>
    %68 = math.tanh %67 : vector<8x128xf32>
    %69 = arith.mulf %64, %68 : vector<8x128xf32>
    %70 = arith.index_cast %c1_i32 : i32 to index
    %c0_37 = arith.constant 0 : index
    %c0_38 = arith.constant 0 : index
    %71 = vector.load %arg12[%70, %c0_37, %c0_38] : memref<8x8x128xf32, #tpu.memory_space<vmem>>, vector<1x8x128xf32>
    %72 = vector.shape_cast %71 : vector<1x8x128xf32> to vector<8x128xf32>
    %73 = vector.shape_cast %69 : vector<8x128xf32> to vector<1x8x128xf32>
    tpu.vector_store %arg12[%70, %c0_37, %c0_38], %73 {strides = array<i32>} : memref<8x8x128xf32, #tpu.memory_space<vmem>>, vector<1x8x128xf32>,
    %c2_i32 = arith.constant 2 : i32
    %74 = arith.index_cast %c2_i32 : i32 to index
    %c0_39 = arith.constant 0 : index
    %c0_40 = arith.constant 0 : index
    %75 = vector.load %arg13[%74, %c0_39, %c0_40] : memref<8x8x512xf32, #tpu.memory_space<vmem>>, vector<1x8x512xf32>
    %76 = vector.shape_cast %75 : vector<1x8x512xf32> to vector<8x512xf32>
    %cst_41 = arith.constant dense<0.000000e+00> : vector<8x512xf32>
    %77 = tpu.matmul %69, %21, %cst_41 {dimension_numbers = #tpu.dot_dimension_numbers<[1], [0], [0], [1], [0, 0, 1, 1], [], []>} : vector<8x128xf32>, vector<128x512xf32>, vector<8x512xf32> -> vector<8x512xf32>
    %78 = arith.addf %76, %77 : vector<8x512xf32>
    %79 = vector.extract_strided_slice %78 {offsets = [0, 0], sizes = [8, 384], strides = [1, 1]} : vector<8x512xf32> to vector<8x384xf32>
    %80 = arith.negf %79 : vector<8x384xf32>
    %81 = math.exp %80 : vector<8x384xf32>
    %cst_42 = arith.constant 1.000000e+00 : f32
    %82 = vector.broadcast %cst_42 : f32 to vector<8x384xf32>
    %83 = arith.addf %82, %81 : vector<8x384xf32>
    %84 = arith.divf %82, %83 : vector<8x384xf32>
    %85 = vector.extract_strided_slice %78 {offsets = [0, 384], sizes = [8, 128], strides = [1, 1]} : vector<8x512xf32> to vector<8x128xf32>
    %86 = math.tanh %85 : vector<8x128xf32>
    %87 = vector.extract_strided_slice %84 {offsets = [0, 0], sizes = [8, 128], strides = [1, 1]} : vector<8x384xf32> to vector<8x128xf32>
    %88 = vector.extract_strided_slice %84 {offsets = [0, 128], sizes = [8, 128], strides = [1, 1]} : vector<8x384xf32> to vector<8x128xf32>
    %89 = vector.extract_strided_slice %84 {offsets = [0, 256], sizes = [8, 128], strides = [1, 1]} : vector<8x384xf32> to vector<8x128xf32>
    %90 = arith.mulf %88, %67 : vector<8x128xf32>
    %91 = arith.mulf %87, %86 : vector<8x128xf32>
    %92 = arith.addf %90, %91 : vector<8x128xf32>
    %93 = math.tanh %92 : vector<8x128xf32>
    %94 = arith.mulf %89, %93 : vector<8x128xf32>
    %95 = arith.index_cast %c2_i32 : i32 to index
    %c0_43 = arith.constant 0 : index
    %c0_44 = arith.constant 0 : index
    %96 = vector.load %arg12[%95, %c0_43, %c0_44] : memref<8x8x128xf32, #tpu.memory_space<vmem>>, vector<1x8x128xf32>
    %97 = vector.shape_cast %96 : vector<1x8x128xf32> to vector<8x128xf32>
    %98 = vector.shape_cast %94 : vector<8x128xf32> to vector<1x8x128xf32>
    tpu.vector_store %arg12[%95, %c0_43, %c0_44], %98 {strides = array<i32>} : memref<8x8x128xf32, #tpu.memory_space<vmem>>, vector<1x8x128xf32>,
    %c3_i32 = arith.constant 3 : i32
    %99 = arith.index_cast %c3_i32 : i32 to index
    %c0_45 = arith.constant 0 : index
    %c0_46 = arith.constant 0 : index
    %100 = vector.load %arg13[%99, %c0_45, %c0_46] : memref<8x8x512xf32, #tpu.memory_space<vmem>>, vector<1x8x512xf32>
    %101 = vector.shape_cast %100 : vector<1x8x512xf32> to vector<8x512xf32>
    %cst_47 = arith.constant dense<0.000000e+00> : vector<8x512xf32>
    %102 = tpu.matmul %94, %21, %cst_47 {dimension_numbers = #tpu.dot_dimension_numbers<[1], [0], [0], [1], [0, 0, 1, 1], [], []>} : vector<8x128xf32>, vector<128x512xf32>, vector<8x512xf32> -> vector<8x512xf32>
    %103 = arith.addf %101, %102 : vector<8x512xf32>
    %104 = vector.extract_strided_slice %103 {offsets = [0, 0], sizes = [8, 384], strides = [1, 1]} : vector<8x512xf32> to vector<8x384xf32>
    %105 = arith.negf %104 : vector<8x384xf32>
    %106 = math.exp %105 : vector<8x384xf32>
    %cst_48 = arith.constant 1.000000e+00 : f32
    %107 = vector.broadcast %cst_48 : f32 to vector<8x384xf32>
    %108 = arith.addf %107, %106 : vector<8x384xf32>
    %109 = arith.divf %107, %108 : vector<8x384xf32>
    %110 = vector.extract_strided_slice %103 {offsets = [0, 384], sizes = [8, 128], strides = [1, 1]} : vector<8x512xf32> to vector<8x128xf32>
    %111 = math.tanh %110 : vector<8x128xf32>
    %112 = vector.extract_strided_slice %109 {offsets = [0, 0], sizes = [8, 128], strides = [1, 1]} : vector<8x384xf32> to vector<8x128xf32>
    %113 = vector.extract_strided_slice %109 {offsets = [0, 128], sizes = [8, 128], strides = [1, 1]} : vector<8x384xf32> to vector<8x128xf32>
    %114 = vector.extract_strided_slice %109 {offsets = [0, 256], sizes = [8, 128], strides = [1, 1]} : vector<8x384xf32> to vector<8x128xf32>
    %115 = arith.mulf %113, %92 : vector<8x128xf32>
    %116 = arith.mulf %112, %111 : vector<8x128xf32>
    %117 = arith.addf %115, %116 : vector<8x128xf32>
    %118 = math.tanh %117 : vector<8x128xf32>
    %119 = arith.mulf %114, %118 : vector<8x128xf32>
    %120 = arith.index_cast %c3_i32 : i32 to index
    %c0_49 = arith.constant 0 : index
    %c0_50 = arith.constant 0 : index
    %121 = vector.load %arg12[%120, %c0_49, %c0_50] : memref<8x8x128xf32, #tpu.memory_space<vmem>>, vector<1x8x128xf32>
    %122 = vector.shape_cast %121 : vector<1x8x128xf32> to vector<8x128xf32>
    %123 = vector.shape_cast %119 : vector<8x128xf32> to vector<1x8x128xf32>
    tpu.vector_store %arg12[%120, %c0_49, %c0_50], %123 {strides = array<i32>} : memref<8x8x128xf32, #tpu.memory_space<vmem>>, vector<1x8x128xf32>,
    %c4_i32 = arith.constant 4 : i32
    %124 = arith.index_cast %c4_i32 : i32 to index
    %c0_51 = arith.constant 0 : index
    %c0_52 = arith.constant 0 : index
    %125 = vector.load %arg13[%124, %c0_51, %c0_52] : memref<8x8x512xf32, #tpu.memory_space<vmem>>, vector<1x8x512xf32>
    %126 = vector.shape_cast %125 : vector<1x8x512xf32> to vector<8x512xf32>
    %cst_53 = arith.constant dense<0.000000e+00> : vector<8x512xf32>
    %127 = tpu.matmul %119, %21, %cst_53 {dimension_numbers = #tpu.dot_dimension_numbers<[1], [0], [0], [1], [0, 0, 1, 1], [], []>} : vector<8x128xf32>, vector<128x512xf32>, vector<8x512xf32> -> vector<8x512xf32>
    %128 = arith.addf %126, %127 : vector<8x512xf32>
    %129 = vector.extract_strided_slice %128 {offsets = [0, 0], sizes = [8, 384], strides = [1, 1]} : vector<8x512xf32> to vector<8x384xf32>
    %130 = arith.negf %129 : vector<8x384xf32>
    %131 = math.exp %130 : vector<8x384xf32>
    %cst_54 = arith.constant 1.000000e+00 : f32
    %132 = vector.broadcast %cst_54 : f32 to vector<8x384xf32>
    %133 = arith.addf %132, %131 : vector<8x384xf32>
    %134 = arith.divf %132, %133 : vector<8x384xf32>
    %135 = vector.extract_strided_slice %128 {offsets = [0, 384], sizes = [8, 128], strides = [1, 1]} : vector<8x512xf32> to vector<8x128xf32>
    %136 = math.tanh %135 : vector<8x128xf32>
    %137 = vector.extract_strided_slice %134 {offsets = [0, 0], sizes = [8, 128], strides = [1, 1]} : vector<8x384xf32> to vector<8x128xf32>
    %138 = vector.extract_strided_slice %134 {offsets = [0, 128], sizes = [8, 128], strides = [1, 1]} : vector<8x384xf32> to vector<8x128xf32>
    %139 = vector.extract_strided_slice %134 {offsets = [0, 256], sizes = [8, 128], strides = [1, 1]} : vector<8x384xf32> to vector<8x128xf32>
    %140 = arith.mulf %138, %117 : vector<8x128xf32>
    %141 = arith.mulf %137, %136 : vector<8x128xf32>
    %142 = arith.addf %140, %141 : vector<8x128xf32>
    %143 = math.tanh %142 : vector<8x128xf32>
    %144 = arith.mulf %139, %143 : vector<8x128xf32>
    %145 = arith.index_cast %c4_i32 : i32 to index
    %c0_55 = arith.constant 0 : index
    %c0_56 = arith.constant 0 : index
    %146 = vector.load %arg12[%145, %c0_55, %c0_56] : memref<8x8x128xf32, #tpu.memory_space<vmem>>, vector<1x8x128xf32>
    %147 = vector.shape_cast %146 : vector<1x8x128xf32> to vector<8x128xf32>
    %148 = vector.shape_cast %144 : vector<8x128xf32> to vector<1x8x128xf32>
    tpu.vector_store %arg12[%145, %c0_55, %c0_56], %148 {strides = array<i32>} : memref<8x8x128xf32, #tpu.memory_space<vmem>>, vector<1x8x128xf32>,
    %c5_i32 = arith.constant 5 : i32
    %149 = arith.index_cast %c5_i32 : i32 to index
    %c0_57 = arith.constant 0 : index
    %c0_58 = arith.constant 0 : index
    %150 = vector.load %arg13[%149, %c0_57, %c0_58] : memref<8x8x512xf32, #tpu.memory_space<vmem>>, vector<1x8x512xf32>
    %151 = vector.shape_cast %150 : vector<1x8x512xf32> to vector<8x512xf32>
    %cst_59 = arith.constant dense<0.000000e+00> : vector<8x512xf32>
    %152 = tpu.matmul %144, %21, %cst_59 {dimension_numbers = #tpu.dot_dimension_numbers<[1], [0], [0], [1], [0, 0, 1, 1], [], []>} : vector<8x128xf32>, vector<128x512xf32>, vector<8x512xf32> -> vector<8x512xf32>
    %153 = arith.addf %151, %152 : vector<8x512xf32>
    %154 = vector.extract_strided_slice %153 {offsets = [0, 0], sizes = [8, 384], strides = [1, 1]} : vector<8x512xf32> to vector<8x384xf32>
    %155 = arith.negf %154 : vector<8x384xf32>
    %156 = math.exp %155 : vector<8x384xf32>
    %cst_60 = arith.constant 1.000000e+00 : f32
    %157 = vector.broadcast %cst_60 : f32 to vector<8x384xf32>
    %158 = arith.addf %157, %156 : vector<8x384xf32>
    %159 = arith.divf %157, %158 : vector<8x384xf32>
    %160 = vector.extract_strided_slice %153 {offsets = [0, 384], sizes = [8, 128], strides = [1, 1]} : vector<8x512xf32> to vector<8x128xf32>
    %161 = math.tanh %160 : vector<8x128xf32>
    %162 = vector.extract_strided_slice %159 {offsets = [0, 0], sizes = [8, 128], strides = [1, 1]} : vector<8x384xf32> to vector<8x128xf32>
    %163 = vector.extract_strided_slice %159 {offsets = [0, 128], sizes = [8, 128], strides = [1, 1]} : vector<8x384xf32> to vector<8x128xf32>
    %164 = vector.extract_strided_slice %159 {offsets = [0, 256], sizes = [8, 128], strides = [1, 1]} : vector<8x384xf32> to vector<8x128xf32>
    %165 = arith.mulf %163, %142 : vector<8x128xf32>
    %166 = arith.mulf %162, %161 : vector<8x128xf32>
    %167 = arith.addf %165, %166 : vector<8x128xf32>
    %168 = math.tanh %167 : vector<8x128xf32>
    %169 = arith.mulf %164, %168 : vector<8x128xf32>
    %170 = arith.index_cast %c5_i32 : i32 to index
    %c0_61 = arith.constant 0 : index
    %c0_62 = arith.constant 0 : index
    %171 = vector.load %arg12[%170, %c0_61, %c0_62] : memref<8x8x128xf32, #tpu.memory_space<vmem>>, vector<1x8x128xf32>
    %172 = vector.shape_cast %171 : vector<1x8x128xf32> to vector<8x128xf32>
    %173 = vector.shape_cast %169 : vector<8x128xf32> to vector<1x8x128xf32>
    tpu.vector_store %arg12[%170, %c0_61, %c0_62], %173 {strides = array<i32>} : memref<8x8x128xf32, #tpu.memory_space<vmem>>, vector<1x8x128xf32>,
    %c6_i32 = arith.constant 6 : i32
    %174 = arith.index_cast %c6_i32 : i32 to index
    %c0_63 = arith.constant 0 : index
    %c0_64 = arith.constant 0 : index
    %175 = vector.load %arg13[%174, %c0_63, %c0_64] : memref<8x8x512xf32, #tpu.memory_space<vmem>>, vector<1x8x512xf32>
    %176 = vector.shape_cast %175 : vector<1x8x512xf32> to vector<8x512xf32>
    %cst_65 = arith.constant dense<0.000000e+00> : vector<8x512xf32>
    %177 = tpu.matmul %169, %21, %cst_65 {dimension_numbers = #tpu.dot_dimension_numbers<[1], [0], [0], [1], [0, 0, 1, 1], [], []>} : vector<8x128xf32>, vector<128x512xf32>, vector<8x512xf32> -> vector<8x512xf32>
    %178 = arith.addf %176, %177 : vector<8x512xf32>
    %179 = vector.extract_strided_slice %178 {offsets = [0, 0], sizes = [8, 384], strides = [1, 1]} : vector<8x512xf32> to vector<8x384xf32>
    %180 = arith.negf %179 : vector<8x384xf32>
    %181 = math.exp %180 : vector<8x384xf32>
    %cst_66 = arith.constant 1.000000e+00 : f32
    %182 = vector.broadcast %cst_66 : f32 to vector<8x384xf32>
    %183 = arith.addf %182, %181 : vector<8x384xf32>
    %184 = arith.divf %182, %183 : vector<8x384xf32>
    %185 = vector.extract_strided_slice %178 {offsets = [0, 384], sizes = [8, 128], strides = [1, 1]} : vector<8x512xf32> to vector<8x128xf32>
    %186 = math.tanh %185 : vector<8x128xf32>
    %187 = vector.extract_strided_slice %184 {offsets = [0, 0], sizes = [8, 128], strides = [1, 1]} : vector<8x384xf32> to vector<8x128xf32>
    %188 = vector.extract_strided_slice %184 {offsets = [0, 128], sizes = [8, 128], strides = [1, 1]} : vector<8x384xf32> to vector<8x128xf32>
    %189 = vector.extract_strided_slice %184 {offsets = [0, 256], sizes = [8, 128], strides = [1, 1]} : vector<8x384xf32> to vector<8x128xf32>
    %190 = arith.mulf %188, %167 : vector<8x128xf32>
    %191 = arith.mulf %187, %186 : vector<8x128xf32>
    %192 = arith.addf %190, %191 : vector<8x128xf32>
    %193 = math.tanh %192 : vector<8x128xf32>
    %194 = arith.mulf %189, %193 : vector<8x128xf32>
    %195 = arith.index_cast %c6_i32 : i32 to index
    %c0_67 = arith.constant 0 : index
    %c0_68 = arith.constant 0 : index
    %196 = vector.load %arg12[%195, %c0_67, %c0_68] : memref<8x8x128xf32, #tpu.memory_space<vmem>>, vector<1x8x128xf32>
    %197 = vector.shape_cast %196 : vector<1x8x128xf32> to vector<8x128xf32>
    %198 = vector.shape_cast %194 : vector<8x128xf32> to vector<1x8x128xf32>
    tpu.vector_store %arg12[%195, %c0_67, %c0_68], %198 {strides = array<i32>} : memref<8x8x128xf32, #tpu.memory_space<vmem>>, vector<1x8x128xf32>,
    %c7_i32 = arith.constant 7 : i32
    %199 = arith.index_cast %c7_i32 : i32 to index
    %c0_69 = arith.constant 0 : index
    %c0_70 = arith.constant 0 : index
    %200 = vector.load %arg13[%199, %c0_69, %c0_70] : memref<8x8x512xf32, #tpu.memory_space<vmem>>, vector<1x8x512xf32>
    %201 = vector.shape_cast %200 : vector<1x8x512xf32> to vector<8x512xf32>
    %cst_71 = arith.constant dense<0.000000e+00> : vector<8x512xf32>
    %202 = tpu.matmul %194, %21, %cst_71 {dimension_numbers = #tpu.dot_dimension_numbers<[1], [0], [0], [1], [0, 0, 1, 1], [], []>} : vector<8x128xf32>, vector<128x512xf32>, vector<8x512xf32> -> vector<8x512xf32>
    %203 = arith.addf %201, %202 : vector<8x512xf32>
    %204 = vector.extract_strided_slice %203 {offsets = [0, 0], sizes = [8, 384], strides = [1, 1]} : vector<8x512xf32> to vector<8x384xf32>
    %205 = arith.negf %204 : vector<8x384xf32>
    %206 = math.exp %205 : vector<8x384xf32>
    %cst_72 = arith.constant 1.000000e+00 : f32
    %207 = vector.broadcast %cst_72 : f32 to vector<8x384xf32>
    %208 = arith.addf %207, %206 : vector<8x384xf32>
    %209 = arith.divf %207, %208 : vector<8x384xf32>
    %210 = vector.extract_strided_slice %203 {offsets = [0, 384], sizes = [8, 128], strides = [1, 1]} : vector<8x512xf32> to vector<8x128xf32>
    %211 = math.tanh %210 : vector<8x128xf32>
    %212 = vector.extract_strided_slice %209 {offsets = [0, 0], sizes = [8, 128], strides = [1, 1]} : vector<8x384xf32> to vector<8x128xf32>
    %213 = vector.extract_strided_slice %209 {offsets = [0, 128], sizes = [8, 128], strides = [1, 1]} : vector<8x384xf32> to vector<8x128xf32>
    %214 = vector.extract_strided_slice %209 {offsets = [0, 256], sizes = [8, 128], strides = [1, 1]} : vector<8x384xf32> to vector<8x128xf32>
    %215 = arith.mulf %213, %192 : vector<8x128xf32>
    %216 = arith.mulf %212, %211 : vector<8x128xf32>
    %217 = arith.addf %215, %216 : vector<8x128xf32>
    %218 = math.tanh %217 : vector<8x128xf32>
    %219 = arith.mulf %214, %218 : vector<8x128xf32>
    %220 = arith.index_cast %c7_i32 : i32 to index
    %c0_73 = arith.constant 0 : index
    %c0_74 = arith.constant 0 : index
    %221 = vector.load %arg12[%220, %c0_73, %c0_74] : memref<8x8x128xf32, #tpu.memory_space<vmem>>, vector<1x8x128xf32>
    %222 = vector.shape_cast %221 : vector<1x8x128xf32> to vector<8x128xf32>
    %223 = vector.shape_cast %219 : vector<8x128xf32> to vector<1x8x128xf32>
    tpu.vector_store %arg12[%220, %c0_73, %c0_74], %223 {strides = array<i32>} : memref<8x8x128xf32, #tpu.memory_space<vmem>>, vector<1x8x128xf32>,
    %c8_i32 = arith.constant 8 : i32
    %c0_75 = arith.constant 0 : index
    %c0_76 = arith.constant 0 : index
    %c0_77 = arith.constant 0 : index
    %224 = vector.load %arg12[%c0_75, %c0_76, %c0_77] : memref<8x8x128xf32, #tpu.memory_space<vmem>>, vector<8x8x128xf32>
    %225 = vector.shape_cast %224 : vector<8x8x128xf32> to vector<64x128xf32>
    %c1 = arith.constant 1 : index
    %c0_78 = arith.constant 0 : index
    %c0_79 = arith.constant 0 : index
    %226 = vector.load %arg4[%c1, %c0_78, %c0_79] : memref<2x128x512xf32, #tpu.memory_space<vmem>>, vector<1x128x512xf32>
    %227 = vector.shape_cast %226 : vector<1x128x512xf32> to vector<128x512xf32>
    %cst_80 = arith.constant dense<0.000000e+00> : vector<64x512xf32>
    %228 = tpu.matmul %225, %227, %cst_80 {dimension_numbers = #tpu.dot_dimension_numbers<[1], [0], [0], [1], [0, 0, 1, 1], [], []>} : vector<64x128xf32>, vector<128x512xf32>, vector<64x512xf32> -> vector<64x512xf32>
    %c1_81 = arith.constant 1 : index
    %c0_82 = arith.constant 0 : index
    %c0_83 = arith.constant 0 : index
    %229 = vector.load %arg6[%c1_81, %c0_82, %c0_83] : memref<2x1x512xf32, #tpu.memory_space<vmem>>, vector<1x1x512xf32>
    %230 = vector.shape_cast %229 : vector<1x1x512xf32> to vector<1x512xf32>
    %231 = vector.broadcast %230 : vector<1x512xf32> to vector<64x512xf32>
    %232 = arith.addf %228, %231 : vector<64x512xf32>
    %233 = vector.shape_cast %232 : vector<64x512xf32> to vector<8x8x512xf32>
    %c0_84 = arith.constant 0 : index
    %c0_85 = arith.constant 0 : index
    %c0_86 = arith.constant 0 : index
    %234 = vector.load %arg13[%c0_84, %c0_85, %c0_86] : memref<8x8x512xf32, #tpu.memory_space<vmem>>, vector<8x8x512xf32>
    tpu.vector_store %arg13[%c0_84, %c0_85, %c0_86], %233 {strides = array<i32>} : memref<8x8x512xf32, #tpu.memory_space<vmem>>, vector<8x8x512xf32>,
    %c1_87 = arith.constant 1 : index
    %c0_88 = arith.constant 0 : index
    %c0_89 = arith.constant 0 : index
    %235 = vector.load %arg5[%c1_87, %c0_88, %c0_89] : memref<2x128x512xf32, #tpu.memory_space<vmem>>, vector<1x128x512xf32>
    %236 = vector.shape_cast %235 : vector<1x128x512xf32> to vector<128x512xf32>
    %cst_90 = arith.constant 0.000000e+00 : f32
    %237 = vector.broadcast %cst_90 : f32 to vector<8x128xf32>
    %cst_91 = arith.constant 0.000000e+00 : f32
    %238 = vector.broadcast %cst_91 : f32 to vector<8x128xf32>
    %c0_i32_92 = arith.constant 0 : i32
    %239 = arith.index_cast %c0_i32_92 : i32 to index
    %c0_93 = arith.constant 0 : index
    %c0_94 = arith.constant 0 : index
    %240 = vector.load %arg13[%239, %c0_93, %c0_94] : memref<8x8x512xf32, #tpu.memory_space<vmem>>, vector<1x8x512xf32>
    %241 = vector.shape_cast %240 : vector<1x8x512xf32> to vector<8x512xf32>
    %cst_95 = arith.constant dense<0.000000e+00> : vector<8x512xf32>
    %242 = tpu.matmul %237, %236, %cst_95 {dimension_numbers = #tpu.dot_dimension_numbers<[1], [0], [0], [1], [0, 0, 1, 1], [], []>} : vector<8x128xf32>, vector<128x512xf32>, vector<8x512xf32> -> vector<8x512xf32>
    %243 = arith.addf %241, %242 : vector<8x512xf32>
    %244 = vector.extract_strided_slice %243 {offsets = [0, 0], sizes = [8, 384], strides = [1, 1]} : vector<8x512xf32> to vector<8x384xf32>
    %245 = arith.negf %244 : vector<8x384xf32>
    %246 = math.exp %245 : vector<8x384xf32>
    %cst_96 = arith.constant 1.000000e+00 : f32
    %247 = vector.broadcast %cst_96 : f32 to vector<8x384xf32>
    %248 = arith.addf %247, %246 : vector<8x384xf32>
    %249 = arith.divf %247, %248 : vector<8x384xf32>
    %250 = vector.extract_strided_slice %243 {offsets = [0, 384], sizes = [8, 128], strides = [1, 1]} : vector<8x512xf32> to vector<8x128xf32>
    %251 = math.tanh %250 : vector<8x128xf32>
    %252 = vector.extract_strided_slice %249 {offsets = [0, 0], sizes = [8, 128], strides = [1, 1]} : vector<8x384xf32> to vector<8x128xf32>
    %253 = vector.extract_strided_slice %249 {offsets = [0, 128], sizes = [8, 128], strides = [1, 1]} : vector<8x384xf32> to vector<8x128xf32>
    %254 = vector.extract_strided_slice %249 {offsets = [0, 256], sizes = [8, 128], strides = [1, 1]} : vector<8x384xf32> to vector<8x128xf32>
    %255 = arith.mulf %253, %238 : vector<8x128xf32>
    %256 = arith.mulf %252, %251 : vector<8x128xf32>
    %257 = arith.addf %255, %256 : vector<8x128xf32>
    %258 = math.tanh %257 : vector<8x128xf32>
    %259 = arith.mulf %254, %258 : vector<8x128xf32>
    %c1_i32_97 = arith.constant 1 : i32
    %260 = arith.index_cast %c1_i32_97 : i32 to index
    %c0_98 = arith.constant 0 : index
    %c0_99 = arith.constant 0 : index
    %261 = vector.load %arg13[%260, %c0_98, %c0_99] : memref<8x8x512xf32, #tpu.memory_space<vmem>>, vector<1x8x512xf32>
    %262 = vector.shape_cast %261 : vector<1x8x512xf32> to vector<8x512xf32>
    %cst_100 = arith.constant dense<0.000000e+00> : vector<8x512xf32>
    %263 = tpu.matmul %259, %236, %cst_100 {dimension_numbers = #tpu.dot_dimension_numbers<[1], [0], [0], [1], [0, 0, 1, 1], [], []>} : vector<8x128xf32>, vector<128x512xf32>, vector<8x512xf32> -> vector<8x512xf32>
    %264 = arith.addf %262, %263 : vector<8x512xf32>
    %265 = vector.extract_strided_slice %264 {offsets = [0, 0], sizes = [8, 384], strides = [1, 1]} : vector<8x512xf32> to vector<8x384xf32>
    %266 = arith.negf %265 : vector<8x384xf32>
    %267 = math.exp %266 : vector<8x384xf32>
    %cst_101 = arith.constant 1.000000e+00 : f32
    %268 = vector.broadcast %cst_101 : f32 to vector<8x384xf32>
    %269 = arith.addf %268, %267 : vector<8x384xf32>
    %270 = arith.divf %268, %269 : vector<8x384xf32>
    %271 = vector.extract_strided_slice %264 {offsets = [0, 384], sizes = [8, 128], strides = [1, 1]} : vector<8x512xf32> to vector<8x128xf32>
    %272 = math.tanh %271 : vector<8x128xf32>
    %273 = vector.extract_strided_slice %270 {offsets = [0, 0], sizes = [8, 128], strides = [1, 1]} : vector<8x384xf32> to vector<8x128xf32>
    %274 = vector.extract_strided_slice %270 {offsets = [0, 128], sizes = [8, 128], strides = [1, 1]} : vector<8x384xf32> to vector<8x128xf32>
    %275 = vector.extract_strided_slice %270 {offsets = [0, 256], sizes = [8, 128], strides = [1, 1]} : vector<8x384xf32> to vector<8x128xf32>
    %276 = arith.mulf %274, %257 : vector<8x128xf32>
    %277 = arith.mulf %273, %272 : vector<8x128xf32>
    %278 = arith.addf %276, %277 : vector<8x128xf32>
    %279 = math.tanh %278 : vector<8x128xf32>
    %280 = arith.mulf %275, %279 : vector<8x128xf32>
    %c2_i32_102 = arith.constant 2 : i32
    %281 = arith.index_cast %c2_i32_102 : i32 to index
    %c0_103 = arith.constant 0 : index
    %c0_104 = arith.constant 0 : index
    %282 = vector.load %arg13[%281, %c0_103, %c0_104] : memref<8x8x512xf32, #tpu.memory_space<vmem>>, vector<1x8x512xf32>
    %283 = vector.shape_cast %282 : vector<1x8x512xf32> to vector<8x512xf32>
    %cst_105 = arith.constant dense<0.000000e+00> : vector<8x512xf32>
    %284 = tpu.matmul %280, %236, %cst_105 {dimension_numbers = #tpu.dot_dimension_numbers<[1], [0], [0], [1], [0, 0, 1, 1], [], []>} : vector<8x128xf32>, vector<128x512xf32>, vector<8x512xf32> -> vector<8x512xf32>
    %285 = arith.addf %283, %284 : vector<8x512xf32>
    %286 = vector.extract_strided_slice %285 {offsets = [0, 0], sizes = [8, 384], strides = [1, 1]} : vector<8x512xf32> to vector<8x384xf32>
    %287 = arith.negf %286 : vector<8x384xf32>
    %288 = math.exp %287 : vector<8x384xf32>
    %cst_106 = arith.constant 1.000000e+00 : f32
    %289 = vector.broadcast %cst_106 : f32 to vector<8x384xf32>
    %290 = arith.addf %289, %288 : vector<8x384xf32>
    %291 = arith.divf %289, %290 : vector<8x384xf32>
    %292 = vector.extract_strided_slice %285 {offsets = [0, 384], sizes = [8, 128], strides = [1, 1]} : vector<8x512xf32> to vector<8x128xf32>
    %293 = math.tanh %292 : vector<8x128xf32>
    %294 = vector.extract_strided_slice %291 {offsets = [0, 0], sizes = [8, 128], strides = [1, 1]} : vector<8x384xf32> to vector<8x128xf32>
    %295 = vector.extract_strided_slice %291 {offsets = [0, 128], sizes = [8, 128], strides = [1, 1]} : vector<8x384xf32> to vector<8x128xf32>
    %296 = vector.extract_strided_slice %291 {offsets = [0, 256], sizes = [8, 128], strides = [1, 1]} : vector<8x384xf32> to vector<8x128xf32>
    %297 = arith.mulf %295, %278 : vector<8x128xf32>
    %298 = arith.mulf %294, %293 : vector<8x128xf32>
    %299 = arith.addf %297, %298 : vector<8x128xf32>
    %300 = math.tanh %299 : vector<8x128xf32>
    %301 = arith.mulf %296, %300 : vector<8x128xf32>
    %c3_i32_107 = arith.constant 3 : i32
    %302 = arith.index_cast %c3_i32_107 : i32 to index
    %c0_108 = arith.constant 0 : index
    %c0_109 = arith.constant 0 : index
    %303 = vector.load %arg13[%302, %c0_108, %c0_109] : memref<8x8x512xf32, #tpu.memory_space<vmem>>, vector<1x8x512xf32>
    %304 = vector.shape_cast %303 : vector<1x8x512xf32> to vector<8x512xf32>
    %cst_110 = arith.constant dense<0.000000e+00> : vector<8x512xf32>
    %305 = tpu.matmul %301, %236, %cst_110 {dimension_numbers = #tpu.dot_dimension_numbers<[1], [0], [0], [1], [0, 0, 1, 1], [], []>} : vector<8x128xf32>, vector<128x512xf32>, vector<8x512xf32> -> vector<8x512xf32>
    %306 = arith.addf %304, %305 : vector<8x512xf32>
    %307 = vector.extract_strided_slice %306 {offsets = [0, 0], sizes = [8, 384], strides = [1, 1]} : vector<8x512xf32> to vector<8x384xf32>
    %308 = arith.negf %307 : vector<8x384xf32>
    %309 = math.exp %308 : vector<8x384xf32>
    %cst_111 = arith.constant 1.000000e+00 : f32
    %310 = vector.broadcast %cst_111 : f32 to vector<8x384xf32>
    %311 = arith.addf %310, %309 : vector<8x384xf32>
    %312 = arith.divf %310, %311 : vector<8x384xf32>
    %313 = vector.extract_strided_slice %306 {offsets = [0, 384], sizes = [8, 128], strides = [1, 1]} : vector<8x512xf32> to vector<8x128xf32>
    %314 = math.tanh %313 : vector<8x128xf32>
    %315 = vector.extract_strided_slice %312 {offsets = [0, 0], sizes = [8, 128], strides = [1, 1]} : vector<8x384xf32> to vector<8x128xf32>
    %316 = vector.extract_strided_slice %312 {offsets = [0, 128], sizes = [8, 128], strides = [1, 1]} : vector<8x384xf32> to vector<8x128xf32>
    %317 = vector.extract_strided_slice %312 {offsets = [0, 256], sizes = [8, 128], strides = [1, 1]} : vector<8x384xf32> to vector<8x128xf32>
    %318 = arith.mulf %316, %299 : vector<8x128xf32>
    %319 = arith.mulf %315, %314 : vector<8x128xf32>
    %320 = arith.addf %318, %319 : vector<8x128xf32>
    %321 = math.tanh %320 : vector<8x128xf32>
    %322 = arith.mulf %317, %321 : vector<8x128xf32>
    %c4_i32_112 = arith.constant 4 : i32
    %323 = arith.index_cast %c4_i32_112 : i32 to index
    %c0_113 = arith.constant 0 : index
    %c0_114 = arith.constant 0 : index
    %324 = vector.load %arg13[%323, %c0_113, %c0_114] : memref<8x8x512xf32, #tpu.memory_space<vmem>>, vector<1x8x512xf32>
    %325 = vector.shape_cast %324 : vector<1x8x512xf32> to vector<8x512xf32>
    %cst_115 = arith.constant dense<0.000000e+00> : vector<8x512xf32>
    %326 = tpu.matmul %322, %236, %cst_115 {dimension_numbers = #tpu.dot_dimension_numbers<[1], [0], [0], [1], [0, 0, 1, 1], [], []>} : vector<8x128xf32>, vector<128x512xf32>, vector<8x512xf32> -> vector<8x512xf32>
    %327 = arith.addf %325, %326 : vector<8x512xf32>
    %328 = vector.extract_strided_slice %327 {offsets = [0, 0], sizes = [8, 384], strides = [1, 1]} : vector<8x512xf32> to vector<8x384xf32>
    %329 = arith.negf %328 : vector<8x384xf32>
    %330 = math.exp %329 : vector<8x384xf32>
    %cst_116 = arith.constant 1.000000e+00 : f32
    %331 = vector.broadcast %cst_116 : f32 to vector<8x384xf32>
    %332 = arith.addf %331, %330 : vector<8x384xf32>
    %333 = arith.divf %331, %332 : vector<8x384xf32>
    %334 = vector.extract_strided_slice %327 {offsets = [0, 384], sizes = [8, 128], strides = [1, 1]} : vector<8x512xf32> to vector<8x128xf32>
    %335 = math.tanh %334 : vector<8x128xf32>
    %336 = vector.extract_strided_slice %333 {offsets = [0, 0], sizes = [8, 128], strides = [1, 1]} : vector<8x384xf32> to vector<8x128xf32>
    %337 = vector.extract_strided_slice %333 {offsets = [0, 128], sizes = [8, 128], strides = [1, 1]} : vector<8x384xf32> to vector<8x128xf32>
    %338 = vector.extract_strided_slice %333 {offsets = [0, 256], sizes = [8, 128], strides = [1, 1]} : vector<8x384xf32> to vector<8x128xf32>
    %339 = arith.mulf %337, %320 : vector<8x128xf32>
    %340 = arith.mulf %336, %335 : vector<8x128xf32>
    %341 = arith.addf %339, %340 : vector<8x128xf32>
    %342 = math.tanh %341 : vector<8x128xf32>
    %343 = arith.mulf %338, %342 : vector<8x128xf32>
    %c5_i32_117 = arith.constant 5 : i32
    %344 = arith.index_cast %c5_i32_117 : i32 to index
    %c0_118 = arith.constant 0 : index
    %c0_119 = arith.constant 0 : index
    %345 = vector.load %arg13[%344, %c0_118, %c0_119] : memref<8x8x512xf32, #tpu.memory_space<vmem>>, vector<1x8x512xf32>
    %346 = vector.shape_cast %345 : vector<1x8x512xf32> to vector<8x512xf32>
    %cst_120 = arith.constant dense<0.000000e+00> : vector<8x512xf32>
    %347 = tpu.matmul %343, %236, %cst_120 {dimension_numbers = #tpu.dot_dimension_numbers<[1], [0], [0], [1], [0, 0, 1, 1], [], []>} : vector<8x128xf32>, vector<128x512xf32>, vector<8x512xf32> -> vector<8x512xf32>
    %348 = arith.addf %346, %347 : vector<8x512xf32>
    %349 = vector.extract_strided_slice %348 {offsets = [0, 0], sizes = [8, 384], strides = [1, 1]} : vector<8x512xf32> to vector<8x384xf32>
    %350 = arith.negf %349 : vector<8x384xf32>
    %351 = math.exp %350 : vector<8x384xf32>
    %cst_121 = arith.constant 1.000000e+00 : f32
    %352 = vector.broadcast %cst_121 : f32 to vector<8x384xf32>
    %353 = arith.addf %352, %351 : vector<8x384xf32>
    %354 = arith.divf %352, %353 : vector<8x384xf32>
    %355 = vector.extract_strided_slice %348 {offsets = [0, 384], sizes = [8, 128], strides = [1, 1]} : vector<8x512xf32> to vector<8x128xf32>
    %356 = math.tanh %355 : vector<8x128xf32>
    %357 = vector.extract_strided_slice %354 {offsets = [0, 0], sizes = [8, 128], strides = [1, 1]} : vector<8x384xf32> to vector<8x128xf32>
    %358 = vector.extract_strided_slice %354 {offsets = [0, 128], sizes = [8, 128], strides = [1, 1]} : vector<8x384xf32> to vector<8x128xf32>
    %359 = vector.extract_strided_slice %354 {offsets = [0, 256], sizes = [8, 128], strides = [1, 1]} : vector<8x384xf32> to vector<8x128xf32>
    %360 = arith.mulf %358, %341 : vector<8x128xf32>
    %361 = arith.mulf %357, %356 : vector<8x128xf32>
    %362 = arith.addf %360, %361 : vector<8x128xf32>
    %363 = math.tanh %362 : vector<8x128xf32>
    %364 = arith.mulf %359, %363 : vector<8x128xf32>
    %c6_i32_122 = arith.constant 6 : i32
    %365 = arith.index_cast %c6_i32_122 : i32 to index
    %c0_123 = arith.constant 0 : index
    %c0_124 = arith.constant 0 : index
    %366 = vector.load %arg13[%365, %c0_123, %c0_124] : memref<8x8x512xf32, #tpu.memory_space<vmem>>, vector<1x8x512xf32>
    %367 = vector.shape_cast %366 : vector<1x8x512xf32> to vector<8x512xf32>
    %cst_125 = arith.constant dense<0.000000e+00> : vector<8x512xf32>
    %368 = tpu.matmul %364, %236, %cst_125 {dimension_numbers = #tpu.dot_dimension_numbers<[1], [0], [0], [1], [0, 0, 1, 1], [], []>} : vector<8x128xf32>, vector<128x512xf32>, vector<8x512xf32> -> vector<8x512xf32>
    %369 = arith.addf %367, %368 : vector<8x512xf32>
    %370 = vector.extract_strided_slice %369 {offsets = [0, 0], sizes = [8, 384], strides = [1, 1]} : vector<8x512xf32> to vector<8x384xf32>
    %371 = arith.negf %370 : vector<8x384xf32>
    %372 = math.exp %371 : vector<8x384xf32>
    %cst_126 = arith.constant 1.000000e+00 : f32
    %373 = vector.broadcast %cst_126 : f32 to vector<8x384xf32>
    %374 = arith.addf %373, %372 : vector<8x384xf32>
    %375 = arith.divf %373, %374 : vector<8x384xf32>
    %376 = vector.extract_strided_slice %369 {offsets = [0, 384], sizes = [8, 128], strides = [1, 1]} : vector<8x512xf32> to vector<8x128xf32>
    %377 = math.tanh %376 : vector<8x128xf32>
    %378 = vector.extract_strided_slice %375 {offsets = [0, 0], sizes = [8, 128], strides = [1, 1]} : vector<8x384xf32> to vector<8x128xf32>
    %379 = vector.extract_strided_slice %375 {offsets = [0, 128], sizes = [8, 128], strides = [1, 1]} : vector<8x384xf32> to vector<8x128xf32>
    %380 = vector.extract_strided_slice %375 {offsets = [0, 256], sizes = [8, 128], strides = [1, 1]} : vector<8x384xf32> to vector<8x128xf32>
    %381 = arith.mulf %379, %362 : vector<8x128xf32>
    %382 = arith.mulf %378, %377 : vector<8x128xf32>
    %383 = arith.addf %381, %382 : vector<8x128xf32>
    %384 = math.tanh %383 : vector<8x128xf32>
    %385 = arith.mulf %380, %384 : vector<8x128xf32>
    %c7_i32_127 = arith.constant 7 : i32
    %386 = arith.index_cast %c7_i32_127 : i32 to index
    %c0_128 = arith.constant 0 : index
    %c0_129 = arith.constant 0 : index
    %387 = vector.load %arg13[%386, %c0_128, %c0_129] : memref<8x8x512xf32, #tpu.memory_space<vmem>>, vector<1x8x512xf32>
    %388 = vector.shape_cast %387 : vector<1x8x512xf32> to vector<8x512xf32>
    %cst_130 = arith.constant dense<0.000000e+00> : vector<8x512xf32>
    %389 = tpu.matmul %385, %236, %cst_130 {dimension_numbers = #tpu.dot_dimension_numbers<[1], [0], [0], [1], [0, 0, 1, 1], [], []>} : vector<8x128xf32>, vector<128x512xf32>, vector<8x512xf32> -> vector<8x512xf32>
    %390 = arith.addf %388, %389 : vector<8x512xf32>
    %391 = vector.extract_strided_slice %390 {offsets = [0, 0], sizes = [8, 384], strides = [1, 1]} : vector<8x512xf32> to vector<8x384xf32>
    %392 = arith.negf %391 : vector<8x384xf32>
    %393 = math.exp %392 : vector<8x384xf32>
    %cst_131 = arith.constant 1.000000e+00 : f32
    %394 = vector.broadcast %cst_131 : f32 to vector<8x384xf32>
    %395 = arith.addf %394, %393 : vector<8x384xf32>
    %396 = arith.divf %394, %395 : vector<8x384xf32>
    %397 = vector.extract_strided_slice %390 {offsets = [0, 384], sizes = [8, 128], strides = [1, 1]} : vector<8x512xf32> to vector<8x128xf32>
    %398 = math.tanh %397 : vector<8x128xf32>
    %399 = vector.extract_strided_slice %396 {offsets = [0, 0], sizes = [8, 128], strides = [1, 1]} : vector<8x384xf32> to vector<8x128xf32>
    %400 = vector.extract_strided_slice %396 {offsets = [0, 128], sizes = [8, 128], strides = [1, 1]} : vector<8x384xf32> to vector<8x128xf32>
    %401 = vector.extract_strided_slice %396 {offsets = [0, 256], sizes = [8, 128], strides = [1, 1]} : vector<8x384xf32> to vector<8x128xf32>
    %402 = arith.mulf %400, %383 : vector<8x128xf32>
    %403 = arith.mulf %399, %398 : vector<8x128xf32>
    %404 = arith.addf %402, %403 : vector<8x128xf32>
    %405 = math.tanh %404 : vector<8x128xf32>
    %406 = arith.mulf %401, %405 : vector<8x128xf32>
    %c8_i32_132 = arith.constant 8 : i32
    %c0_133 = arith.constant 0 : index
    %c0_134 = arith.constant 0 : index
    %407 = vector.load %arg7[%c0_133, %c0_134] : memref<128x128xf32, #tpu.memory_space<vmem>>, vector<128x128xf32>
    %cst_135 = arith.constant dense<0.000000e+00> : vector<8x128xf32>
    %408 = tpu.matmul %406, %407, %cst_135 {dimension_numbers = #tpu.dot_dimension_numbers<[1], [0], [0], [1], [0, 0, 1, 1], [], []>} : vector<8x128xf32>, vector<128x128xf32>, vector<8x128xf32> -> vector<8x128xf32>
    %c0_136 = arith.constant 0 : index
    %c0_137 = arith.constant 0 : index
    %409 = vector.load %arg8[%c0_136, %c0_137] : memref<1x128xf32, #tpu.memory_space<vmem>>, vector<1x128xf32>
    %410 = vector.broadcast %409 : vector<1x128xf32> to vector<8x128xf32>
    %411 = arith.addf %408, %410 : vector<8x128xf32>
    %cst_138 = arith.constant 0.000000e+00 : f32
    %412 = vector.broadcast %cst_138 : f32 to vector<8x128xf32>
    %413 = arith.maximumf %411, %412 : vector<8x128xf32>
    %c0_139 = arith.constant 0 : index
    %c0_140 = arith.constant 0 : index
    %414 = vector.load %arg9[%c0_139, %c0_140] : memref<128x128xf32, #tpu.memory_space<vmem>>, vector<128x128xf32>
    %cst_141 = arith.constant dense<0.000000e+00> : vector<8x128xf32>
    %415 = tpu.matmul %413, %414, %cst_141 {dimension_numbers = #tpu.dot_dimension_numbers<[1], [0], [0], [1], [0, 0, 1, 1], [], []>} : vector<8x128xf32>, vector<128x128xf32>, vector<8x128xf32> -> vector<8x128xf32>
    %c0_142 = arith.constant 0 : index
    %c0_143 = arith.constant 0 : index
    %416 = vector.load %arg10[%c0_142, %c0_143] : memref<1x128xf32, #tpu.memory_space<vmem>>, vector<1x128xf32>
    %417 = vector.broadcast %416 : vector<1x128xf32> to vector<8x128xf32>
    %418 = arith.addf %415, %417 : vector<8x128xf32>
    %c0_144 = arith.constant 0 : index
    %c0_145 = arith.constant 0 : index
    %419 = vector.load %arg11[%c0_144, %c0_145] : memref<8x128xf32, #tpu.memory_space<vmem>>, vector<8x128xf32>
    tpu.vector_store %arg11[%c0_144, %c0_145], %418 {strides = array<i32>} : memref<8x128xf32, #tpu.memory_space<vmem>>, vector<8x128xf32>,
    return
  }
  func.func @transform_0(%arg0: i32) -> (i32, i32, i32) {
    %c0_i32 = arith.constant 0 : i32
    %c0_i32_0 = arith.constant 0 : i32
    %c0_i32_1 = arith.constant 0 : i32
    return %c0_i32, %arg0, %c0_i32_0 : i32, i32, i32
  }
  func.func @transform_1(%arg0: i32) -> (i32, i32) {
    %c0_i32 = arith.constant 0 : i32
    %c0_i32_0 = arith.constant 0 : i32
    %c0_i32_1 = arith.constant 0 : i32
    return %c0_i32, %c0_i32_0 : i32, i32
  }
  func.func @transform_2(%arg0: i32) -> (i32, i32) {
    %c0_i32 = arith.constant 0 : i32
    %c0_i32_0 = arith.constant 0 : i32
    %c0_i32_1 = arith.constant 0 : i32
    return %c0_i32, %c0_i32_0 : i32, i32
  }
  func.func @transform_3(%arg0: i32) -> (i32, i32, i32) {
    %c0_i32 = arith.constant 0 : i32
    %c0_i32_0 = arith.constant 0 : i32
    %c0_i32_1 = arith.constant 0 : i32
    %c0_i32_2 = arith.constant 0 : i32
    return %c0_i32, %c0_i32_0, %c0_i32_1 : i32, i32, i32
  }
  func.func @transform_4(%arg0: i32) -> (i32, i32, i32) {
    %c0_i32 = arith.constant 0 : i32
    %c0_i32_0 = arith.constant 0 : i32
    %c0_i32_1 = arith.constant 0 : i32
    %c0_i32_2 = arith.constant 0 : i32
    return %c0_i32, %c0_i32_0, %c0_i32_1 : i32, i32, i32
  }
  func.func @transform_5(%arg0: i32) -> (i32, i32, i32) {
    %c0_i32 = arith.constant 0 : i32
    %c0_i32_0 = arith.constant 0 : i32
    %c0_i32_1 = arith.constant 0 : i32
    %c0_i32_2 = arith.constant 0 : i32
    return %c0_i32, %c0_i32_0, %c0_i32_1 : i32, i32, i32
  }
  func.func @transform_6(%arg0: i32) -> (i32, i32) {
    %c0_i32 = arith.constant 0 : i32
    %c0_i32_0 = arith.constant 0 : i32
    %c0_i32_1 = arith.constant 0 : i32
    return %c0_i32, %c0_i32_0 : i32, i32
  }
  func.func @transform_7(%arg0: i32) -> (i32, i32) {
    %c0_i32 = arith.constant 0 : i32
    %c0_i32_0 = arith.constant 0 : i32
    %c0_i32_1 = arith.constant 0 : i32
    return %c0_i32, %c0_i32_0 : i32, i32
  }
  func.func @transform_8(%arg0: i32) -> (i32, i32) {
    %c0_i32 = arith.constant 0 : i32
    %c0_i32_0 = arith.constant 0 : i32
    %c0_i32_1 = arith.constant 0 : i32
    return %c0_i32, %c0_i32_0 : i32, i32
  }
  func.func @transform_9(%arg0: i32) -> (i32, i32) {
    %c0_i32 = arith.constant 0 : i32
    %c0_i32_0 = arith.constant 0 : i32
    %c0_i32_1 = arith.constant 0 : i32
    return %c0_i32, %c0_i32_0 : i32, i32
  }
  func.func @transform_10(%arg0: i32) -> (i32, i32) {
    %c0_i32 = arith.constant 0 : i32
    %c0_i32_0 = arith.constant 0 : i32
    return %arg0, %c0_i32 : i32, i32
  }
}

</mosaic_0001>

<llo_original>
// kernel: lstm_forward.1
$region0: #{lstm_forward.1}
  #allocation0 [shape = 'u32[]', space=smem, size = 0x4, offset = 0x4, fixed_abs, tag = 'smem constant byte address 0x4 - core index']
  #allocation1 [shape = 'u32[144,128]{1,0:T(1,128)}', space=vmem, size = 0x12000, scoped, tag = 'internal scratch']
  #allocation2 [shape = 'f32[8,8,128]{2,1,0:T(8,128)}', space=vmem, size = 0x8000, scoped, tag = 'scratch operand']
  #allocation3 [shape = 'f32[8,8,512]{2,1,0:T(8,128)}', space=vmem, size = 0x20000, scoped, tag = 'scratch operand']
  %s0 = inlined_call_operand.vmem [shape: f32[8,8,128], index: 0, kind: input, shape index: {}]
  %s1 = inlined_call_operand.vmem [shape: f32[128,128], index: 1, kind: input, shape index: {}]
  %s2 = inlined_call_operand.vmem [shape: f32[1,128], index: 2, kind: input, shape index: {}]
  %s3 = inlined_call_operand.vmem [shape: f32[2,128,512], index: 3, kind: input, shape index: {}]
  %s4 = inlined_call_operand.vmem [shape: f32[2,128,512], index: 4, kind: input, shape index: {}]
  %s5 = inlined_call_operand.vmem [shape: f32[2,1,512], index: 5, kind: input, shape index: {}]
  %s6 = inlined_call_operand.vmem [shape: f32[128,128], index: 6, kind: input, shape index: {}]
  %s7 = inlined_call_operand.vmem [shape: f32[1,128], index: 7, kind: input, shape index: {}]
  %s8 = inlined_call_operand.vmem [shape: f32[128,128], index: 8, kind: input, shape index: {}]
  %s9 = inlined_call_operand.vmem [shape: f32[1,128], index: 9, kind: input, shape index: {}]
  %s10 = inlined_call_operand.vmem [shape: f32[8,128], index: 10, kind: output, shape index: {}]
  %s11 = sld [smem:[#allocation0]]
  $region50: #{lstm_forward.1} parent=0
    _
  %s13 = ssub.s32 1, %s11
  %s14 = scalar_select 0, %s13, %s11
  // Predicated region
  $region2: #{lstm_forward.1} parent=0 // pred_check
    _
  $region3: #{lstm_forward.1} parent=0 // pred_check_branch
    %16 = sbr.rel (0) target = $region5
  $region4: #{lstm_forward.1} parent=0 // pred_region
    _
  $region5: #{lstm_forward.1} parent=0 // pred_fallthru
    _
  // Predicated region
  $region6: #{lstm_forward.1} parent=0 // pred_check
    _
  $region7: #{lstm_forward.1} parent=0 // pred_check_branch
    %18 = sbr.rel (0) target = $region9
  $region8: #{lstm_forward.1} parent=0 // pred_region
    _
  $region9: #{lstm_forward.1} parent=0 // pred_fallthru
    _
  // Predicated region
  $region10: #{lstm_forward.1} parent=0 // pred_check
    _
  $region11: #{lstm_forward.1} parent=0 // pred_check_branch
    %20 = sbr.rel (0) target = $region13
  $region12: #{lstm_forward.1} parent=0 // pred_region
    _
  $region13: #{lstm_forward.1} parent=0 // pred_fallthru
    _
  // Predicated region
  $region14: #{lstm_forward.1} parent=0 // pred_check
    _
  $region15: #{lstm_forward.1} parent=0 // pred_check_branch
    %22 = sbr.rel (0) target = $region17
  $region16: #{lstm_forward.1} parent=0 // pred_region
    _
  $region17: #{lstm_forward.1} parent=0 // pred_fallthru
    _
  // Predicated region
  $region18: #{lstm_forward.1} parent=0 // pred_check
    _
  $region19: #{lstm_forward.1} parent=0 // pred_check_branch
    %24 = sbr.rel (0) target = $region21
  $region20: #{lstm_forward.1} parent=0 // pred_region
    _
  $region21: #{lstm_forward.1} parent=0 // pred_fallthru
    _
  // Predicated region
  $region22: #{lstm_forward.1} parent=0 // pred_check
    _
  $region23: #{lstm_forward.1} parent=0 // pred_check_branch
    %26 = sbr.rel (0) target = $region25
  $region24: #{lstm_forward.1} parent=0 // pred_region
    _
  $region25: #{lstm_forward.1} parent=0 // pred_fallthru
    _
  // Predicated region
  $region26: #{lstm_forward.1} parent=0 // pred_check
    _
  $region27: #{lstm_forward.1} parent=0 // pred_check_branch
    %28 = sbr.rel (0) target = $region29
  $region28: #{lstm_forward.1} parent=0 // pred_region
    _
  $region29: #{lstm_forward.1} parent=0 // pred_fallthru
    _
  // Predicated region
  $region30: #{lstm_forward.1} parent=0 // pred_check
    _
  $region31: #{lstm_forward.1} parent=0 // pred_check_branch
    %30 = sbr.rel (0) target = $region33
  $region32: #{lstm_forward.1} parent=0 // pred_region
    _
  $region33: #{lstm_forward.1} parent=0 // pred_fallthru
    _
  // Predicated region
  $region34: #{lstm_forward.1} parent=0 // pred_check
    _
  $region35: #{lstm_forward.1} parent=0 // pred_check_branch
    %32 = sbr.rel (0) target = $region37
  $region36: #{lstm_forward.1} parent=0 // pred_region
    _
  $region37: #{lstm_forward.1} parent=0 // pred_fallthru
    _
  // Predicated region
  $region38: #{lstm_forward.1} parent=0 // pred_check
    _
  $region39: #{lstm_forward.1} parent=0 // pred_check_branch
    %34 = sbr.rel (0) target = $region41
  $region40: #{lstm_forward.1} parent=0 // pred_region
    _
  $region41: #{lstm_forward.1} parent=0 // pred_fallthru
    _
  %v35 = vld [vmem:[%s0] sm:$0xff]
  %v36 = vld [vmem:[%s0 + $0x8] sm:$0xff]
  %v37 = vld [vmem:[%s0 + $0x10] sm:$0xff]
  %v38 = vld [vmem:[%s0 + $0x18] sm:$0xff]
  %v39 = vld [vmem:[%s0 + $0x20] sm:$0xff]
  %v40 = vld [vmem:[%s0 + $0x28] sm:$0xff]
  %v41 = vld [vmem:[%s0 + $0x30] sm:$0xff]
  %v42 = vld [vmem:[%s0 + $0x38] sm:$0xff]
  %v43 = vld [vmem:[%s1] sm:$0xff]
  %v44 = vld [vmem:[%s1 + $0x8] sm:$0xff]
  %v45 = vld [vmem:[%s1 + $0x10] sm:$0xff]
  %v46 = vld [vmem:[%s1 + $0x18] sm:$0xff]
  %v47 = vld [vmem:[%s1 + $0x20] sm:$0xff]
  %v48 = vld [vmem:[%s1 + $0x28] sm:$0xff]
  %v49 = vld [vmem:[%s1 + $0x30] sm:$0xff]
  %v50 = vld [vmem:[%s1 + $0x38] sm:$0xff]
  %v51 = vld [vmem:[%s1 + $0x40] sm:$0xff]
  %v52 = vld [vmem:[%s1 + $0x48] sm:$0xff]
  %v53 = vld [vmem:[%s1 + $0x50] sm:$0xff]
  %v54 = vld [vmem:[%s1 + $0x58] sm:$0xff]
  %v55 = vld [vmem:[%s1 + $0x60] sm:$0xff]
  %v56 = vld [vmem:[%s1 + $0x68] sm:$0xff]
  %v57 = vld [vmem:[%s1 + $0x70] sm:$0xff]
  %v58 = vld [vmem:[%s1 + $0x78] sm:$0xff]
  %v59 = vld [vmem:[%s2] sm:$0x1]
  %v61 = vlaneseq
  %v62 = vshrl.u32 %v61, 7
  %v63 = vsub.s32 0, %v62
  %v64 = vrot.slane %v59, %v63
  %66 = vmatprep.subr.mxu0 0.0
  %67 = vmatpush1.msra.mxu0 %v58
  %68 = vmatprep.subr.mxu0 0.0
  %69 = vmatpush1.msra.mxu0 %v57
  %70 = vmatprep.subr.mxu0 0.0
  %71 = vmatpush1.msra.mxu0 %v56
  %72 = vmatprep.subr.mxu0 0.0
  %73 = vmatpush1.msra.mxu0 %v55
  %74 = vmatprep.subr.mxu0 0.0
  %75 = vmatpush1.msra.mxu0 %v54
  %76 = vmatprep.subr.mxu0 0.0
  %77 = vmatpush1.msra.mxu0 %v53
  %78 = vmatprep.subr.mxu0 0.0
  %79 = vmatpush1.msra.mxu0 %v52
  %80 = vmatprep.subr.mxu0 0.0
  %81 = vmatpush1.msra.mxu0 %v51
  %82 = vmatprep.subr.mxu0 0.0
  %83 = vmatpush1.msra.mxu0 %v50
  %84 = vmatprep.subr.mxu0 0.0
  %85 = vmatpush1.msra.mxu0 %v49
  %86 = vmatprep.subr.mxu0 0.0
  %87 = vmatpush1.msra.mxu0 %v48
  %88 = vmatprep.subr.mxu0 0.0
  %89 = vmatpush1.msra.mxu0 %v47
  %90 = vmatprep.subr.mxu0 0.0
  %91 = vmatpush1.msra.mxu0 %v46
  %92 = vmatprep.subr.mxu0 0.0
  %93 = vmatpush1.msra.mxu0 %v45
  %94 = vmatprep.subr.mxu0 0.0
  %95 = vmatpush1.msra.mxu0 %v44
  %96 = vmatprep.subr.mxu0 0.0
  %97 = vmatpush1.msra.mxu0 %v43
  %98 = vmatprep.subr.mxu0 0.0
  %99 = vmatpush2.msra.mxu0 0.0
  %100 = vmatprep.subr.mxu0 0.0
  %101 = vmatpush2.msra.mxu0 0.0
  %102 = vmatprep.subr.mxu0 0.0
  %103 = vmatpush2.msra.mxu0 0.0
  %104 = vmatprep.subr.mxu0 0.0
  %105 = vmatpush2.msra.mxu0 0.0
  %106 = vmatprep.subr.mxu0 0.0
  %107 = vmatpush2.msra.mxu0 0.0
  %108 = vmatprep.subr.mxu0 0.0
  %109 = vmatpush2.msra.mxu0 0.0
  %110 = vmatprep.subr.mxu0 0.0
  %111 = vmatpush2.msra.mxu0 0.0
  %112 = vmatprep.subr.mxu0 0.0
  %113 = vmatpush2.msra.mxu0 0.0
  %114 = vmatprep.subr.mxu0 0.0
  %115 = vmatpush2.msra.mxu0 0.0
  %116 = vmatprep.subr.mxu0 0.0
  %117 = vmatpush2.msra.mxu0 0.0
  %118 = vmatprep.subr.mxu0 0.0
  %119 = vmatpush2.msra.mxu0 0.0
  %120 = vmatprep.subr.mxu0 0.0
  %121 = vmatpush2.msra.mxu0 0.0
  %122 = vmatprep.subr.mxu0 0.0
  %123 = vmatpush2.msra.mxu0 0.0
  %124 = vmatprep.subr.mxu0 0.0
  %125 = vmatpush2.msra.mxu0 0.0
  %126 = vmatprep.subr.mxu0 0.0
  %127 = vmatpush2.msra.mxu0 0.0
  %128 = vmatprep.subr.mxu0 0.0
  %129 = vmatpush2.msra.mxu0 0.0
  %130 = vmatprep.mubr.f32.mxu0 0.0
  %131 = vmatmul.mubr.f32.gmra.mxu0 %v35
  %v132 = vpop.f32.mrf.mxu0
  %v133 = vadd.f32 %v64, %v132
  %v134 = vpop.f32.mrf.mxu0
  %135 = vmatprep.mubr.f32.mxu0 0.0
  %136 = vmatmul.mubr.f32.gmra.mxu0 %v36
  %v137 = vpop.f32.mrf.mxu0
  %v138 = vadd.f32 %v64, %v137
  %v139 = vpop.f32.mrf.mxu0
  %140 = vmatprep.mubr.f32.mxu0 0.0
  %141 = vmatmul.mubr.f32.gmra.mxu0 %v37
  %v142 = vpop.f32.mrf.mxu0
  %v143 = vadd.f32 %v64, %v142
  %v144 = vpop.f32.mrf.mxu0
  %145 = vmatprep.mubr.f32.mxu0 0.0
  %146 = vmatmul.mubr.f32.gmra.mxu0 %v38
  %v147 = vpop.f32.mrf.mxu0
  %v148 = vadd.f32 %v64, %v147
  %v149 = vpop.f32.mrf.mxu0
  %150 = vmatprep.mubr.f32.mxu0 0.0
  %151 = vmatmul.mubr.f32.gmra.mxu0 %v39
  %v152 = vpop.f32.mrf.mxu0
  %v153 = vadd.f32 %v64, %v152
  %v154 = vpop.f32.mrf.mxu0
  %155 = vmatprep.mubr.f32.mxu0 0.0
  %156 = vmatmul.mubr.f32.gmra.mxu0 %v40
  %v157 = vpop.f32.mrf.mxu0
  %v158 = vadd.f32 %v64, %v157
  %v159 = vpop.f32.mrf.mxu0
  %160 = vmatprep.mubr.f32.mxu0 0.0
  %161 = vmatmul.mubr.f32.gmra.mxu0 %v41
  %v162 = vpop.f32.mrf.mxu0
  %v163 = vadd.f32 %v64, %v162
  %v164 = vpop.f32.mrf.mxu0
  %165 = vmatprep.mubr.f32.mxu0 0.0
  %166 = vmatmul.mubr.f32.gmra.mxu0 %v42
  %v167 = vpop.f32.mrf.mxu0
  %v168 = vadd.f32 %v64, %v167
  %v169 = vpop.f32.mrf.mxu0
  %170 = vdwg.mxu0
  %171 = vst [vmem:[#allocation2] sm:$0xff] %v133
  %172 = vst [vmem:[#allocation2 + $0x8] sm:$0xff] %v138
  %173 = vst [vmem:[#allocation2 + $0x10] sm:$0xff] %v143
  %174 = vst [vmem:[#allocation2 + $0x18] sm:$0xff] %v148
  %175 = vst [vmem:[#allocation2 + $0x20] sm:$0xff] %v153
  %176 = vst [vmem:[#allocation2 + $0x28] sm:$0xff] %v158
  %177 = vst [vmem:[#allocation2 + $0x30] sm:$0xff] %v163
  %178 = vst [vmem:[#allocation2 + $0x38] sm:$0xff] %v168
  %v179 = vld [vmem:[#allocation2] sm:$0xff]
  %v180 = vld [vmem:[#allocation2 + $0x8] sm:$0xff]
  %v181 = vld [vmem:[#allocation2 + $0x10] sm:$0xff]
  %v182 = vld [vmem:[#allocation2 + $0x18] sm:$0xff]
  %v183 = vld [vmem:[#allocation2 + $0x20] sm:$0xff]
  %v184 = vld [vmem:[#allocation2 + $0x28] sm:$0xff]
  %v185 = vld [vmem:[#allocation2 + $0x30] sm:$0xff]
  %v186 = vld [vmem:[#allocation2 + $0x38] sm:$0xff]
  %v187 = vld [vmem:[%s3] sm:$0xff]
  %v188 = vld [vmem:[%s3 + $0x8] sm:$0xff]
  %v189 = vld [vmem:[%s3 + $0x10] sm:$0xff]
  %v190 = vld [vmem:[%s3 + $0x18] sm:$0xff]
  %v191 = vld [vmem:[%s3 + $0x20] sm:$0xff]
  %v192 = vld [vmem:[%s3 + $0x28] sm:$0xff]
  %v193 = vld [vmem:[%s3 + $0x30] sm:$0xff]
  %v194 = vld [vmem:[%s3 + $0x38] sm:$0xff]
  %v195 = vld [vmem:[%s3 + $0x40] sm:$0xff]
  %v196 = vld [vmem:[%s3 + $0x48] sm:$0xff]
  %v197 = vld [vmem:[%s3 + $0x50] sm:$0xff]
  %v198 = vld [vmem:[%s3 + $0x58] sm:$0xff]
  %v199 = vld [vmem:[%s3 + $0x60] sm:$0xff]
  %v200 = vld [vmem:[%s3 + $0x68] sm:$0xff]
  %v201 = vld [vmem:[%s3 + $0x70] sm:$0xff]
  %v202 = vld [vmem:[%s3 + $0x78] sm:$0xff]
  %v203 = vld [vmem:[%s3 + $0x80] sm:$0xff]
  %v204 = vld [vmem:[%s3 + $0x88] sm:$0xff]
  %v205 = vld [vmem:[%s3 + $0x90] sm:$0xff]
  %v206 = vld [vmem:[%s3 + $0x98] sm:$0xff]
  %v207 = vld [vmem:[%s3 + $0xa0] sm:$0xff]
  %v208 = vld [vmem:[%s3 + $0xa8] sm:$0xff]
  %v209 = vld [vmem:[%s3 + $0xb0] sm:$0xff]
  %v210 = vld [vmem:[%s3 + $0xb8] sm:$0xff]
  %v211 = vld [vmem:[%s3 + $0xc0] sm:$0xff]
  %v212 = vld [vmem:[%s3 + $0xc8] sm:$0xff]
  %v213 = vld [vmem:[%s3 + $0xd0] sm:$0xff]
  %v214 = vld [vmem:[%s3 + $0xd8] sm:$0xff]
  %v215 = vld [vmem:[%s3 + $0xe0] sm:$0xff]
  %v216 = vld [vmem:[%s3 + $0xe8] sm:$0xff]
  %v217 = vld [vmem:[%s3 + $0xf0] sm:$0xff]
  %v218 = vld [vmem:[%s3 + $0xf8] sm:$0xff]
  %v219 = vld [vmem:[%s3 + $0x100] sm:$0xff]
  %v220 = vld [vmem:[%s3 + $0x108] sm:$0xff]
  %v221 = vld [vmem:[%s3 + $0x110] sm:$0xff]
  %v222 = vld [vmem:[%s3 + $0x118] sm:$0xff]
  %v223 = vld [vmem:[%s3 + $0x120] sm:$0xff]
  %v224 = vld [vmem:[%s3 + $0x128] sm:$0xff]
  %v225 = vld [vmem:[%s3 + $0x130] sm:$0xff]
  %v226 = vld [vmem:[%s3 + $0x138] sm:$0xff]
  %v227 = vld [vmem:[%s3 + $0x140] sm:$0xff]
  %v228 = vld [vmem:[%s3 + $0x148] sm:$0xff]
  %v229 = vld [vmem:[%s3 + $0x150] sm:$0xff]
  %v230 = vld [vmem:[%s3 + $0x158] sm:$0xff]
  %v231 = vld [vmem:[%s3 + $0x160] sm:$0xff]
  %v232 = vld [vmem:[%s3 + $0x168] sm:$0xff]
  %v233 = vld [vmem:[%s3 + $0x170] sm:$0xff]
  %v234 = vld [vmem:[%s3 + $0x178] sm:$0xff]
  %v235 = vld [vmem:[%s3 + $0x180] sm:$0xff]
  %v236 = vld [vmem:[%s3 + $0x188] sm:$0xff]
  %v237 = vld [vmem:[%s3 + $0x190] sm:$0xff]
  %v238 = vld [vmem:[%s3 + $0x198] sm:$0xff]
  %v239 = vld [vmem:[%s3 + $0x1a0] sm:$0xff]
  %v240 = vld [vmem:[%s3 + $0x1a8] sm:$0xff]
  %v241 = vld [vmem:[%s3 + $0x1b0] sm:$0xff]
  %v242 = vld [vmem:[%s3 + $0x1b8] sm:$0xff]
  %v243 = vld [vmem:[%s3 + $0x1c0] sm:$0xff]
  %v244 = vld [vmem:[%s3 + $0x1c8] sm:$0xff]
  %v245 = vld [vmem:[%s3 + $0x1d0] sm:$0xff]
  %v246 = vld [vmem:[%s3 + $0x1d8] sm:$0xff]
  %v247 = vld [vmem:[%s3 + $0x1e0] sm:$0xff]
  %v248 = vld [vmem:[%s3 + $0x1e8] sm:$0xff]
  %v249 = vld [vmem:[%s3 + $0x1f0] sm:$0xff]
  %v250 = vld [vmem:[%s3 + $0x1f8] sm:$0xff]
  %v251 = vld [vmem:[%s5] sm:$0xf]
  %v253 = vlaneseq
  %v254 = vshrl.u32 %v253, 7
  %v255 = vsub.s32 0, %v254
  %v256 = vrot.slane %v251, %v255
  %v257 = vlaneseq
  %v258 = vshrl.u32 %v257, 7
  %v259 = vsub.s32 1, %v258
  %v260 = vrot.slane %v251, %v259
  %v261 = vlaneseq
  %v262 = vshrl.u32 %v261, 7
  %v263 = vsub.s32 2, %v262
  %v264 = vrot.slane %v251, %v263
  %v265 = vlaneseq
  %v266 = vshrl.u32 %v265, 7
  %v267 = vsub.s32 3, %v266
  %v268 = vrot.slane %v251, %v267
  %273 = vmatprep.subr.mxu0 %v248
  %274 = vmatpush1.msra.mxu0 %v247
  %275 = vmatprep.subr.mxu0 %v244
  %276 = vmatpush1.msra.mxu0 %v243
  %277 = vmatprep.subr.mxu0 %v240
  %278 = vmatpush1.msra.mxu0 %v239
  %279 = vmatprep.subr.mxu0 %v236
  %280 = vmatpush1.msra.mxu0 %v235
  %281 = vmatprep.subr.mxu0 %v232
  %282 = vmatpush1.msra.mxu0 %v231
  %283 = vmatprep.subr.mxu0 %v228
  %284 = vmatpush1.msra.mxu0 %v227
  %285 = vmatprep.subr.mxu0 %v224
  %286 = vmatpush1.msra.mxu0 %v223
  %287 = vmatprep.subr.mxu0 %v220
  %288 = vmatpush1.msra.mxu0 %v219
  %289 = vmatprep.subr.mxu0 %v216
  %290 = vmatpush1.msra.mxu0 %v215
  %291 = vmatprep.subr.mxu0 %v212
  %292 = vmatpush1.msra.mxu0 %v211
  %293 = vmatprep.subr.mxu0 %v208
  %294 = vmatpush1.msra.mxu0 %v207
  %295 = vmatprep.subr.mxu0 %v204
  %296 = vmatpush1.msra.mxu0 %v203
  %297 = vmatprep.subr.mxu0 %v200
  %298 = vmatpush1.msra.mxu0 %v199
  %299 = vmatprep.subr.mxu0 %v196
  %300 = vmatpush1.msra.mxu0 %v195
  %301 = vmatprep.subr.mxu0 %v192
  %302 = vmatpush1.msra.mxu0 %v191
  %303 = vmatprep.subr.mxu0 %v188
  %304 = vmatpush1.msra.mxu0 %v187
  %305 = vmatprep.subr.mxu0 0.0
  %306 = vmatpush2.msra.mxu0 0.0
  %307 = vmatprep.subr.mxu0 0.0
  %308 = vmatpush2.msra.mxu0 0.0
  %309 = vmatprep.subr.mxu0 0.0
  %310 = vmatpush2.msra.mxu0 0.0
  %311 = vmatprep.subr.mxu0 0.0
  %312 = vmatpush2.msra.mxu0 0.0
  %313 = vmatprep.subr.mxu0 0.0
  %314 = vmatpush2.msra.mxu0 0.0
  %315 = vmatprep.subr.mxu0 0.0
  %316 = vmatpush2.msra.mxu0 0.0
  %317 = vmatprep.subr.mxu0 0.0
  %318 = vmatpush2.msra.mxu0 0.0
  %319 = vmatprep.subr.mxu0 0.0
  %320 = vmatpush2.msra.mxu0 0.0
  %321 = vmatprep.subr.mxu0 0.0
  %322 = vmatpush2.msra.mxu0 0.0
  %323 = vmatprep.subr.mxu0 0.0
  %324 = vmatpush2.msra.mxu0 0.0
  %325 = vmatprep.subr.mxu0 0.0
  %326 = vmatpush2.msra.mxu0 0.0
  %327 = vmatprep.subr.mxu0 0.0
  %328 = vmatpush2.msra.mxu0 0.0
  %329 = vmatprep.subr.mxu0 0.0
  %330 = vmatpush2.msra.mxu0 0.0
  %331 = vmatprep.subr.mxu0 0.0
  %332 = vmatpush2.msra.mxu0 0.0
  %333 = vmatprep.subr.mxu0 0.0
  %334 = vmatpush2.msra.mxu0 0.0
  %335 = vmatprep.subr.mxu0 0.0
  %336 = vmatpush2.msra.mxu0 0.0
  %337 = vmatprep.mubr.f32.mxu0 0.0
  %338 = vmatmul.mubr.f32.gmra.mxu0 %v179
  %v339 = vpop.f32.mrf.mxu0
  %v340 = vadd.f32 %v256, %v339
  %v341 = vpop.f32.mrf.mxu0
  %v342 = vadd.f32 %v260, %v341
  %343 = vmatprep.mubr.f32.mxu0 0.0
  %344 = vmatmul.mubr.f32.gmra.mxu0 %v180
  %v345 = vpop.f32.mrf.mxu0
  %v346 = vadd.f32 %v256, %v345
  %v347 = vpop.f32.mrf.mxu0
  %v348 = vadd.f32 %v260, %v347
  %349 = vmatprep.mubr.f32.mxu0 0.0
  %350 = vmatmul.mubr.f32.gmra.mxu0 %v181
  %v351 = vpop.f32.mrf.mxu0
  %v352 = vadd.f32 %v256, %v351
  %v353 = vpop.f32.mrf.mxu0
  %v354 = vadd.f32 %v260, %v353
  %355 = vmatprep.mubr.f32.mxu0 0.0
  %356 = vmatmul.mubr.f32.gmra.mxu0 %v182
  %v357 = vpop.f32.mrf.mxu0
  %v358 = vadd.f32 %v256, %v357
  %v359 = vpop.f32.mrf.mxu0
  %v360 = vadd.f32 %v260, %v359
  %361 = vmatprep.mubr.f32.mxu0 0.0
  %362 = vmatmul.mubr.f32.gmra.mxu0 %v183
  %v363 = vpop.f32.mrf.mxu0
  %v364 = vadd.f32 %v256, %v363
  %v365 = vpop.f32.mrf.mxu0
  %v366 = vadd.f32 %v260, %v365
  %367 = vmatprep.mubr.f32.mxu0 0.0
  %368 = vmatmul.mubr.f32.gmra.mxu0 %v184
  %v369 = vpop.f32.mrf.mxu0
  %v370 = vadd.f32 %v256, %v369
  %v371 = vpop.f32.mrf.mxu0
  %v372 = vadd.f32 %v260, %v371
  %373 = vmatprep.mubr.f32.mxu0 0.0
  %374 = vmatmul.mubr.f32.gmra.mxu0 %v185
  %v375 = vpop.f32.mrf.mxu0
  %v376 = vadd.f32 %v256, %v375
  %v377 = vpop.f32.mrf.mxu0
  %v378 = vadd.f32 %v260, %v377
  %379 = vmatprep.mubr.f32.mxu0 0.0
  %380 = vmatmul.mubr.f32.gmra.mxu0 %v186
  %v381 = vpop.f32.mrf.mxu0
  %v382 = vadd.f32 %v256, %v381
  %v383 = vpop.f32.mrf.mxu0
  %v384 = vadd.f32 %v260, %v383
  %385 = vdwg.mxu0
  %386 = vmatprep.subr.mxu0 %v250
  %387 = vmatpush1.msra.mxu0 %v249
  %388 = vmatprep.subr.mxu0 %v246
  %389 = vmatpush1.msra.mxu0 %v245
  %390 = vmatprep.subr.mxu0 %v242
  %391 = vmatpush1.msra.mxu0 %v241
  %392 = vmatprep.subr.mxu0 %v238
  %393 = vmatpush1.msra.mxu0 %v237
  %394 = vmatprep.subr.mxu0 %v234
  %395 = vmatpush1.msra.mxu0 %v233
  %396 = vmatprep.subr.mxu0 %v230
  %397 = vmatpush1.msra.mxu0 %v229
  %398 = vmatprep.subr.mxu0 %v226
  %399 = vmatpush1.msra.mxu0 %v225
  %400 = vmatprep.subr.mxu0 %v222
  %401 = vmatpush1.msra.mxu0 %v221
  %402 = vmatprep.subr.mxu0 %v218
  %403 = vmatpush1.msra.mxu0 %v217
  %404 = vmatprep.subr.mxu0 %v214
  %405 = vmatpush1.msra.mxu0 %v213
  %406 = vmatprep.subr.mxu0 %v210
  %407 = vmatpush1.msra.mxu0 %v209
  %408 = vmatprep.subr.mxu0 %v206
  %409 = vmatpush1.msra.mxu0 %v205
  %410 = vmatprep.subr.mxu0 %v202
  %411 = vmatpush1.msra.mxu0 %v201
  %412 = vmatprep.subr.mxu0 %v198
  %413 = vmatpush1.msra.mxu0 %v197
  %414 = vmatprep.subr.mxu0 %v194
  %415 = vmatpush1.msra.mxu0 %v193
  %416 = vmatprep.subr.mxu0 %v190
  %417 = vmatpush1.msra.mxu0 %v189
  %418 = vmatprep.subr.mxu0 0.0
  %419 = vmatpush2.msra.mxu0 0.0
  %420 = vmatprep.subr.mxu0 0.0
  %421 = vmatpush2.msra.mxu0 0.0
  %422 = vmatprep.subr.mxu0 0.0
  %423 = vmatpush2.msra.mxu0 0.0
  %424 = vmatprep.subr.mxu0 0.0
  %425 = vmatpush2.msra.mxu0 0.0
  %426 = vmatprep.subr.mxu0 0.0
  %427 = vmatpush2.msra.mxu0 0.0
  %428 = vmatprep.subr.mxu0 0.0
  %429 = vmatpush2.msra.mxu0 0.0
  %430 = vmatprep.subr.mxu0 0.0
  %431 = vmatpush2.msra.mxu0 0.0
  %432 = vmatprep.subr.mxu0 0.0
  %433 = vmatpush2.msra.mxu0 0.0
  %434 = vmatprep.subr.mxu0 0.0
  %435 = vmatpush2.msra.mxu0 0.0
  %436 = vmatprep.subr.mxu0 0.0
  %437 = vmatpush2.msra.mxu0 0.0
  %438 = vmatprep.subr.mxu0 0.0
  %439 = vmatpush2.msra.mxu0 0.0
  %440 = vmatprep.subr.mxu0 0.0
  %441 = vmatpush2.msra.mxu0 0.0
  %442 = vmatprep.subr.mxu0 0.0
  %443 = vmatpush2.msra.mxu0 0.0
  %444 = vmatprep.subr.mxu0 0.0
  %445 = vmatpush2.msra.mxu0 0.0
  %446 = vmatprep.subr.mxu0 0.0
  %447 = vmatpush2.msra.mxu0 0.0
  %448 = vmatprep.subr.mxu0 0.0
  %449 = vmatpush2.msra.mxu0 0.0
  %450 = vmatprep.mubr.f32.mxu0 0.0
  %451 = vmatmul.mubr.f32.gmra.mxu0 %v179
  %v452 = vpop.f32.mrf.mxu0
  %v453 = vadd.f32 %v264, %v452
  %v454 = vpop.f32.mrf.mxu0
  %v455 = vadd.f32 %v268, %v454
  %456 = vmatprep.mubr.f32.mxu0 0.0
  %457 = vmatmul.mubr.f32.gmra.mxu0 %v180
  %v458 = vpop.f32.mrf.mxu0
  %v459 = vadd.f32 %v264, %v458
  %v460 = vpop.f32.mrf.mxu0
  %v461 = vadd.f32 %v268, %v460
  %462 = vmatprep.mubr.f32.mxu0 0.0
  %463 = vmatmul.mubr.f32.gmra.mxu0 %v181
  %v464 = vpop.f32.mrf.mxu0
  %v465 = vadd.f32 %v264, %v464
  %v466 = vpop.f32.mrf.mxu0
  %v467 = vadd.f32 %v268, %v466
  %468 = vmatprep.mubr.f32.mxu0 0.0
  %469 = vmatmul.mubr.f32.gmra.mxu0 %v182
  %v470 = vpop.f32.mrf.mxu0
  %v471 = vadd.f32 %v264, %v470
  %v472 = vpop.f32.mrf.mxu0
  %v473 = vadd.f32 %v268, %v472
  %474 = vmatprep.mubr.f32.mxu0 0.0
  %475 = vmatmul.mubr.f32.gmra.mxu0 %v183
  %v476 = vpop.f32.mrf.mxu0
  %v477 = vadd.f32 %v264, %v476
  %v478 = vpop.f32.mrf.mxu0
  %v479 = vadd.f32 %v268, %v478
  %480 = vmatprep.mubr.f32.mxu0 0.0
  %481 = vmatmul.mubr.f32.gmra.mxu0 %v184
  %v482 = vpop.f32.mrf.mxu0
  %v483 = vadd.f32 %v264, %v482
  %v484 = vpop.f32.mrf.mxu0
  %v485 = vadd.f32 %v268, %v484
  %486 = vmatprep.mubr.f32.mxu0 0.0
  %487 = vmatmul.mubr.f32.gmra.mxu0 %v185
  %v488 = vpop.f32.mrf.mxu0
  %v489 = vadd.f32 %v264, %v488
  %v490 = vpop.f32.mrf.mxu0
  %v491 = vadd.f32 %v268, %v490
  %492 = vmatprep.mubr.f32.mxu0 0.0
  %493 = vmatmul.mubr.f32.gmra.mxu0 %v186
  %v494 = vpop.f32.mrf.mxu0
  %v495 = vadd.f32 %v264, %v494
  %v496 = vpop.f32.mrf.mxu0
  %v497 = vadd.f32 %v268, %v496
  %498 = vdwg.mxu0
  %499 = vst [vmem:[#allocation3] sm:$0xff] %v340
  %500 = vst [vmem:[#allocation3 + $0x8] sm:$0xff] %v342
  %501 = vst [vmem:[#allocation3 + $0x10] sm:$0xff] %v453
  %502 = vst [vmem:[#allocation3 + $0x18] sm:$0xff] %v455
  %503 = vst [vmem:[#allocation3 + $0x20] sm:$0xff] %v346
  %504 = vst [vmem:[#allocation3 + $0x28] sm:$0xff] %v348
  %505 = vst [vmem:[#allocation3 + $0x30] sm:$0xff] %v459
  %506 = vst [vmem:[#allocation3 + $0x38] sm:$0xff] %v461
  %507 = vst [vmem:[#allocation3 + $0x40] sm:$0xff] %v352
  %508 = vst [vmem:[#allocation3 + $0x48] sm:$0xff] %v354
  %509 = vst [vmem:[#allocation3 + $0x50] sm:$0xff] %v465
  %510 = vst [vmem:[#allocation3 + $0x58] sm:$0xff] %v467
  %511 = vst [vmem:[#allocation3 + $0x60] sm:$0xff] %v358
  %512 = vst [vmem:[#allocation3 + $0x68] sm:$0xff] %v360
  %513 = vst [vmem:[#allocation3 + $0x70] sm:$0xff] %v471
  %514 = vst [vmem:[#allocation3 + $0x78] sm:$0xff] %v473
  %515 = vst [vmem:[#allocation3 + $0x80] sm:$0xff] %v364
  %516 = vst [vmem:[#allocation3 + $0x88] sm:$0xff] %v366
  %517 = vst [vmem:[#allocation3 + $0x90] sm:$0xff] %v477
  %518 = vst [vmem:[#allocation3 + $0x98] sm:$0xff] %v479
  %519 = vst [vmem:[#allocation3 + $0xa0] sm:$0xff] %v370
  %520 = vst [vmem:[#allocation3 + $0xa8] sm:$0xff] %v372
  %521 = vst [vmem:[#allocation3 + $0xb0] sm:$0xff] %v483
  %522 = vst [vmem:[#allocation3 + $0xb8] sm:$0xff] %v485
  %523 = vst [vmem:[#allocation3 + $0xc0] sm:$0xff] %v376
  %524 = vst [vmem:[#allocation3 + $0xc8] sm:$0xff] %v378
  %525 = vst [vmem:[#allocation3 + $0xd0] sm:$0xff] %v489
  %526 = vst [vmem:[#allocation3 + $0xd8] sm:$0xff] %v491
  %527 = vst [vmem:[#allocation3 + $0xe0] sm:$0xff] %v382
  %528 = vst [vmem:[#allocation3 + $0xe8] sm:$0xff] %v384
  %529 = vst [vmem:[#allocation3 + $0xf0] sm:$0xff] %v495
  %530 = vst [vmem:[#allocation3 + $0xf8] sm:$0xff] %v497
  %v531 = vld [vmem:[%s4] sm:$0xff]
  %v532 = vld [vmem:[%s4 + $0x8] sm:$0xff]
  %v533 = vld [vmem:[%s4 + $0x10] sm:$0xff]
  %v534 = vld [vmem:[%s4 + $0x18] sm:$0xff]
  %v535 = vld [vmem:[%s4 + $0x20] sm:$0xff]
  %v536 = vld [vmem:[%s4 + $0x28] sm:$0xff]
  %v537 = vld [vmem:[%s4 + $0x30] sm:$0xff]
  %v538 = vld [vmem:[%s4 + $0x38] sm:$0xff]
  %v539 = vld [vmem:[%s4 + $0x40] sm:$0xff]
  %v540 = vld [vmem:[%s4 + $0x48] sm:$0xff]
  %v541 = vld [vmem:[%s4 + $0x50] sm:$0xff]
  %v542 = vld [vmem:[%s4 + $0x58] sm:$0xff]
  %v543 = vld [vmem:[%s4 + $0x60] sm:$0xff]
  %v544 = vld [vmem:[%s4 + $0x68] sm:$0xff]
  %v545 = vld [vmem:[%s4 + $0x70] sm:$0xff]
  %v546 = vld [vmem:[%s4 + $0x78] sm:$0xff]
  %v547 = vld [vmem:[%s4 + $0x80] sm:$0xff]
  %v548 = vld [vmem:[%s4 + $0x88] sm:$0xff]
  %v549 = vld [vmem:[%s4 + $0x90] sm:$0xff]
  %v550 = vld [vmem:[%s4 + $0x98] sm:$0xff]
  %v551 = vld [vmem:[%s4 + $0xa0] sm:$0xff]
  %v552 = vld [vmem:[%s4 + $0xa8] sm:$0xff]
  %v553 = vld [vmem:[%s4 + $0xb0] sm:$0xff]
  %v554 = vld [vmem:[%s4 + $0xb8] sm:$0xff]
  %v555 = vld [vmem:[%s4 + $0xc0] sm:$0xff]
  %v556 = vld [vmem:[%s4 + $0xc8] sm:$0xff]
  %v557 = vld [vmem:[%s4 + $0xd0] sm:$0xff]
  %v558 = vld [vmem:[%s4 + $0xd8] sm:$0xff]
  %v559 = vld [vmem:[%s4 + $0xe0] sm:$0xff]
  %v560 = vld [vmem:[%s4 + $0xe8] sm:$0xff]
  %v561 = vld [vmem:[%s4 + $0xf0] sm:$0xff]
  %v562 = vld [vmem:[%s4 + $0xf8] sm:$0xff]
  %v563 = vld [vmem:[%s4 + $0x100] sm:$0xff]
  %v564 = vld [vmem:[%s4 + $0x108] sm:$0xff]
  %v565 = vld [vmem:[%s4 + $0x110] sm:$0xff]
  %v566 = vld [vmem:[%s4 + $0x118] sm:$0xff]
  %v567 = vld [vmem:[%s4 + $0x120] sm:$0xff]
  %v568 = vld [vmem:[%s4 + $0x128] sm:$0xff]
  %v569 = vld [vmem:[%s4 + $0x130] sm:$0xff]
  %v570 = vld [vmem:[%s4 + $0x138] sm:$0xff]
  %v571 = vld [vmem:[%s4 + $0x140] sm:$0xff]
  %v572 = vld [vmem:[%s4 + $0x148] sm:$0xff]
  %v573 = vld [vmem:[%s4 + $0x150] sm:$0xff]
  %v574 = vld [vmem:[%s4 + $0x158] sm:$0xff]
  %v575 = vld [vmem:[%s4 + $0x160] sm:$0xff]
  %v576 = vld [vmem:[%s4 + $0x168] sm:$0xff]
  %v577 = vld [vmem:[%s4 + $0x170] sm:$0xff]
  %v578 = vld [vmem:[%s4 + $0x178] sm:$0xff]
  %v579 = vld [vmem:[%s4 + $0x180] sm:$0xff]
  %v580 = vld [vmem:[%s4 + $0x188] sm:$0xff]
  %v581 = vld [vmem:[%s4 + $0x190] sm:$0xff]
  %v582 = vld [vmem:[%s4 + $0x198] sm:$0xff]
  %v583 = vld [vmem:[%s4 + $0x1a0] sm:$0xff]
  %v584 = vld [vmem:[%s4 + $0x1a8] sm:$0xff]
  %v585 = vld [vmem:[%s4 + $0x1b0] sm:$0xff]
  %v586 = vld [vmem:[%s4 + $0x1b8] sm:$0xff]
  %v587 = vld [vmem:[%s4 + $0x1c0] sm:$0xff]
  %v588 = vld [vmem:[%s4 + $0x1c8] sm:$0xff]
  %v589 = vld [vmem:[%s4 + $0x1d0] sm:$0xff]
  %v590 = vld [vmem:[%s4 + $0x1d8] sm:$0xff]
  %v591 = vld [vmem:[%s4 + $0x1e0] sm:$0xff]
  %v592 = vld [vmem:[%s4 + $0x1e8] sm:$0xff]
  %v593 = vld [vmem:[%s4 + $0x1f0] sm:$0xff]
  %v594 = vld [vmem:[%s4 + $0x1f8] sm:$0xff]
  %v595 = vld [vmem:[#allocation3] sm:$0xff]
  %v596 = vld [vmem:[#allocation3 + $0x8] sm:$0xff]
  %v597 = vld [vmem:[#allocation3 + $0x10] sm:$0xff]
  %v598 = vld [vmem:[#allocation3 + $0x18] sm:$0xff]
  %599 = vmatprep.subr.mxu0 %v592
  %600 = vmatpush1.msra.mxu0 %v591
  %601 = vmatprep.subr.mxu0 %v588
  %602 = vmatpush1.msra.mxu0 %v587
  %603 = vmatprep.subr.mxu0 %v584
  %604 = vmatpush1.msra.mxu0 %v583
  %605 = vmatprep.subr.mxu0 %v580
  %606 = vmatpush1.msra.mxu0 %v579
  %607 = vmatprep.subr.mxu0 %v576
  %608 = vmatpush1.msra.mxu0 %v575
  %609 = vmatprep.subr.mxu0 %v572
  %610 = vmatpush1.msra.mxu0 %v571
  %611 = vmatprep.subr.mxu0 %v568
  %612 = vmatpush1.msra.mxu0 %v567
  %613 = vmatprep.subr.mxu0 %v564
  %614 = vmatpush1.msra.mxu0 %v563
  %615 = vmatprep.subr.mxu0 %v560
  %616 = vmatpush1.msra.mxu0 %v559
  %617 = vmatprep.subr.mxu0 %v556
  %618 = vmatpush1.msra.mxu0 %v555
  %619 = vmatprep.subr.mxu0 %v552
  %620 = vmatpush1.msra.mxu0 %v551
  %621 = vmatprep.subr.mxu0 %v548
  %622 = vmatpush1.msra.mxu0 %v547
  %623 = vmatprep.subr.mxu0 %v544
  %624 = vmatpush1.msra.mxu0 %v543
  %625 = vmatprep.subr.mxu0 %v540
  %626 = vmatpush1.msra.mxu0 %v539
  %627 = vmatprep.subr.mxu0 %v536
  %628 = vmatpush1.msra.mxu0 %v535
  %629 = vmatprep.subr.mxu0 %v532
  %630 = vmatpush1.msra.mxu0 %v531
  %631 = vmatprep.subr.mxu0 0.0
  %632 = vmatpush2.msra.mxu0 0.0
  %633 = vmatprep.subr.mxu0 0.0
  %634 = vmatpush2.msra.mxu0 0.0
  %635 = vmatprep.subr.mxu0 0.0
  %636 = vmatpush2.msra.mxu0 0.0
  %637 = vmatprep.subr.mxu0 0.0
  %638 = vmatpush2.msra.mxu0 0.0
  %639 = vmatprep.subr.mxu0 0.0
  %640 = vmatpush2.msra.mxu0 0.0
  %641 = vmatprep.subr.mxu0 0.0
  %642 = vmatpush2.msra.mxu0 0.0
  %643 = vmatprep.subr.mxu0 0.0
  %644 = vmatpush2.msra.mxu0 0.0
  %645 = vmatprep.subr.mxu0 0.0
  %646 = vmatpush2.msra.mxu0 0.0
  %647 = vmatprep.subr.mxu0 0.0
  %648 = vmatpush2.msra.mxu0 0.0
  %649 = vmatprep.subr.mxu0 0.0
  %650 = vmatpush2.msra.mxu0 0.0
  %651 = vmatprep.subr.mxu0 0.0
  %652 = vmatpush2.msra.mxu0 0.0
  %653 = vmatprep.subr.mxu0 0.0
  %654 = vmatpush2.msra.mxu0 0.0
  %655 = vmatprep.subr.mxu0 0.0
  %656 = vmatpush2.msra.mxu0 0.0
  %657 = vmatprep.subr.mxu0 0.0
  %658 = vmatpush2.msra.mxu0 0.0
  %659 = vmatprep.subr.mxu0 0.0
  %660 = vmatpush2.msra.mxu0 0.0
  %661 = vmatprep.subr.mxu0 0.0
  %662 = vmatpush2.msra.mxu0 0.0
  %663 = vmatprep.mubr.f32.mxu0 0.0
  %664 = vmatmul.mubr.f32.gmra.mxu0 0.0
  %v665 = vpop.f32.mrf.mxu0
  %v666 = vadd.f32 0.0, %v665
  %v667 = vpop.f32.mrf.mxu0
  %v668 = vadd.f32 0.0, %v667
  %669 = vdwg.mxu0
  %670 = vmatprep.subr.mxu0 %v594
  %671 = vmatpush1.msra.mxu0 %v593
  %672 = vmatprep.subr.mxu0 %v590
  %673 = vmatpush1.msra.mxu0 %v589
  %674 = vmatprep.subr.mxu0 %v586
  %675 = vmatpush1.msra.mxu0 %v585
  %676 = vmatprep.subr.mxu0 %v582
  %677 = vmatpush1.msra.mxu0 %v581
  %678 = vmatprep.subr.mxu0 %v578
  %679 = vmatpush1.msra.mxu0 %v577
  %680 = vmatprep.subr.mxu0 %v574
  %681 = vmatpush1.msra.mxu0 %v573
  %682 = vmatprep.subr.mxu0 %v570
  %683 = vmatpush1.msra.mxu0 %v569
  %684 = vmatprep.subr.mxu0 %v566
  %685 = vmatpush1.msra.mxu0 %v565
  %686 = vmatprep.subr.mxu0 %v562
  %687 = vmatpush1.msra.mxu0 %v561
  %688 = vmatprep.subr.mxu0 %v558
  %689 = vmatpush1.msra.mxu0 %v557
  %690 = vmatprep.subr.mxu0 %v554
  %691 = vmatpush1.msra.mxu0 %v553
  %692 = vmatprep.subr.mxu0 %v550
  %693 = vmatpush1.msra.mxu0 %v549
  %694 = vmatprep.subr.mxu0 %v546
  %695 = vmatpush1.msra.mxu0 %v545
  %696 = vmatprep.subr.mxu0 %v542
  %697 = vmatpush1.msra.mxu0 %v541
  %698 = vmatprep.subr.mxu0 %v538
  %699 = vmatpush1.msra.mxu0 %v537
  %700 = vmatprep.subr.mxu0 %v534
  %701 = vmatpush1.msra.mxu0 %v533
  %702 = vmatprep.subr.mxu0 0.0
  %703 = vmatpush2.msra.mxu0 0.0
  %704 = vmatprep.subr.mxu0 0.0
  %705 = vmatpush2.msra.mxu0 0.0
  %706 = vmatprep.subr.mxu0 0.0
  %707 = vmatpush2.msra.mxu0 0.0
  %708 = vmatprep.subr.mxu0 0.0
  %709 = vmatpush2.msra.mxu0 0.0
  %710 = vmatprep.subr.mxu0 0.0
  %711 = vmatpush2.msra.mxu0 0.0
  %712 = vmatprep.subr.mxu0 0.0
  %713 = vmatpush2.msra.mxu0 0.0
  %714 = vmatprep.subr.mxu0 0.0
  %715 = vmatpush2.msra.mxu0 0.0
  %716 = vmatprep.subr.mxu0 0.0
  %717 = vmatpush2.msra.mxu0 0.0
  %718 = vmatprep.subr.mxu0 0.0
  %719 = vmatpush2.msra.mxu0 0.0
  %720 = vmatprep.subr.mxu0 0.0
  %721 = vmatpush2.msra.mxu0 0.0
  %722 = vmatprep.subr.mxu0 0.0
  %723 = vmatpush2.msra.mxu0 0.0
  %724 = vmatprep.subr.mxu0 0.0
  %725 = vmatpush2.msra.mxu0 0.0
  %726 = vmatprep.subr.mxu0 0.0
  %727 = vmatpush2.msra.mxu0 0.0
  %728 = vmatprep.subr.mxu0 0.0
  %729 = vmatpush2.msra.mxu0 0.0
  %730 = vmatprep.subr.mxu0 0.0
  %731 = vmatpush2.msra.mxu0 0.0
  %732 = vmatprep.subr.mxu0 0.0
  %733 = vmatpush2.msra.mxu0 0.0
  %734 = vmatprep.mubr.f32.mxu0 0.0
  %735 = vmatmul.mubr.f32.gmra.mxu0 0.0
  %v736 = vpop.f32.mrf.mxu0
  %v737 = vadd.f32 0.0, %v736
  %v738 = vpop.f32.mrf.mxu0
  %v739 = vadd.f32 0.0, %v738
  %740 = vdwg.mxu0
  %v741 = vadd.f32 %v595, %v666
  %v742 = vadd.f32 %v596, %v668
  %v743 = vadd.f32 %v597, %v737
  %v744 = vadd.f32 %v598, %v739
  %v745 = vxor.u32 %v741, 2147483648
  %v746 = vxor.u32 %v742, 2147483648
  %v747 = vxor.u32 %v743, 2147483648
  %v748 = vmul.f32 %v745, 1.442695
  %v749 = vpow.pop %v748
  %v750 = vmul.f32 %v746, 1.442695
  %v751 = vpow.pop %v750
  %v752 = vmul.f32 %v747, 1.442695
  %v753 = vpow.pop %v752
  %v754 = vadd.f32 %v749, 1.0
  %v755 = vadd.f32 %v751, 1.0
  %v756 = vadd.f32 %v753, 1.0
  %v757 = vrcp.pop %v754
  %v758 = vmul.f32 1.0, %v757
  %v759 = vrcp.pop %v755
  %v760 = vmul.f32 1.0, %v759
  %v761 = vrcp.pop %v756
  %v762 = vmul.f32 1.0, %v761
  %v763 = vtanh.pop %v744
  %v764 = vmul.f32 %v760, 0.0
  %v765 = vmul.f32 %v758, %v763
  %v766 = vadd.f32 %v764, %v765
  %v767 = vtanh.pop %v766
  %v768 = vmul.f32 %v762, %v767
  %769 = vst [vmem:[#allocation2] sm:$0xff] %v768
  %s770 = scalar_lea.vmem [#allocation3], 32
  %v771 = vld [vmem:[%s770] sm:$0xff]
  %v772 = vld [vmem:[%s770 + $0x8] sm:$0xff]
  %v773 = vld [vmem:[%s770 + $0x10] sm:$0xff]
  %v774 = vld [vmem:[%s770 + $0x18] sm:$0xff]
  %775 = vmatprep.subr.mxu0 %v592
  %776 = vmatpush1.msra.mxu0 %v591
  %777 = vmatprep.subr.mxu0 %v588
  %778 = vmatpush1.msra.mxu0 %v587
  %779 = vmatprep.subr.mxu0 %v584
  %780 = vmatpush1.msra.mxu0 %v583
  %781 = vmatprep.subr.mxu0 %v580
  %782 = vmatpush1.msra.mxu0 %v579
  %783 = vmatprep.subr.mxu0 %v576
  %784 = vmatpush1.msra.mxu0 %v575
  %785 = vmatprep.subr.mxu0 %v572
  %786 = vmatpush1.msra.mxu0 %v571
  %787 = vmatprep.subr.mxu0 %v568
  %788 = vmatpush1.msra.mxu0 %v567
  %789 = vmatprep.subr.mxu0 %v564
  %790 = vmatpush1.msra.mxu0 %v563
  %791 = vmatprep.subr.mxu0 %v560
  %792 = vmatpush1.msra.mxu0 %v559
  %793 = vmatprep.subr.mxu0 %v556
  %794 = vmatpush1.msra.mxu0 %v555
  %795 = vmatprep.subr.mxu0 %v552
  %796 = vmatpush1.msra.mxu0 %v551
  %797 = vmatprep.subr.mxu0 %v548
  %798 = vmatpush1.msra.mxu0 %v547
  %799 = vmatprep.subr.mxu0 %v544
  %800 = vmatpush1.msra.mxu0 %v543
  %801 = vmatprep.subr.mxu0 %v540
  %802 = vmatpush1.msra.mxu0 %v539
  %803 = vmatprep.subr.mxu0 %v536
  %804 = vmatpush1.msra.mxu0 %v535
  %805 = vmatprep.subr.mxu0 %v532
  %806 = vmatpush1.msra.mxu0 %v531
  %807 = vmatprep.subr.mxu0 0.0
  %808 = vmatpush2.msra.mxu0 0.0
  %809 = vmatprep.subr.mxu0 0.0
  %810 = vmatpush2.msra.mxu0 0.0
  %811 = vmatprep.subr.mxu0 0.0
  %812 = vmatpush2.msra.mxu0 0.0
  %813 = vmatprep.subr.mxu0 0.0
  %814 = vmatpush2.msra.mxu0 0.0
  %815 = vmatprep.subr.mxu0 0.0
  %816 = vmatpush2.msra.mxu0 0.0
  %817 = vmatprep.subr.mxu0 0.0
  %818 = vmatpush2.msra.mxu0 0.0
  %819 = vmatprep.subr.mxu0 0.0
  %820 = vmatpush2.msra.mxu0 0.0
  %821 = vmatprep.subr.mxu0 0.0
  %822 = vmatpush2.msra.mxu0 0.0
  %823 = vmatprep.subr.mxu0 0.0
  %824 = vmatpush2.msra.mxu0 0.0
  %825 = vmatprep.subr.mxu0 0.0
  %826 = vmatpush2.msra.mxu0 0.0
  %827 = vmatprep.subr.mxu0 0.0
  %828 = vmatpush2.msra.mxu0 0.0
  %829 = vmatprep.subr.mxu0 0.0
  %830 = vmatpush2.msra.mxu0 0.0
  %831 = vmatprep.subr.mxu0 0.0
  %832 = vmatpush2.msra.mxu0 0.0
  %833 = vmatprep.subr.mxu0 0.0
  %834 = vmatpush2.msra.mxu0 0.0
  %835 = vmatprep.subr.mxu0 0.0
  %836 = vmatpush2.msra.mxu0 0.0
  %837 = vmatprep.subr.mxu0 0.0
  %838 = vmatpush2.msra.mxu0 0.0
  %839 = vmatprep.mubr.f32.mxu0 0.0
  %840 = vmatmul.mubr.f32.gmra.mxu0 %v768
  %v841 = vpop.f32.mrf.mxu0
  %v842 = vadd.f32 0.0, %v841
  %v843 = vpop.f32.mrf.mxu0
  %v844 = vadd.f32 0.0, %v843
  %845 = vdwg.mxu0
  %846 = vmatprep.subr.mxu0 %v594
  %847 = vmatpush1.msra.mxu0 %v593
  %848 = vmatprep.subr.mxu0 %v590
  %849 = vmatpush1.msra.mxu0 %v589
  %850 = vmatprep.subr.mxu0 %v586
  %851 = vmatpush1.msra.mxu0 %v585
  %852 = vmatprep.subr.mxu0 %v582
  %853 = vmatpush1.msra.mxu0 %v581
  %854 = vmatprep.subr.mxu0 %v578
  %855 = vmatpush1.msra.mxu0 %v577
  %856 = vmatprep.subr.mxu0 %v574
  %857 = vmatpush1.msra.mxu0 %v573
  %858 = vmatprep.subr.mxu0 %v570
  %859 = vmatpush1.msra.mxu0 %v569
  %860 = vmatprep.subr.mxu0 %v566
  %861 = vmatpush1.msra.mxu0 %v565
  %862 = vmatprep.subr.mxu0 %v562
  %863 = vmatpush1.msra.mxu0 %v561
  %864 = vmatprep.subr.mxu0 %v558
  %865 = vmatpush1.msra.mxu0 %v557
  %866 = vmatprep.subr.mxu0 %v554
  %867 = vmatpush1.msra.mxu0 %v553
  %868 = vmatprep.subr.mxu0 %v550
  %869 = vmatpush1.msra.mxu0 %v549
  %870 = vmatprep.subr.mxu0 %v546
  %871 = vmatpush1.msra.mxu0 %v545
  %872 = vmatprep.subr.mxu0 %v542
  %873 = vmatpush1.msra.mxu0 %v541
  %874 = vmatprep.subr.mxu0 %v538
  %875 = vmatpush1.msra.mxu0 %v537
  %876 = vmatprep.subr.mxu0 %v534
  %877 = vmatpush1.msra.mxu0 %v533
  %878 = vmatprep.subr.mxu0 0.0
  %879 = vmatpush2.msra.mxu0 0.0
  %880 = vmatprep.subr.mxu0 0.0
  %881 = vmatpush2.msra.mxu0 0.0
  %882 = vmatprep.subr.mxu0 0.0
  %883 = vmatpush2.msra.mxu0 0.0
  %884 = vmatprep.subr.mxu0 0.0
  %885 = vmatpush2.msra.mxu0 0.0
  %886 = vmatprep.subr.mxu0 0.0
  %887 = vmatpush2.msra.mxu0 0.0
  %888 = vmatprep.subr.mxu0 0.0
  %889 = vmatpush2.msra.mxu0 0.0
  %890 = vmatprep.subr.mxu0 0.0
  %891 = vmatpush2.msra.mxu0 0.0
  %892 = vmatprep.subr.mxu0 0.0
  %893 = vmatpush2.msra.mxu0 0.0
  %894 = vmatprep.subr.mxu0 0.0
  %895 = vmatpush2.msra.mxu0 0.0
  %896 = vmatprep.subr.mxu0 0.0
  %897 = vmatpush2.msra.mxu0 0.0
  %898 = vmatprep.subr.mxu0 0.0
  %899 = vmatpush2.msra.mxu0 0.0
  %900 = vmatprep.subr.mxu0 0.0
  %901 = vmatpush2.msra.mxu0 0.0
  %902 = vmatprep.subr.mxu0 0.0
  %903 = vmatpush2.msra.mxu0 0.0
  %904 = vmatprep.subr.mxu0 0.0
  %905 = vmatpush2.msra.mxu0 0.0
  %906 = vmatprep.subr.mxu0 0.0
  %907 = vmatpush2.msra.mxu0 0.0
  %908 = vmatprep.subr.mxu0 0.0
  %909 = vmatpush2.msra.mxu0 0.0
  %910 = vmatprep.mubr.f32.mxu0 0.0
  %911 = vmatmul.mubr.f32.gmra.mxu0 %v768
  %v912 = vpop.f32.mrf.mxu0
  %v913 = vadd.f32 0.0, %v912
  %v914 = vpop.f32.mrf.mxu0
  %v915 = vadd.f32 0.0, %v914
  %916 = vdwg.mxu0
  %v917 = vadd.f32 %v771, %v842
  %v918 = vadd.f32 %v772, %v844
  %v919 = vadd.f32 %v773, %v913
  %v920 = vadd.f32 %v774, %v915
  %v921 = vxor.u32 %v917, 2147483648
  %v922 = vxor.u32 %v918, 2147483648
  %v923 = vxor.u32 %v919, 2147483648
  %v924 = vmul.f32 %v921, 1.442695
  %v925 = vpow.pop %v924
  %v926 = vmul.f32 %v922, 1.442695
  %v927 = vpow.pop %v926
  %v928 = vmul.f32 %v923, 1.442695
  %v929 = vpow.pop %v928
  %v930 = vadd.f32 %v925, 1.0
  %v931 = vadd.f32 %v927, 1.0
  %v932 = vadd.f32 %v929, 1.0
  %v933 = vrcp.pop %v930
  %v934 = vmul.f32 1.0, %v933
  %v935 = vrcp.pop %v931
  %v936 = vmul.f32 1.0, %v935
  %v937 = vrcp.pop %v932
  %v938 = vmul.f32 1.0, %v937
  %v939 = vtanh.pop %v920
  %v940 = vmul.f32 %v936, %v766
  %v941 = vmul.f32 %v934, %v939
  %v942 = vadd.f32 %v940, %v941
  %v943 = vtanh.pop %v942
  %v944 = vmul.f32 %v938, %v943
  %s945 = scalar_lea.vmem [#allocation2], 8
  %946 = vst [vmem:[%s945] sm:$0xff] %v944
  %s947 = scalar_lea.vmem [#allocation3], 64
  %v948 = vld [vmem:[%s947] sm:$0xff]
  %v949 = vld [vmem:[%s947 + $0x8] sm:$0xff]
  %v950 = vld [vmem:[%s947 + $0x10] sm:$0xff]
  %v951 = vld [vmem:[%s947 + $0x18] sm:$0xff]
  %952 = vmatprep.subr.mxu0 %v592
  %953 = vmatpush1.msra.mxu0 %v591
  %954 = vmatprep.subr.mxu0 %v588
  %955 = vmatpush1.msra.mxu0 %v587
  %956 = vmatprep.subr.mxu0 %v584
  %957 = vmatpush1.msra.mxu0 %v583
  %958 = vmatprep.subr.mxu0 %v580
  %959 = vmatpush1.msra.mxu0 %v579
  %960 = vmatprep.subr.mxu0 %v576
  %961 = vmatpush1.msra.mxu0 %v575
  %962 = vmatprep.subr.mxu0 %v572
  %963 = vmatpush1.msra.mxu0 %v571
  %964 = vmatprep.subr.mxu0 %v568
  %965 = vmatpush1.msra.mxu0 %v567
  %966 = vmatprep.subr.mxu0 %v564
  %967 = vmatpush1.msra.mxu0 %v563
  %968 = vmatprep.subr.mxu0 %v560
  %969 = vmatpush1.msra.mxu0 %v559
  %970 = vmatprep.subr.mxu0 %v556
  %971 = vmatpush1.msra.mxu0 %v555
  %972 = vmatprep.subr.mxu0 %v552
  %973 = vmatpush1.msra.mxu0 %v551
  %974 = vmatprep.subr.mxu0 %v548
  %975 = vmatpush1.msra.mxu0 %v547
  %976 = vmatprep.subr.mxu0 %v544
  %977 = vmatpush1.msra.mxu0 %v543
  %978 = vmatprep.subr.mxu0 %v540
  %979 = vmatpush1.msra.mxu0 %v539
  %980 = vmatprep.subr.mxu0 %v536
  %981 = vmatpush1.msra.mxu0 %v535
  %982 = vmatprep.subr.mxu0 %v532
  %983 = vmatpush1.msra.mxu0 %v531
  %984 = vmatprep.subr.mxu0 0.0
  %985 = vmatpush2.msra.mxu0 0.0
  %986 = vmatprep.subr.mxu0 0.0
  %987 = vmatpush2.msra.mxu0 0.0
  %988 = vmatprep.subr.mxu0 0.0
  %989 = vmatpush2.msra.mxu0 0.0
  %990 = vmatprep.subr.mxu0 0.0
  %991 = vmatpush2.msra.mxu0 0.0
  %992 = vmatprep.subr.mxu0 0.0
  %993 = vmatpush2.msra.mxu0 0.0
  %994 = vmatprep.subr.mxu0 0.0
  %995 = vmatpush2.msra.mxu0 0.0
  %996 = vmatprep.subr.mxu0 0.0
  %997 = vmatpush2.msra.mxu0 0.0
  %998 = vmatprep.subr.mxu0 0.0
  %999 = vmatpush2.msra.mxu0 0.0
  %1000 = vmatprep.subr.mxu0 0.0
  %1001 = vmatpush2.msra.mxu0 0.0
  %1002 = vmatprep.subr.mxu0 0.0
  %1003 = vmatpush2.msra.mxu0 0.0
  %1004 = vmatprep.subr.mxu0 0.0
  %1005 = vmatpush2.msra.mxu0 0.0
  %1006 = vmatprep.subr.mxu0 0.0
  %1007 = vmatpush2.msra.mxu0 0.0
  %1008 = vmatprep.subr.mxu0 0.0
  %1009 = vmatpush2.msra.mxu0 0.0
  %1010 = vmatprep.subr.mxu0 0.0
  %1011 = vmatpush2.msra.mxu0 0.0
  %1012 = vmatprep.subr.mxu0 0.0
  %1013 = vmatpush2.msra.mxu0 0.0
  %1014 = vmatprep.subr.mxu0 0.0
  %1015 = vmatpush2.msra.mxu0 0.0
  %1016 = vmatprep.mubr.f32.mxu0 0.0
  %1017 = vmatmul.mubr.f32.gmra.mxu0 %v944
  %v1018 = vpop.f32.mrf.mxu0
  %v1019 = vadd.f32 0.0, %v1018
  %v1020 = vpop.f32.mrf.mxu0
  %v1021 = vadd.f32 0.0, %v1020
  %1022 = vdwg.mxu0
  %1023 = vmatprep.subr.mxu0 %v594
  %1024 = vmatpush1.msra.mxu0 %v593
  %1025 = vmatprep.subr.mxu0 %v590
  %1026 = vmatpush1.msra.mxu0 %v589
  %1027 = vmatprep.subr.mxu0 %v586
  %1028 = vmatpush1.msra.mxu0 %v585
  %1029 = vmatprep.subr.mxu0 %v582
  %1030 = vmatpush1.msra.mxu0 %v581
  %1031 = vmatprep.subr.mxu0 %v578
  %1032 = vmatpush1.msra.mxu0 %v577
  %1033 = vmatprep.subr.mxu0 %v574
  %1034 = vmatpush1.msra.mxu0 %v573
  %1035 = vmatprep.subr.mxu0 %v570
  %1036 = vmatpush1.msra.mxu0 %v569
  %1037 = vmatprep.subr.mxu0 %v566
  %1038 = vmatpush1.msra.mxu0 %v565
  %1039 = vmatprep.subr.mxu0 %v562
  %1040 = vmatpush1.msra.mxu0 %v561
  %1041 = vmatprep.subr.mxu0 %v558
  %1042 = vmatpush1.msra.mxu0 %v557
  %1043 = vmatprep.subr.mxu0 %v554
  %1044 = vmatpush1.msra.mxu0 %v553
  %1045 = vmatprep.subr.mxu0 %v550
  %1046 = vmatpush1.msra.mxu0 %v549
  %1047 = vmatprep.subr.mxu0 %v546
  %1048 = vmatpush1.msra.mxu0 %v545
  %1049 = vmatprep.subr.mxu0 %v542
  %1050 = vmatpush1.msra.mxu0 %v541
  %1051 = vmatprep.subr.mxu0 %v538
  %1052 = vmatpush1.msra.mxu0 %v537
  %1053 = vmatprep.subr.mxu0 %v534
  %1054 = vmatpush1.msra.mxu0 %v533
  %1055 = vmatprep.subr.mxu0 0.0
  %1056 = vmatpush2.msra.mxu0 0.0
  %1057 = vmatprep.subr.mxu0 0.0
  %1058 = vmatpush2.msra.mxu0 0.0
  %1059 = vmatprep.subr.mxu0 0.0
  %1060 = vmatpush2.msra.mxu0 0.0
  %1061 = vmatprep.subr.mxu0 0.0
  %1062 = vmatpush2.msra.mxu0 0.0
  %1063 = vmatprep.subr.mxu0 0.0
  %1064 = vmatpush2.msra.mxu0 0.0
  %1065 = vmatprep.subr.mxu0 0.0
  %1066 = vmatpush2.msra.mxu0 0.0
  %1067 = vmatprep.subr.mxu0 0.0
  %1068 = vmatpush2.msra.mxu0 0.0
  %1069 = vmatprep.subr.mxu0 0.0
  %1070 = vmatpush2.msra.mxu0 0.0
  %1071 = vmatprep.subr.mxu0 0.0
  %1072 = vmatpush2.msra.mxu0 0.0
  %1073 = vmatprep.subr.mxu0 0.0
  %1074 = vmatpush2.msra.mxu0 0.0
  %1075 = vmatprep.subr.mxu0 0.0
  %1076 = vmatpush2.msra.mxu0 0.0
  %1077 = vmatprep.subr.mxu0 0.0
  %1078 = vmatpush2.msra.mxu0 0.0
  %1079 = vmatprep.subr.mxu0 0.0
  %1080 = vmatpush2.msra.mxu0 0.0
  %1081 = vmatprep.subr.mxu0 0.0
  %1082 = vmatpush2.msra.mxu0 0.0
  %1083 = vmatprep.subr.mxu0 0.0
  %1084 = vmatpush2.msra.mxu0 0.0
  %1085 = vmatprep.subr.mxu0 0.0
  %1086 = vmatpush2.msra.mxu0 0.0
  %1087 = vmatprep.mubr.f32.mxu0 0.0
  %1088 = vmatmul.mubr.f32.gmra.mxu0 %v944
  %v1089 = vpop.f32.mrf.mxu0
  %v1090 = vadd.f32 0.0, %v1089
  %v1091 = vpop.f32.mrf.mxu0
  %v1092 = vadd.f32 0.0, %v1091
  %1093 = vdwg.mxu0
  %v1094 = vadd.f32 %v948, %v1019
  %v1095 = vadd.f32 %v949, %v1021
  %v1096 = vadd.f32 %v950, %v1090
  %v1097 = vadd.f32 %v951, %v1092
  %v1098 = vxor.u32 %v1094, 2147483648
  %v1099 = vxor.u32 %v1095, 2147483648
  %v1100 = vxor.u32 %v1096, 2147483648
  %v1101 = vmul.f32 %v1098, 1.442695
  %v1102 = vpow.pop %v1101
  %v1103 = vmul.f32 %v1099, 1.442695
  %v1104 = vpow.pop %v1103
  %v1105 = vmul.f32 %v1100, 1.442695
  %v1106 = vpow.pop %v1105
  %v1107 = vadd.f32 %v1102, 1.0
  %v1108 = vadd.f32 %v1104, 1.0
  %v1109 = vadd.f32 %v1106, 1.0
  %v1110 = vrcp.pop %v1107
  %v1111 = vmul.f32 1.0, %v1110
  %v1112 = vrcp.pop %v1108
  %v1113 = vmul.f32 1.0, %v1112
  %v1114 = vrcp.pop %v1109
  %v1115 = vmul.f32 1.0, %v1114
  %v1116 = vtanh.pop %v1097
  %v1117 = vmul.f32 %v1113, %v942
  %v1118 = vmul.f32 %v1111, %v1116
  %v1119 = vadd.f32 %v1117, %v1118
  %v1120 = vtanh.pop %v1119
  %v1121 = vmul.f32 %v1115, %v1120
  %s1122 = scalar_lea.vmem [#allocation2], 16
  %1123 = vst [vmem:[%s1122] sm:$0xff] %v1121
  %s1124 = scalar_lea.vmem [#allocation3], 96
  %v1125 = vld [vmem:[%s1124] sm:$0xff]
  %v1126 = vld [vmem:[%s1124 + $0x8] sm:$0xff]
  %v1127 = vld [vmem:[%s1124 + $0x10] sm:$0xff]
  %v1128 = vld [vmem:[%s1124 + $0x18] sm:$0xff]
  %1129 = vmatprep.subr.mxu0 %v592
  %1130 = vmatpush1.msra.mxu0 %v591
  %1131 = vmatprep.subr.mxu0 %v588
  %1132 = vmatpush1.msra.mxu0 %v587
  %1133 = vmatprep.subr.mxu0 %v584
  %1134 = vmatpush1.msra.mxu0 %v583
  %1135 = vmatprep.subr.mxu0 %v580
  %1136 = vmatpush1.msra.mxu0 %v579
  %1137 = vmatprep.subr.mxu0 %v576
  %1138 = vmatpush1.msra.mxu0 %v575
  %1139 = vmatprep.subr.mxu0 %v572
  %1140 = vmatpush1.msra.mxu0 %v571
  %1141 = vmatprep.subr.mxu0 %v568
  %1142 = vmatpush1.msra.mxu0 %v567
  %1143 = vmatprep.subr.mxu0 %v564
  %1144 = vmatpush1.msra.mxu0 %v563
  %1145 = vmatprep.subr.mxu0 %v560
  %1146 = vmatpush1.msra.mxu0 %v559
  %1147 = vmatprep.subr.mxu0 %v556
  %1148 = vmatpush1.msra.mxu0 %v555
  %1149 = vmatprep.subr.mxu0 %v552
  %1150 = vmatpush1.msra.mxu0 %v551
  %1151 = vmatprep.subr.mxu0 %v548
  %1152 = vmatpush1.msra.mxu0 %v547
  %1153 = vmatprep.subr.mxu0 %v544
  %1154 = vmatpush1.msra.mxu0 %v543
  %1155 = vmatprep.subr.mxu0 %v540
  %1156 = vmatpush1.msra.mxu0 %v539
  %1157 = vmatprep.subr.mxu0 %v536
  %1158 = vmatpush1.msra.mxu0 %v535
  %1159 = vmatprep.subr.mxu0 %v532
  %1160 = vmatpush1.msra.mxu0 %v531
  %1161 = vmatprep.subr.mxu0 0.0
  %1162 = vmatpush2.msra.mxu0 0.0
  %1163 = vmatprep.subr.mxu0 0.0
  %1164 = vmatpush2.msra.mxu0 0.0
  %1165 = vmatprep.subr.mxu0 0.0
  %1166 = vmatpush2.msra.mxu0 0.0
  %1167 = vmatprep.subr.mxu0 0.0
  %1168 = vmatpush2.msra.mxu0 0.0
  %1169 = vmatprep.subr.mxu0 0.0
  %1170 = vmatpush2.msra.mxu0 0.0
  %1171 = vmatprep.subr.mxu0 0.0
  %1172 = vmatpush2.msra.mxu0 0.0
  %1173 = vmatprep.subr.mxu0 0.0
  %1174 = vmatpush2.msra.mxu0 0.0
  %1175 = vmatprep.subr.mxu0 0.0
  %1176 = vmatpush2.msra.mxu0 0.0
  %1177 = vmatprep.subr.mxu0 0.0
  %1178 = vmatpush2.msra.mxu0 0.0
  %1179 = vmatprep.subr.mxu0 0.0
  %1180 = vmatpush2.msra.mxu0 0.0
  %1181 = vmatprep.subr.mxu0 0.0
  %1182 = vmatpush2.msra.mxu0 0.0
  %1183 = vmatprep.subr.mxu0 0.0
  %1184 = vmatpush2.msra.mxu0 0.0
  %1185 = vmatprep.subr.mxu0 0.0
  %1186 = vmatpush2.msra.mxu0 0.0
  %1187 = vmatprep.subr.mxu0 0.0
  %1188 = vmatpush2.msra.mxu0 0.0
  %1189 = vmatprep.subr.mxu0 0.0
  %1190 = vmatpush2.msra.mxu0 0.0
  %1191 = vmatprep.subr.mxu0 0.0
  %1192 = vmatpush2.msra.mxu0 0.0
  %1193 = vmatprep.mubr.f32.mxu0 0.0
  %1194 = vmatmul.mubr.f32.gmra.mxu0 %v1121
  %v1195 = vpop.f32.mrf.mxu0
  %v1196 = vadd.f32 0.0, %v1195
  %v1197 = vpop.f32.mrf.mxu0
  %v1198 = vadd.f32 0.0, %v1197
  %1199 = vdwg.mxu0
  %1200 = vmatprep.subr.mxu0 %v594
  %1201 = vmatpush1.msra.mxu0 %v593
  %1202 = vmatprep.subr.mxu0 %v590
  %1203 = vmatpush1.msra.mxu0 %v589
  %1204 = vmatprep.subr.mxu0 %v586
  %1205 = vmatpush1.msra.mxu0 %v585
  %1206 = vmatprep.subr.mxu0 %v582
  %1207 = vmatpush1.msra.mxu0 %v581
  %1208 = vmatprep.subr.mxu0 %v578
  %1209 = vmatpush1.msra.mxu0 %v577
  %1210 = vmatprep.subr.mxu0 %v574
  %1211 = vmatpush1.msra.mxu0 %v573
  %1212 = vmatprep.subr.mxu0 %v570
  %1213 = vmatpush1.msra.mxu0 %v569
  %1214 = vmatprep.subr.mxu0 %v566
  %1215 = vmatpush1.msra.mxu0 %v565
  %1216 = vmatprep.subr.mxu0 %v562
  %1217 = vmatpush1.msra.mxu0 %v561
  %1218 = vmatprep.subr.mxu0 %v558
  %1219 = vmatpush1.msra.mxu0 %v557
  %1220 = vmatprep.subr.mxu0 %v554
  %1221 = vmatpush1.msra.mxu0 %v553
  %1222 = vmatprep.subr.mxu0 %v550
  %1223 = vmatpush1.msra.mxu0 %v549
  %1224 = vmatprep.subr.mxu0 %v546
  %1225 = vmatpush1.msra.mxu0 %v545
  %1226 = vmatprep.subr.mxu0 %v542
  %1227 = vmatpush1.msra.mxu0 %v541
  %1228 = vmatprep.subr.mxu0 %v538
  %1229 = vmatpush1.msra.mxu0 %v537
  %1230 = vmatprep.subr.mxu0 %v534
  %1231 = vmatpush1.msra.mxu0 %v533
  %1232 = vmatprep.subr.mxu0 0.0
  %1233 = vmatpush2.msra.mxu0 0.0
  %1234 = vmatprep.subr.mxu0 0.0
  %1235 = vmatpush2.msra.mxu0 0.0
  %1236 = vmatprep.subr.mxu0 0.0
  %1237 = vmatpush2.msra.mxu0 0.0
  %1238 = vmatprep.subr.mxu0 0.0
  %1239 = vmatpush2.msra.mxu0 0.0
  %1240 = vmatprep.subr.mxu0 0.0
  %1241 = vmatpush2.msra.mxu0 0.0
  %1242 = vmatprep.subr.mxu0 0.0
  %1243 = vmatpush2.msra.mxu0 0.0
  %1244 = vmatprep.subr.mxu0 0.0
  %1245 = vmatpush2.msra.mxu0 0.0
  %1246 = vmatprep.subr.mxu0 0.0
  %1247 = vmatpush2.msra.mxu0 0.0
  %1248 = vmatprep.subr.mxu0 0.0
  %1249 = vmatpush2.msra.mxu0 0.0
  %1250 = vmatprep.subr.mxu0 0.0
  %1251 = vmatpush2.msra.mxu0 0.0
  %1252 = vmatprep.subr.mxu0 0.0
  %1253 = vmatpush2.msra.mxu0 0.0
  %1254 = vmatprep.subr.mxu0 0.0
  %1255 = vmatpush2.msra.mxu0 0.0
  %1256 = vmatprep.subr.mxu0 0.0
  %1257 = vmatpush2.msra.mxu0 0.0
  %1258 = vmatprep.subr.mxu0 0.0
  %1259 = vmatpush2.msra.mxu0 0.0
  %1260 = vmatprep.subr.mxu0 0.0
  %1261 = vmatpush2.msra.mxu0 0.0
  %1262 = vmatprep.subr.mxu0 0.0
  %1263 = vmatpush2.msra.mxu0 0.0
  %1264 = vmatprep.mubr.f32.mxu0 0.0
  %1265 = vmatmul.mubr.f32.gmra.mxu0 %v1121
  %v1266 = vpop.f32.mrf.mxu0
  %v1267 = vadd.f32 0.0, %v1266
  %v1268 = vpop.f32.mrf.mxu0
  %v1269 = vadd.f32 0.0, %v1268
  %1270 = vdwg.mxu0
  %v1271 = vadd.f32 %v1125, %v1196
  %v1272 = vadd.f32 %v1126, %v1198
  %v1273 = vadd.f32 %v1127, %v1267
  %v1274 = vadd.f32 %v1128, %v1269
  %v1275 = vxor.u32 %v1271, 2147483648
  %v1276 = vxor.u32 %v1272, 2147483648
  %v1277 = vxor.u32 %v1273, 2147483648
  %v1278 = vmul.f32 %v1275, 1.442695
  %v1279 = vpow.pop %v1278
  %v1280 = vmul.f32 %v1276, 1.442695
  %v1281 = vpow.pop %v1280
  %v1282 = vmul.f32 %v1277, 1.442695
  %v1283 = vpow.pop %v1282
  %v1284 = vadd.f32 %v1279, 1.0
  %v1285 = vadd.f32 %v1281, 1.0
  %v1286 = vadd.f32 %v1283, 1.0
  %v1287 = vrcp.pop %v1284
  %v1288 = vmul.f32 1.0, %v1287
  %v1289 = vrcp.pop %v1285
  %v1290 = vmul.f32 1.0, %v1289
  %v1291 = vrcp.pop %v1286
  %v1292 = vmul.f32 1.0, %v1291
  %v1293 = vtanh.pop %v1274
  %v1294 = vmul.f32 %v1290, %v1119
  %v1295 = vmul.f32 %v1288, %v1293
  %v1296 = vadd.f32 %v1294, %v1295
  %v1297 = vtanh.pop %v1296
  %v1298 = vmul.f32 %v1292, %v1297
  %s1299 = scalar_lea.vmem [#allocation2], 24
  %1300 = vst [vmem:[%s1299] sm:$0xff] %v1298
  %s1301 = scalar_lea.vmem [#allocation3], 128
  %v1302 = vld [vmem:[%s1301] sm:$0xff]
  %v1303 = vld [vmem:[%s1301 + $0x8] sm:$0xff]
  %v1304 = vld [vmem:[%s1301 + $0x10] sm:$0xff]
  %v1305 = vld [vmem:[%s1301 + $0x18] sm:$0xff]
  %1306 = vmatprep.subr.mxu0 %v592
  %1307 = vmatpush1.msra.mxu0 %v591
  %1308 = vmatprep.subr.mxu0 %v588
  %1309 = vmatpush1.msra.mxu0 %v587
  %1310 = vmatprep.subr.mxu0 %v584
  %1311 = vmatpush1.msra.mxu0 %v583
  %1312 = vmatprep.subr.mxu0 %v580
  %1313 = vmatpush1.msra.mxu0 %v579
  %1314 = vmatprep.subr.mxu0 %v576
  %1315 = vmatpush1.msra.mxu0 %v575
  %1316 = vmatprep.subr.mxu0 %v572
  %1317 = vmatpush1.msra.mxu0 %v571
  %1318 = vmatprep.subr.mxu0 %v568
  %1319 = vmatpush1.msra.mxu0 %v567
  %1320 = vmatprep.subr.mxu0 %v564
  %1321 = vmatpush1.msra.mxu0 %v563
  %1322 = vmatprep.subr.mxu0 %v560
  %1323 = vmatpush1.msra.mxu0 %v559
  %1324 = vmatprep.subr.mxu0 %v556
  %1325 = vmatpush1.msra.mxu0 %v555
  %1326 = vmatprep.subr.mxu0 %v552
  %1327 = vmatpush1.msra.mxu0 %v551
  %1328 = vmatprep.subr.mxu0 %v548
  %1329 = vmatpush1.msra.mxu0 %v547
  %1330 = vmatprep.subr.mxu0 %v544
  %1331 = vmatpush1.msra.mxu0 %v543
  %1332 = vmatprep.subr.mxu0 %v540
  %1333 = vmatpush1.msra.mxu0 %v539
  %1334 = vmatprep.subr.mxu0 %v536
  %1335 = vmatpush1.msra.mxu0 %v535
  %1336 = vmatprep.subr.mxu0 %v532
  %1337 = vmatpush1.msra.mxu0 %v531
  %1338 = vmatprep.subr.mxu0 0.0
  %1339 = vmatpush2.msra.mxu0 0.0
  %1340 = vmatprep.subr.mxu0 0.0
  %1341 = vmatpush2.msra.mxu0 0.0
  %1342 = vmatprep.subr.mxu0 0.0
  %1343 = vmatpush2.msra.mxu0 0.0
  %1344 = vmatprep.subr.mxu0 0.0
  %1345 = vmatpush2.msra.mxu0 0.0
  %1346 = vmatprep.subr.mxu0 0.0
  %1347 = vmatpush2.msra.mxu0 0.0
  %1348 = vmatprep.subr.mxu0 0.0
  %1349 = vmatpush2.msra.mxu0 0.0
  %1350 = vmatprep.subr.mxu0 0.0
  %1351 = vmatpush2.msra.mxu0 0.0
  %1352 = vmatprep.subr.mxu0 0.0
  %1353 = vmatpush2.msra.mxu0 0.0
  %1354 = vmatprep.subr.mxu0 0.0
  %1355 = vmatpush2.msra.mxu0 0.0
  %1356 = vmatprep.subr.mxu0 0.0
  %1357 = vmatpush2.msra.mxu0 0.0
  %1358 = vmatprep.subr.mxu0 0.0
  %1359 = vmatpush2.msra.mxu0 0.0
  %1360 = vmatprep.subr.mxu0 0.0
  %1361 = vmatpush2.msra.mxu0 0.0
  %1362 = vmatprep.subr.mxu0 0.0
  %1363 = vmatpush2.msra.mxu0 0.0
  %1364 = vmatprep.subr.mxu0 0.0
  %1365 = vmatpush2.msra.mxu0 0.0
  %1366 = vmatprep.subr.mxu0 0.0
  %1367 = vmatpush2.msra.mxu0 0.0
  %1368 = vmatprep.subr.mxu0 0.0
  %1369 = vmatpush2.msra.mxu0 0.0
  %1370 = vmatprep.mubr.f32.mxu0 0.0
  %1371 = vmatmul.mubr.f32.gmra.mxu0 %v1298
  %v1372 = vpop.f32.mrf.mxu0
  %v1373 = vadd.f32 0.0, %v1372
  %v1374 = vpop.f32.mrf.mxu0
  %v1375 = vadd.f32 0.0, %v1374
  %1376 = vdwg.mxu0
  %1377 = vmatprep.subr.mxu0 %v594
  %1378 = vmatpush1.msra.mxu0 %v593
  %1379 = vmatprep.subr.mxu0 %v590
  %1380 = vmatpush1.msra.mxu0 %v589
  %1381 = vmatprep.subr.mxu0 %v586
  %1382 = vmatpush1.msra.mxu0 %v585
  %1383 = vmatprep.subr.mxu0 %v582
  %1384 = vmatpush1.msra.mxu0 %v581
  %1385 = vmatprep.subr.mxu0 %v578
  %1386 = vmatpush1.msra.mxu0 %v577
  %1387 = vmatprep.subr.mxu0 %v574
  %1388 = vmatpush1.msra.mxu0 %v573
  %1389 = vmatprep.subr.mxu0 %v570
  %1390 = vmatpush1.msra.mxu0 %v569
  %1391 = vmatprep.subr.mxu0 %v566
  %1392 = vmatpush1.msra.mxu0 %v565
  %1393 = vmatprep.subr.mxu0 %v562
  %1394 = vmatpush1.msra.mxu0 %v561
  %1395 = vmatprep.subr.mxu0 %v558
  %1396 = vmatpush1.msra.mxu0 %v557
  %1397 = vmatprep.subr.mxu0 %v554
  %1398 = vmatpush1.msra.mxu0 %v553
  %1399 = vmatprep.subr.mxu0 %v550
  %1400 = vmatpush1.msra.mxu0 %v549
  %1401 = vmatprep.subr.mxu0 %v546
  %1402 = vmatpush1.msra.mxu0 %v545
  %1403 = vmatprep.subr.mxu0 %v542
  %1404 = vmatpush1.msra.mxu0 %v541
  %1405 = vmatprep.subr.mxu0 %v538
  %1406 = vmatpush1.msra.mxu0 %v537
  %1407 = vmatprep.subr.mxu0 %v534
  %1408 = vmatpush1.msra.mxu0 %v533
  %1409 = vmatprep.subr.mxu0 0.0
  %1410 = vmatpush2.msra.mxu0 0.0
  %1411 = vmatprep.subr.mxu0 0.0
  %1412 = vmatpush2.msra.mxu0 0.0
  %1413 = vmatprep.subr.mxu0 0.0
  %1414 = vmatpush2.msra.mxu0 0.0
  %1415 = vmatprep.subr.mxu0 0.0
  %1416 = vmatpush2.msra.mxu0 0.0
  %1417 = vmatprep.subr.mxu0 0.0
  %1418 = vmatpush2.msra.mxu0 0.0
  %1419 = vmatprep.subr.mxu0 0.0
  %1420 = vmatpush2.msra.mxu0 0.0
  %1421 = vmatprep.subr.mxu0 0.0
  %1422 = vmatpush2.msra.mxu0 0.0
  %1423 = vmatprep.subr.mxu0 0.0
  %1424 = vmatpush2.msra.mxu0 0.0
  %1425 = vmatprep.subr.mxu0 0.0
  %1426 = vmatpush2.msra.mxu0 0.0
  %1427 = vmatprep.subr.mxu0 0.0
  %1428 = vmatpush2.msra.mxu0 0.0
  %1429 = vmatprep.subr.mxu0 0.0
  %1430 = vmatpush2.msra.mxu0 0.0
  %1431 = vmatprep.subr.mxu0 0.0
  %1432 = vmatpush2.msra.mxu0 0.0
  %1433 = vmatprep.subr.mxu0 0.0
  %1434 = vmatpush2.msra.mxu0 0.0
  %1435 = vmatprep.subr.mxu0 0.0
  %1436 = vmatpush2.msra.mxu0 0.0
  %1437 = vmatprep.subr.mxu0 0.0
  %1438 = vmatpush2.msra.mxu0 0.0
  %1439 = vmatprep.subr.mxu0 0.0
  %1440 = vmatpush2.msra.mxu0 0.0
  %1441 = vmatprep.mubr.f32.mxu0 0.0
  %1442 = vmatmul.mubr.f32.gmra.mxu0 %v1298
  %v1443 = vpop.f32.mrf.mxu0
  %v1444 = vadd.f32 0.0, %v1443
  %v1445 = vpop.f32.mrf.mxu0
  %v1446 = vadd.f32 0.0, %v1445
  %1447 = vdwg.mxu0
  %v1448 = vadd.f32 %v1302, %v1373
  %v1449 = vadd.f32 %v1303, %v1375
  %v1450 = vadd.f32 %v1304, %v1444
  %v1451 = vadd.f32 %v1305, %v1446
  %v1452 = vxor.u32 %v1448, 2147483648
  %v1453 = vxor.u32 %v1449, 2147483648
  %v1454 = vxor.u32 %v1450, 2147483648
  %v1455 = vmul.f32 %v1452, 1.442695
  %v1456 = vpow.pop %v1455
  %v1457 = vmul.f32 %v1453, 1.442695
  %v1458 = vpow.pop %v1457
  %v1459 = vmul.f32 %v1454, 1.442695
  %v1460 = vpow.pop %v1459
  %v1461 = vadd.f32 %v1456, 1.0
  %v1462 = vadd.f32 %v1458, 1.0
  %v1463 = vadd.f32 %v1460, 1.0
  %v1464 = vrcp.pop %v1461
  %v1465 = vmul.f32 1.0, %v1464
  %v1466 = vrcp.pop %v1462
  %v1467 = vmul.f32 1.0, %v1466
  %v1468 = vrcp.pop %v1463
  %v1469 = vmul.f32 1.0, %v1468
  %v1470 = vtanh.pop %v1451
  %v1471 = vmul.f32 %v1467, %v1296
  %v1472 = vmul.f32 %v1465, %v1470
  %v1473 = vadd.f32 %v1471, %v1472
  %v1474 = vtanh.pop %v1473
  %v1475 = vmul.f32 %v1469, %v1474
  %s1476 = scalar_lea.vmem [#allocation2], 32
  %1477 = vst [vmem:[%s1476] sm:$0xff] %v1475
  %s1478 = scalar_lea.vmem [#allocation3], 160
  %v1479 = vld [vmem:[%s1478] sm:$0xff]
  %v1480 = vld [vmem:[%s1478 + $0x8] sm:$0xff]
  %v1481 = vld [vmem:[%s1478 + $0x10] sm:$0xff]
  %v1482 = vld [vmem:[%s1478 + $0x18] sm:$0xff]
  %1483 = vmatprep.subr.mxu0 %v592
  %1484 = vmatpush1.msra.mxu0 %v591
  %1485 = vmatprep.subr.mxu0 %v588
  %1486 = vmatpush1.msra.mxu0 %v587
  %1487 = vmatprep.subr.mxu0 %v584
  %1488 = vmatpush1.msra.mxu0 %v583
  %1489 = vmatprep.subr.mxu0 %v580
  %1490 = vmatpush1.msra.mxu0 %v579
  %1491 = vmatprep.subr.mxu0 %v576
  %1492 = vmatpush1.msra.mxu0 %v575
  %1493 = vmatprep.subr.mxu0 %v572
  %1494 = vmatpush1.msra.mxu0 %v571
  %1495 = vmatprep.subr.mxu0 %v568
  %1496 = vmatpush1.msra.mxu0 %v567
  %1497 = vmatprep.subr.mxu0 %v564
  %1498 = vmatpush1.msra.mxu0 %v563
  %1499 = vmatprep.subr.mxu0 %v560
  %1500 = vmatpush1.msra.mxu0 %v559
  %1501 = vmatprep.subr.mxu0 %v556
  %1502 = vmatpush1.msra.mxu0 %v555
  %1503 = vmatprep.subr.mxu0 %v552
  %1504 = vmatpush1.msra.mxu0 %v551
  %1505 = vmatprep.subr.mxu0 %v548
  %1506 = vmatpush1.msra.mxu0 %v547
  %1507 = vmatprep.subr.mxu0 %v544
  %1508 = vmatpush1.msra.mxu0 %v543
  %1509 = vmatprep.subr.mxu0 %v540
  %1510 = vmatpush1.msra.mxu0 %v539
  %1511 = vmatprep.subr.mxu0 %v536
  %1512 = vmatpush1.msra.mxu0 %v535
  %1513 = vmatprep.subr.mxu0 %v532
  %1514 = vmatpush1.msra.mxu0 %v531
  %1515 = vmatprep.subr.mxu0 0.0
  %1516 = vmatpush2.msra.mxu0 0.0
  %1517 = vmatprep.subr.mxu0 0.0
  %1518 = vmatpush2.msra.mxu0 0.0
  %1519 = vmatprep.subr.mxu0 0.0
  %1520 = vmatpush2.msra.mxu0 0.0
  %1521 = vmatprep.subr.mxu0 0.0
  %1522 = vmatpush2.msra.mxu0 0.0
  %1523 = vmatprep.subr.mxu0 0.0
  %1524 = vmatpush2.msra.mxu0 0.0
  %1525 = vmatprep.subr.mxu0 0.0
  %1526 = vmatpush2.msra.mxu0 0.0
  %1527 = vmatprep.subr.mxu0 0.0
  %1528 = vmatpush2.msra.mxu0 0.0
  %1529 = vmatprep.subr.mxu0 0.0
  %1530 = vmatpush2.msra.mxu0 0.0
  %1531 = vmatprep.subr.mxu0 0.0
  %1532 = vmatpush2.msra.mxu0 0.0
  %1533 = vmatprep.subr.mxu0 0.0
  %1534 = vmatpush2.msra.mxu0 0.0
  %1535 = vmatprep.subr.mxu0 0.0
  %1536 = vmatpush2.msra.mxu0 0.0
  %1537 = vmatprep.subr.mxu0 0.0
  %1538 = vmatpush2.msra.mxu0 0.0
  %1539 = vmatprep.subr.mxu0 0.0
  %1540 = vmatpush2.msra.mxu0 0.0
  %1541 = vmatprep.subr.mxu0 0.0
  %1542 = vmatpush2.msra.mxu0 0.0
  %1543 = vmatprep.subr.mxu0 0.0
  %1544 = vmatpush2.msra.mxu0 0.0
  %1545 = vmatprep.subr.mxu0 0.0
  %1546 = vmatpush2.msra.mxu0 0.0
  %1547 = vmatprep.mubr.f32.mxu0 0.0
  %1548 = vmatmul.mubr.f32.gmra.mxu0 %v1475
  %v1549 = vpop.f32.mrf.mxu0
  %v1550 = vadd.f32 0.0, %v1549
  %v1551 = vpop.f32.mrf.mxu0
  %v1552 = vadd.f32 0.0, %v1551
  %1553 = vdwg.mxu0
  %1554 = vmatprep.subr.mxu0 %v594
  %1555 = vmatpush1.msra.mxu0 %v593
  %1556 = vmatprep.subr.mxu0 %v590
  %1557 = vmatpush1.msra.mxu0 %v589
  %1558 = vmatprep.subr.mxu0 %v586
  %1559 = vmatpush1.msra.mxu0 %v585
  %1560 = vmatprep.subr.mxu0 %v582
  %1561 = vmatpush1.msra.mxu0 %v581
  %1562 = vmatprep.subr.mxu0 %v578
  %1563 = vmatpush1.msra.mxu0 %v577
  %1564 = vmatprep.subr.mxu0 %v574
  %1565 = vmatpush1.msra.mxu0 %v573
  %1566 = vmatprep.subr.mxu0 %v570
  %1567 = vmatpush1.msra.mxu0 %v569
  %1568 = vmatprep.subr.mxu0 %v566
  %1569 = vmatpush1.msra.mxu0 %v565
  %1570 = vmatprep.subr.mxu0 %v562
  %1571 = vmatpush1.msra.mxu0 %v561
  %1572 = vmatprep.subr.mxu0 %v558
  %1573 = vmatpush1.msra.mxu0 %v557
  %1574 = vmatprep.subr.mxu0 %v554
  %1575 = vmatpush1.msra.mxu0 %v553
  %1576 = vmatprep.subr.mxu0 %v550
  %1577 = vmatpush1.msra.mxu0 %v549
  %1578 = vmatprep.subr.mxu0 %v546
  %1579 = vmatpush1.msra.mxu0 %v545
  %1580 = vmatprep.subr.mxu0 %v542
  %1581 = vmatpush1.msra.mxu0 %v541
  %1582 = vmatprep.subr.mxu0 %v538
  %1583 = vmatpush1.msra.mxu0 %v537
  %1584 = vmatprep.subr.mxu0 %v534
  %1585 = vmatpush1.msra.mxu0 %v533
  %1586 = vmatprep.subr.mxu0 0.0
  %1587 = vmatpush2.msra.mxu0 0.0
  %1588 = vmatprep.subr.mxu0 0.0
  %1589 = vmatpush2.msra.mxu0 0.0
  %1590 = vmatprep.subr.mxu0 0.0
  %1591 = vmatpush2.msra.mxu0 0.0
  %1592 = vmatprep.subr.mxu0 0.0
  %1593 = vmatpush2.msra.mxu0 0.0
  %1594 = vmatprep.subr.mxu0 0.0
  %1595 = vmatpush2.msra.mxu0 0.0
  %1596 = vmatprep.subr.mxu0 0.0
  %1597 = vmatpush2.msra.mxu0 0.0
  %1598 = vmatprep.subr.mxu0 0.0
  %1599 = vmatpush2.msra.mxu0 0.0
  %1600 = vmatprep.subr.mxu0 0.0
  %1601 = vmatpush2.msra.mxu0 0.0
  %1602 = vmatprep.subr.mxu0 0.0
  %1603 = vmatpush2.msra.mxu0 0.0
  %1604 = vmatprep.subr.mxu0 0.0
  %1605 = vmatpush2.msra.mxu0 0.0
  %1606 = vmatprep.subr.mxu0 0.0
  %1607 = vmatpush2.msra.mxu0 0.0
  %1608 = vmatprep.subr.mxu0 0.0
  %1609 = vmatpush2.msra.mxu0 0.0
  %1610 = vmatprep.subr.mxu0 0.0
  %1611 = vmatpush2.msra.mxu0 0.0
  %1612 = vmatprep.subr.mxu0 0.0
  %1613 = vmatpush2.msra.mxu0 0.0
  %1614 = vmatprep.subr.mxu0 0.0
  %1615 = vmatpush2.msra.mxu0 0.0
  %1616 = vmatprep.subr.mxu0 0.0
  %1617 = vmatpush2.msra.mxu0 0.0
  %1618 = vmatprep.mubr.f32.mxu0 0.0
  %1619 = vmatmul.mubr.f32.gmra.mxu0 %v1475
  %v1620 = vpop.f32.mrf.mxu0
  %v1621 = vadd.f32 0.0, %v1620
  %v1622 = vpop.f32.mrf.mxu0
  %v1623 = vadd.f32 0.0, %v1622
  %1624 = vdwg.mxu0
  %v1625 = vadd.f32 %v1479, %v1550
  %v1626 = vadd.f32 %v1480, %v1552
  %v1627 = vadd.f32 %v1481, %v1621
  %v1628 = vadd.f32 %v1482, %v1623
  %v1629 = vxor.u32 %v1625, 2147483648
  %v1630 = vxor.u32 %v1626, 2147483648
  %v1631 = vxor.u32 %v1627, 2147483648
  %v1632 = vmul.f32 %v1629, 1.442695
  %v1633 = vpow.pop %v1632
  %v1634 = vmul.f32 %v1630, 1.442695
  %v1635 = vpow.pop %v1634
  %v1636 = vmul.f32 %v1631, 1.442695
  %v1637 = vpow.pop %v1636
  %v1638 = vadd.f32 %v1633, 1.0
  %v1639 = vadd.f32 %v1635, 1.0
  %v1640 = vadd.f32 %v1637, 1.0
  %v1641 = vrcp.pop %v1638
  %v1642 = vmul.f32 1.0, %v1641
  %v1643 = vrcp.pop %v1639
  %v1644 = vmul.f32 1.0, %v1643
  %v1645 = vrcp.pop %v1640
  %v1646 = vmul.f32 1.0, %v1645
  %v1647 = vtanh.pop %v1628
  %v1648 = vmul.f32 %v1644, %v1473
  %v1649 = vmul.f32 %v1642, %v1647
  %v1650 = vadd.f32 %v1648, %v1649
  %v1651 = vtanh.pop %v1650
  %v1652 = vmul.f32 %v1646, %v1651
  %s1653 = scalar_lea.vmem [#allocation2], 40
  %1654 = vst [vmem:[%s1653] sm:$0xff] %v1652
  %s1655 = scalar_lea.vmem [#allocation3], 192
  %v1656 = vld [vmem:[%s1655] sm:$0xff]
  %v1657 = vld [vmem:[%s1655 + $0x8] sm:$0xff]
  %v1658 = vld [vmem:[%s1655 + $0x10] sm:$0xff]
  %v1659 = vld [vmem:[%s1655 + $0x18] sm:$0xff]
  %1660 = vmatprep.subr.mxu0 %v592
  %1661 = vmatpush1.msra.mxu0 %v591
  %1662 = vmatprep.subr.mxu0 %v588
  %1663 = vmatpush1.msra.mxu0 %v587
  %1664 = vmatprep.subr.mxu0 %v584
  %1665 = vmatpush1.msra.mxu0 %v583
  %1666 = vmatprep.subr.mxu0 %v580
  %1667 = vmatpush1.msra.mxu0 %v579
  %1668 = vmatprep.subr.mxu0 %v576
  %1669 = vmatpush1.msra.mxu0 %v575
  %1670 = vmatprep.subr.mxu0 %v572
  %1671 = vmatpush1.msra.mxu0 %v571
  %1672 = vmatprep.subr.mxu0 %v568
  %1673 = vmatpush1.msra.mxu0 %v567
  %1674 = vmatprep.subr.mxu0 %v564
  %1675 = vmatpush1.msra.mxu0 %v563
  %1676 = vmatprep.subr.mxu0 %v560
  %1677 = vmatpush1.msra.mxu0 %v559
  %1678 = vmatprep.subr.mxu0 %v556
  %1679 = vmatpush1.msra.mxu0 %v555
  %1680 = vmatprep.subr.mxu0 %v552
  %1681 = vmatpush1.msra.mxu0 %v551
  %1682 = vmatprep.subr.mxu0 %v548
  %1683 = vmatpush1.msra.mxu0 %v547
  %1684 = vmatprep.subr.mxu0 %v544
  %1685 = vmatpush1.msra.mxu0 %v543
  %1686 = vmatprep.subr.mxu0 %v540
  %1687 = vmatpush1.msra.mxu0 %v539
  %1688 = vmatprep.subr.mxu0 %v536
  %1689 = vmatpush1.msra.mxu0 %v535
  %1690 = vmatprep.subr.mxu0 %v532
  %1691 = vmatpush1.msra.mxu0 %v531
  %1692 = vmatprep.subr.mxu0 0.0
  %1693 = vmatpush2.msra.mxu0 0.0
  %1694 = vmatprep.subr.mxu0 0.0
  %1695 = vmatpush2.msra.mxu0 0.0
  %1696 = vmatprep.subr.mxu0 0.0
  %1697 = vmatpush2.msra.mxu0 0.0
  %1698 = vmatprep.subr.mxu0 0.0
  %1699 = vmatpush2.msra.mxu0 0.0
  %1700 = vmatprep.subr.mxu0 0.0
  %1701 = vmatpush2.msra.mxu0 0.0
  %1702 = vmatprep.subr.mxu0 0.0
  %1703 = vmatpush2.msra.mxu0 0.0
  %1704 = vmatprep.subr.mxu0 0.0
  %1705 = vmatpush2.msra.mxu0 0.0
  %1706 = vmatprep.subr.mxu0 0.0
  %1707 = vmatpush2.msra.mxu0 0.0
  %1708 = vmatprep.subr.mxu0 0.0
  %1709 = vmatpush2.msra.mxu0 0.0
  %1710 = vmatprep.subr.mxu0 0.0
  %1711 = vmatpush2.msra.mxu0 0.0
  %1712 = vmatprep.subr.mxu0 0.0
  %1713 = vmatpush2.msra.mxu0 0.0
  %1714 = vmatprep.subr.mxu0 0.0
  %1715 = vmatpush2.msra.mxu0 0.0
  %1716 = vmatprep.subr.mxu0 0.0
  %1717 = vmatpush2.msra.mxu0 0.0
  %1718 = vmatprep.subr.mxu0 0.0
  %1719 = vmatpush2.msra.mxu0 0.0
  %1720 = vmatprep.subr.mxu0 0.0
  %1721 = vmatpush2.msra.mxu0 0.0
  %1722 = vmatprep.subr.mxu0 0.0
  %1723 = vmatpush2.msra.mxu0 0.0
  %1724 = vmatprep.mubr.f32.mxu0 0.0
  %1725 = vmatmul.mubr.f32.gmra.mxu0 %v1652
  %v1726 = vpop.f32.mrf.mxu0
  %v1727 = vadd.f32 0.0, %v1726
  %v1728 = vpop.f32.mrf.mxu0
  %v1729 = vadd.f32 0.0, %v1728
  %1730 = vdwg.mxu0
  %1731 = vmatprep.subr.mxu0 %v594
  %1732 = vmatpush1.msra.mxu0 %v593
  %1733 = vmatprep.subr.mxu0 %v590
  %1734 = vmatpush1.msra.mxu0 %v589
  %1735 = vmatprep.subr.mxu0 %v586
  %1736 = vmatpush1.msra.mxu0 %v585
  %1737 = vmatprep.subr.mxu0 %v582
  %1738 = vmatpush1.msra.mxu0 %v581
  %1739 = vmatprep.subr.mxu0 %v578
  %1740 = vmatpush1.msra.mxu0 %v577
  %1741 = vmatprep.subr.mxu0 %v574
  %1742 = vmatpush1.msra.mxu0 %v573
  %1743 = vmatprep.subr.mxu0 %v570
  %1744 = vmatpush1.msra.mxu0 %v569
  %1745 = vmatprep.subr.mxu0 %v566
  %1746 = vmatpush1.msra.mxu0 %v565
  %1747 = vmatprep.subr.mxu0 %v562
  %1748 = vmatpush1.msra.mxu0 %v561
  %1749 = vmatprep.subr.mxu0 %v558
  %1750 = vmatpush1.msra.mxu0 %v557
  %1751 = vmatprep.subr.mxu0 %v554
  %1752 = vmatpush1.msra.mxu0 %v553
  %1753 = vmatprep.subr.mxu0 %v550
  %1754 = vmatpush1.msra.mxu0 %v549
  %1755 = vmatprep.subr.mxu0 %v546
  %1756 = vmatpush1.msra.mxu0 %v545
  %1757 = vmatprep.subr.mxu0 %v542
  %1758 = vmatpush1.msra.mxu0 %v541
  %1759 = vmatprep.subr.mxu0 %v538
  %1760 = vmatpush1.msra.mxu0 %v537
  %1761 = vmatprep.subr.mxu0 %v534
  %1762 = vmatpush1.msra.mxu0 %v533
  %1763 = vmatprep.subr.mxu0 0.0
  %1764 = vmatpush2.msra.mxu0 0.0
  %1765 = vmatprep.subr.mxu0 0.0
  %1766 = vmatpush2.msra.mxu0 0.0
  %1767 = vmatprep.subr.mxu0 0.0
  %1768 = vmatpush2.msra.mxu0 0.0
  %1769 = vmatprep.subr.mxu0 0.0
  %1770 = vmatpush2.msra.mxu0 0.0
  %1771 = vmatprep.subr.mxu0 0.0
  %1772 = vmatpush2.msra.mxu0 0.0
  %1773 = vmatprep.subr.mxu0 0.0
  %1774 = vmatpush2.msra.mxu0 0.0
  %1775 = vmatprep.subr.mxu0 0.0
  %1776 = vmatpush2.msra.mxu0 0.0
  %1777 = vmatprep.subr.mxu0 0.0
  %1778 = vmatpush2.msra.mxu0 0.0
  %1779 = vmatprep.subr.mxu0 0.0
  %1780 = vmatpush2.msra.mxu0 0.0
  %1781 = vmatprep.subr.mxu0 0.0
  %1782 = vmatpush2.msra.mxu0 0.0
  %1783 = vmatprep.subr.mxu0 0.0
  %1784 = vmatpush2.msra.mxu0 0.0
  %1785 = vmatprep.subr.mxu0 0.0
  %1786 = vmatpush2.msra.mxu0 0.0
  %1787 = vmatprep.subr.mxu0 0.0
  %1788 = vmatpush2.msra.mxu0 0.0
  %1789 = vmatprep.subr.mxu0 0.0
  %1790 = vmatpush2.msra.mxu0 0.0
  %1791 = vmatprep.subr.mxu0 0.0
  %1792 = vmatpush2.msra.mxu0 0.0
  %1793 = vmatprep.subr.mxu0 0.0
  %1794 = vmatpush2.msra.mxu0 0.0
  %1795 = vmatprep.mubr.f32.mxu0 0.0
  %1796 = vmatmul.mubr.f32.gmra.mxu0 %v1652
  %v1797 = vpop.f32.mrf.mxu0
  %v1798 = vadd.f32 0.0, %v1797
  %v1799 = vpop.f32.mrf.mxu0
  %v1800 = vadd.f32 0.0, %v1799
  %1801 = vdwg.mxu0
  %v1802 = vadd.f32 %v1656, %v1727
  %v1803 = vadd.f32 %v1657, %v1729
  %v1804 = vadd.f32 %v1658, %v1798
  %v1805 = vadd.f32 %v1659, %v1800
  %v1806 = vxor.u32 %v1802, 2147483648
  %v1807 = vxor.u32 %v1803, 2147483648
  %v1808 = vxor.u32 %v1804, 2147483648
  %v1809 = vmul.f32 %v1806, 1.442695
  %v1810 = vpow.pop %v1809
  %v1811 = vmul.f32 %v1807, 1.442695
  %v1812 = vpow.pop %v1811
  %v1813 = vmul.f32 %v1808, 1.442695
  %v1814 = vpow.pop %v1813
  %v1815 = vadd.f32 %v1810, 1.0
  %v1816 = vadd.f32 %v1812, 1.0
  %v1817 = vadd.f32 %v1814, 1.0
  %v1818 = vrcp.pop %v1815
  %v1819 = vmul.f32 1.0, %v1818
  %v1820 = vrcp.pop %v1816
  %v1821 = vmul.f32 1.0, %v1820
  %v1822 = vrcp.pop %v1817
  %v1823 = vmul.f32 1.0, %v1822
  %v1824 = vtanh.pop %v1805
  %v1825 = vmul.f32 %v1821, %v1650
  %v1826 = vmul.f32 %v1819, %v1824
  %v1827 = vadd.f32 %v1825, %v1826
  %v1828 = vtanh.pop %v1827
  %v1829 = vmul.f32 %v1823, %v1828
  %s1830 = scalar_lea.vmem [#allocation2], 48
  %1831 = vst [vmem:[%s1830] sm:$0xff] %v1829
  %s1832 = scalar_lea.vmem [#allocation3], 224
  %v1833 = vld [vmem:[%s1832] sm:$0xff]
  %v1834 = vld [vmem:[%s1832 + $0x8] sm:$0xff]
  %v1835 = vld [vmem:[%s1832 + $0x10] sm:$0xff]
  %v1836 = vld [vmem:[%s1832 + $0x18] sm:$0xff]
  %1837 = vmatprep.subr.mxu0 %v592
  %1838 = vmatpush1.msra.mxu0 %v591
  %1839 = vmatprep.subr.mxu0 %v588
  %1840 = vmatpush1.msra.mxu0 %v587
  %1841 = vmatprep.subr.mxu0 %v584
  %1842 = vmatpush1.msra.mxu0 %v583
  %1843 = vmatprep.subr.mxu0 %v580
  %1844 = vmatpush1.msra.mxu0 %v579
  %1845 = vmatprep.subr.mxu0 %v576
  %1846 = vmatpush1.msra.mxu0 %v575
  %1847 = vmatprep.subr.mxu0 %v572
  %1848 = vmatpush1.msra.mxu0 %v571
  %1849 = vmatprep.subr.mxu0 %v568
  %1850 = vmatpush1.msra.mxu0 %v567
  %1851 = vmatprep.subr.mxu0 %v564
  %1852 = vmatpush1.msra.mxu0 %v563
  %1853 = vmatprep.subr.mxu0 %v560
  %1854 = vmatpush1.msra.mxu0 %v559
  %1855 = vmatprep.subr.mxu0 %v556
  %1856 = vmatpush1.msra.mxu0 %v555
  %1857 = vmatprep.subr.mxu0 %v552
  %1858 = vmatpush1.msra.mxu0 %v551
  %1859 = vmatprep.subr.mxu0 %v548
  %1860 = vmatpush1.msra.mxu0 %v547
  %1861 = vmatprep.subr.mxu0 %v544
  %1862 = vmatpush1.msra.mxu0 %v543
  %1863 = vmatprep.subr.mxu0 %v540
  %1864 = vmatpush1.msra.mxu0 %v539
  %1865 = vmatprep.subr.mxu0 %v536
  %1866 = vmatpush1.msra.mxu0 %v535
  %1867 = vmatprep.subr.mxu0 %v532
  %1868 = vmatpush1.msra.mxu0 %v531
  %1869 = vmatprep.subr.mxu0 0.0
  %1870 = vmatpush2.msra.mxu0 0.0
  %1871 = vmatprep.subr.mxu0 0.0
  %1872 = vmatpush2.msra.mxu0 0.0
  %1873 = vmatprep.subr.mxu0 0.0
  %1874 = vmatpush2.msra.mxu0 0.0
  %1875 = vmatprep.subr.mxu0 0.0
  %1876 = vmatpush2.msra.mxu0 0.0
  %1877 = vmatprep.subr.mxu0 0.0
  %1878 = vmatpush2.msra.mxu0 0.0
  %1879 = vmatprep.subr.mxu0 0.0
  %1880 = vmatpush2.msra.mxu0 0.0
  %1881 = vmatprep.subr.mxu0 0.0
  %1882 = vmatpush2.msra.mxu0 0.0
  %1883 = vmatprep.subr.mxu0 0.0
  %1884 = vmatpush2.msra.mxu0 0.0
  %1885 = vmatprep.subr.mxu0 0.0
  %1886 = vmatpush2.msra.mxu0 0.0
  %1887 = vmatprep.subr.mxu0 0.0
  %1888 = vmatpush2.msra.mxu0 0.0
  %1889 = vmatprep.subr.mxu0 0.0
  %1890 = vmatpush2.msra.mxu0 0.0
  %1891 = vmatprep.subr.mxu0 0.0
  %1892 = vmatpush2.msra.mxu0 0.0
  %1893 = vmatprep.subr.mxu0 0.0
  %1894 = vmatpush2.msra.mxu0 0.0
  %1895 = vmatprep.subr.mxu0 0.0
  %1896 = vmatpush2.msra.mxu0 0.0
  %1897 = vmatprep.subr.mxu0 0.0
  %1898 = vmatpush2.msra.mxu0 0.0
  %1899 = vmatprep.subr.mxu0 0.0
  %1900 = vmatpush2.msra.mxu0 0.0
  %1901 = vmatprep.mubr.f32.mxu0 0.0
  %1902 = vmatmul.mubr.f32.gmra.mxu0 %v1829
  %v1903 = vpop.f32.mrf.mxu0
  %v1904 = vadd.f32 0.0, %v1903
  %v1905 = vpop.f32.mrf.mxu0
  %v1906 = vadd.f32 0.0, %v1905
  %1907 = vdwg.mxu0
  %1908 = vmatprep.subr.mxu0 %v594
  %1909 = vmatpush1.msra.mxu0 %v593
  %1910 = vmatprep.subr.mxu0 %v590
  %1911 = vmatpush1.msra.mxu0 %v589
  %1912 = vmatprep.subr.mxu0 %v586
  %1913 = vmatpush1.msra.mxu0 %v585
  %1914 = vmatprep.subr.mxu0 %v582
  %1915 = vmatpush1.msra.mxu0 %v581
  %1916 = vmatprep.subr.mxu0 %v578
  %1917 = vmatpush1.msra.mxu0 %v577
  %1918 = vmatprep.subr.mxu0 %v574
  %1919 = vmatpush1.msra.mxu0 %v573
  %1920 = vmatprep.subr.mxu0 %v570
  %1921 = vmatpush1.msra.mxu0 %v569
  %1922 = vmatprep.subr.mxu0 %v566
  %1923 = vmatpush1.msra.mxu0 %v565
  %1924 = vmatprep.subr.mxu0 %v562
  %1925 = vmatpush1.msra.mxu0 %v561
  %1926 = vmatprep.subr.mxu0 %v558
  %1927 = vmatpush1.msra.mxu0 %v557
  %1928 = vmatprep.subr.mxu0 %v554
  %1929 = vmatpush1.msra.mxu0 %v553
  %1930 = vmatprep.subr.mxu0 %v550
  %1931 = vmatpush1.msra.mxu0 %v549
  %1932 = vmatprep.subr.mxu0 %v546
  %1933 = vmatpush1.msra.mxu0 %v545
  %1934 = vmatprep.subr.mxu0 %v542
  %1935 = vmatpush1.msra.mxu0 %v541
  %1936 = vmatprep.subr.mxu0 %v538
  %1937 = vmatpush1.msra.mxu0 %v537
  %1938 = vmatprep.subr.mxu0 %v534
  %1939 = vmatpush1.msra.mxu0 %v533
  %1940 = vmatprep.subr.mxu0 0.0
  %1941 = vmatpush2.msra.mxu0 0.0
  %1942 = vmatprep.subr.mxu0 0.0
  %1943 = vmatpush2.msra.mxu0 0.0
  %1944 = vmatprep.subr.mxu0 0.0
  %1945 = vmatpush2.msra.mxu0 0.0
  %1946 = vmatprep.subr.mxu0 0.0
  %1947 = vmatpush2.msra.mxu0 0.0
  %1948 = vmatprep.subr.mxu0 0.0
  %1949 = vmatpush2.msra.mxu0 0.0
  %1950 = vmatprep.subr.mxu0 0.0
  %1951 = vmatpush2.msra.mxu0 0.0
  %1952 = vmatprep.subr.mxu0 0.0
  %1953 = vmatpush2.msra.mxu0 0.0
  %1954 = vmatprep.subr.mxu0 0.0
  %1955 = vmatpush2.msra.mxu0 0.0
  %1956 = vmatprep.subr.mxu0 0.0
  %1957 = vmatpush2.msra.mxu0 0.0
  %1958 = vmatprep.subr.mxu0 0.0
  %1959 = vmatpush2.msra.mxu0 0.0
  %1960 = vmatprep.subr.mxu0 0.0
  %1961 = vmatpush2.msra.mxu0 0.0
  %1962 = vmatprep.subr.mxu0 0.0
  %1963 = vmatpush2.msra.mxu0 0.0
  %1964 = vmatprep.subr.mxu0 0.0
  %1965 = vmatpush2.msra.mxu0 0.0
  %1966 = vmatprep.subr.mxu0 0.0
  %1967 = vmatpush2.msra.mxu0 0.0
  %1968 = vmatprep.subr.mxu0 0.0
  %1969 = vmatpush2.msra.mxu0 0.0
  %1970 = vmatprep.subr.mxu0 0.0
  %1971 = vmatpush2.msra.mxu0 0.0
  %1972 = vmatprep.mubr.f32.mxu0 0.0
  %1973 = vmatmul.mubr.f32.gmra.mxu0 %v1829
  %v1974 = vpop.f32.mrf.mxu0
  %v1975 = vadd.f32 0.0, %v1974
  %v1976 = vpop.f32.mrf.mxu0
  %v1977 = vadd.f32 0.0, %v1976
  %1978 = vdwg.mxu0
  %v1979 = vadd.f32 %v1833, %v1904
  %v1980 = vadd.f32 %v1834, %v1906
  %v1981 = vadd.f32 %v1835, %v1975
  %v1982 = vadd.f32 %v1836, %v1977
  %v1983 = vxor.u32 %v1979, 2147483648
  %v1984 = vxor.u32 %v1980, 2147483648
  %v1985 = vxor.u32 %v1981, 2147483648
  %v1986 = vmul.f32 %v1983, 1.442695
  %v1987 = vpow.pop %v1986
  %v1988 = vmul.f32 %v1984, 1.442695
  %v1989 = vpow.pop %v1988
  %v1990 = vmul.f32 %v1985, 1.442695
  %v1991 = vpow.pop %v1990
  %v1992 = vadd.f32 %v1987, 1.0
  %v1993 = vadd.f32 %v1989, 1.0
  %v1994 = vadd.f32 %v1991, 1.0
  %v1995 = vrcp.pop %v1992
  %v1996 = vmul.f32 1.0, %v1995
  %v1997 = vrcp.pop %v1993
  %v1998 = vmul.f32 1.0, %v1997
  %v1999 = vrcp.pop %v1994
  %v2000 = vmul.f32 1.0, %v1999
  %v2001 = vtanh.pop %v1982
  %v2002 = vmul.f32 %v1998, %v1827
  %v2003 = vmul.f32 %v1996, %v2001
  %v2004 = vadd.f32 %v2002, %v2003
  %v2005 = vtanh.pop %v2004
  %v2006 = vmul.f32 %v2000, %v2005
  %s2007 = scalar_lea.vmem [#allocation2], 56
  %2008 = vst [vmem:[%s2007] sm:$0xff] %v2006
  %v2009 = vld [vmem:[#allocation2] sm:$0xff]
  %v2010 = vld [vmem:[#allocation2 + $0x8] sm:$0xff]
  %v2011 = vld [vmem:[#allocation2 + $0x10] sm:$0xff]
  %v2012 = vld [vmem:[#allocation2 + $0x18] sm:$0xff]
  %v2013 = vld [vmem:[#allocation2 + $0x20] sm:$0xff]
  %v2014 = vld [vmem:[#allocation2 + $0x28] sm:$0xff]
  %v2015 = vld [vmem:[#allocation2 + $0x30] sm:$0xff]
  %v2016 = vld [vmem:[#allocation2 + $0x38] sm:$0xff]
  %s2017 = scalar_lea.vmem %s3, 512
  %v2018 = vld [vmem:[%s2017] sm:$0xff]
  %v2019 = vld [vmem:[%s2017 + $0x8] sm:$0xff]
  %v2020 = vld [vmem:[%s2017 + $0x10] sm:$0xff]
  %v2021 = vld [vmem:[%s2017 + $0x18] sm:$0xff]
  %v2022 = vld [vmem:[%s2017 + $0x20] sm:$0xff]
  %v2023 = vld [vmem:[%s2017 + $0x28] sm:$0xff]
  %v2024 = vld [vmem:[%s2017 + $0x30] sm:$0xff]
  %v2025 = vld [vmem:[%s2017 + $0x38] sm:$0xff]
  %v2026 = vld [vmem:[%s2017 + $0x40] sm:$0xff]
  %v2027 = vld [vmem:[%s2017 + $0x48] sm:$0xff]
  %v2028 = vld [vmem:[%s2017 + $0x50] sm:$0xff]
  %v2029 = vld [vmem:[%s2017 + $0x58] sm:$0xff]
  %v2030 = vld [vmem:[%s2017 + $0x60] sm:$0xff]
  %v2031 = vld [vmem:[%s2017 + $0x68] sm:$0xff]
  %v2032 = vld [vmem:[%s2017 + $0x70] sm:$0xff]
  %v2033 = vld [vmem:[%s2017 + $0x78] sm:$0xff]
  %v2034 = vld [vmem:[%s2017 + $0x80] sm:$0xff]
  %v2035 = vld [vmem:[%s2017 + $0x88] sm:$0xff]
  %v2036 = vld [vmem:[%s2017 + $0x90] sm:$0xff]
  %v2037 = vld [vmem:[%s2017 + $0x98] sm:$0xff]
  %v2038 = vld [vmem:[%s2017 + $0xa0] sm:$0xff]
  %v2039 = vld [vmem:[%s2017 + $0xa8] sm:$0xff]
  %v2040 = vld [vmem:[%s2017 + $0xb0] sm:$0xff]
  %v2041 = vld [vmem:[%s2017 + $0xb8] sm:$0xff]
  %v2042 = vld [vmem:[%s2017 + $0xc0] sm:$0xff]
  %v2043 = vld [vmem:[%s2017 + $0xc8] sm:$0xff]
  %v2044 = vld [vmem:[%s2017 + $0xd0] sm:$0xff]
  %v2045 = vld [vmem:[%s2017 + $0xd8] sm:$0xff]
  %v2046 = vld [vmem:[%s2017 + $0xe0] sm:$0xff]
  %v2047 = vld [vmem:[%s2017 + $0xe8] sm:$0xff]
  %v2048 = vld [vmem:[%s2017 + $0xf0] sm:$0xff]
  %v2049 = vld [vmem:[%s2017 + $0xf8] sm:$0xff]
  %v2050 = vld [vmem:[%s2017 + $0x100] sm:$0xff]
  %v2051 = vld [vmem:[%s2017 + $0x108] sm:$0xff]
  %v2052 = vld [vmem:[%s2017 + $0x110] sm:$0xff]
  %v2053 = vld [vmem:[%s2017 + $0x118] sm:$0xff]
  %v2054 = vld [vmem:[%s2017 + $0x120] sm:$0xff]
  %v2055 = vld [vmem:[%s2017 + $0x128] sm:$0xff]
  %v2056 = vld [vmem:[%s2017 + $0x130] sm:$0xff]
  %v2057 = vld [vmem:[%s2017 + $0x138] sm:$0xff]
  %v2058 = vld [vmem:[%s2017 + $0x140] sm:$0xff]
  %v2059 = vld [vmem:[%s2017 + $0x148] sm:$0xff]
  %v2060 = vld [vmem:[%s2017 + $0x150] sm:$0xff]
  %v2061 = vld [vmem:[%s2017 + $0x158] sm:$0xff]
  %v2062 = vld [vmem:[%s2017 + $0x160] sm:$0xff]
  %v2063 = vld [vmem:[%s2017 + $0x168] sm:$0xff]
  %v2064 = vld [vmem:[%s2017 + $0x170] sm:$0xff]
  %v2065 = vld [vmem:[%s2017 + $0x178] sm:$0xff]
  %v2066 = vld [vmem:[%s2017 + $0x180] sm:$0xff]
  %v2067 = vld [vmem:[%s2017 + $0x188] sm:$0xff]
  %v2068 = vld [vmem:[%s2017 + $0x190] sm:$0xff]
  %v2069 = vld [vmem:[%s2017 + $0x198] sm:$0xff]
  %v2070 = vld [vmem:[%s2017 + $0x1a0] sm:$0xff]
  %v2071 = vld [vmem:[%s2017 + $0x1a8] sm:$0xff]
  %v2072 = vld [vmem:[%s2017 + $0x1b0] sm:$0xff]
  %v2073 = vld [vmem:[%s2017 + $0x1b8] sm:$0xff]
  %v2074 = vld [vmem:[%s2017 + $0x1c0] sm:$0xff]
  %v2075 = vld [vmem:[%s2017 + $0x1c8] sm:$0xff]
  %v2076 = vld [vmem:[%s2017 + $0x1d0] sm:$0xff]
  %v2077 = vld [vmem:[%s2017 + $0x1d8] sm:$0xff]
  %v2078 = vld [vmem:[%s2017 + $0x1e0] sm:$0xff]
  %v2079 = vld [vmem:[%s2017 + $0x1e8] sm:$0xff]
  %v2080 = vld [vmem:[%s2017 + $0x1f0] sm:$0xff]
  %v2081 = vld [vmem:[%s2017 + $0x1f8] sm:$0xff]
  %s2082 = scalar_lea.vmem %s5, 4
  %v2083 = vld [vmem:[%s2082] sm:$0xf]
  %v2085 = vlaneseq
  %v2086 = vshrl.u32 %v2085, 7
  %v2087 = vsub.s32 0, %v2086
  %v2088 = vrot.slane %v2083, %v2087
  %v2089 = vlaneseq
  %v2090 = vshrl.u32 %v2089, 7
  %v2091 = vsub.s32 1, %v2090
  %v2092 = vrot.slane %v2083, %v2091
  %v2093 = vlaneseq
  %v2094 = vshrl.u32 %v2093, 7
  %v2095 = vsub.s32 2, %v2094
  %v2096 = vrot.slane %v2083, %v2095
  %v2097 = vlaneseq
  %v2098 = vshrl.u32 %v2097, 7
  %v2099 = vsub.s32 3, %v2098
  %v2100 = vrot.slane %v2083, %v2099
  %2105 = vmatprep.subr.mxu0 %v2079
  %2106 = vmatpush1.msra.mxu0 %v2078
  %2107 = vmatprep.subr.mxu0 %v2075
  %2108 = vmatpush1.msra.mxu0 %v2074
  %2109 = vmatprep.subr.mxu0 %v2071
  %2110 = vmatpush1.msra.mxu0 %v2070
  %2111 = vmatprep.subr.mxu0 %v2067
  %2112 = vmatpush1.msra.mxu0 %v2066
  %2113 = vmatprep.subr.mxu0 %v2063
  %2114 = vmatpush1.msra.mxu0 %v2062
  %2115 = vmatprep.subr.mxu0 %v2059
  %2116 = vmatpush1.msra.mxu0 %v2058
  %2117 = vmatprep.subr.mxu0 %v2055
  %2118 = vmatpush1.msra.mxu0 %v2054
  %2119 = vmatprep.subr.mxu0 %v2051
  %2120 = vmatpush1.msra.mxu0 %v2050
  %2121 = vmatprep.subr.mxu0 %v2047
  %2122 = vmatpush1.msra.mxu0 %v2046
  %2123 = vmatprep.subr.mxu0 %v2043
  %2124 = vmatpush1.msra.mxu0 %v2042
  %2125 = vmatprep.subr.mxu0 %v2039
  %2126 = vmatpush1.msra.mxu0 %v2038
  %2127 = vmatprep.subr.mxu0 %v2035
  %2128 = vmatpush1.msra.mxu0 %v2034
  %2129 = vmatprep.subr.mxu0 %v2031
  %2130 = vmatpush1.msra.mxu0 %v2030
  %2131 = vmatprep.subr.mxu0 %v2027
  %2132 = vmatpush1.msra.mxu0 %v2026
  %2133 = vmatprep.subr.mxu0 %v2023
  %2134 = vmatpush1.msra.mxu0 %v2022
  %2135 = vmatprep.subr.mxu0 %v2019
  %2136 = vmatpush1.msra.mxu0 %v2018
  %2137 = vmatprep.subr.mxu0 0.0
  %2138 = vmatpush2.msra.mxu0 0.0
  %2139 = vmatprep.subr.mxu0 0.0
  %2140 = vmatpush2.msra.mxu0 0.0
  %2141 = vmatprep.subr.mxu0 0.0
  %2142 = vmatpush2.msra.mxu0 0.0
  %2143 = vmatprep.subr.mxu0 0.0
  %2144 = vmatpush2.msra.mxu0 0.0
  %2145 = vmatprep.subr.mxu0 0.0
  %2146 = vmatpush2.msra.mxu0 0.0
  %2147 = vmatprep.subr.mxu0 0.0
  %2148 = vmatpush2.msra.mxu0 0.0
  %2149 = vmatprep.subr.mxu0 0.0
  %2150 = vmatpush2.msra.mxu0 0.0
  %2151 = vmatprep.subr.mxu0 0.0
  %2152 = vmatpush2.msra.mxu0 0.0
  %2153 = vmatprep.subr.mxu0 0.0
  %2154 = vmatpush2.msra.mxu0 0.0
  %2155 = vmatprep.subr.mxu0 0.0
  %2156 = vmatpush2.msra.mxu0 0.0
  %2157 = vmatprep.subr.mxu0 0.0
  %2158 = vmatpush2.msra.mxu0 0.0
  %2159 = vmatprep.subr.mxu0 0.0
  %2160 = vmatpush2.msra.mxu0 0.0
  %2161 = vmatprep.subr.mxu0 0.0
  %2162 = vmatpush2.msra.mxu0 0.0
  %2163 = vmatprep.subr.mxu0 0.0
  %2164 = vmatpush2.msra.mxu0 0.0
  %2165 = vmatprep.subr.mxu0 0.0
  %2166 = vmatpush2.msra.mxu0 0.0
  %2167 = vmatprep.subr.mxu0 0.0
  %2168 = vmatpush2.msra.mxu0 0.0
  %2169 = vmatprep.mubr.f32.mxu0 0.0
  %2170 = vmatmul.mubr.f32.gmra.mxu0 %v2009
  %v2171 = vpop.f32.mrf.mxu0
  %v2172 = vadd.f32 %v2088, %v2171
  %v2173 = vpop.f32.mrf.mxu0
  %v2174 = vadd.f32 %v2092, %v2173
  %2175 = vmatprep.mubr.f32.mxu0 0.0
  %2176 = vmatmul.mubr.f32.gmra.mxu0 %v2010
  %v2177 = vpop.f32.mrf.mxu0
  %v2178 = vadd.f32 %v2088, %v2177
  %v2179 = vpop.f32.mrf.mxu0
  %v2180 = vadd.f32 %v2092, %v2179
  %2181 = vmatprep.mubr.f32.mxu0 0.0
  %2182 = vmatmul.mubr.f32.gmra.mxu0 %v2011
  %v2183 = vpop.f32.mrf.mxu0
  %v2184 = vadd.f32 %v2088, %v2183
  %v2185 = vpop.f32.mrf.mxu0
  %v2186 = vadd.f32 %v2092, %v2185
  %2187 = vmatprep.mubr.f32.mxu0 0.0
  %2188 = vmatmul.mubr.f32.gmra.mxu0 %v2012
  %v2189 = vpop.f32.mrf.mxu0
  %v2190 = vadd.f32 %v2088, %v2189
  %v2191 = vpop.f32.mrf.mxu0
  %v2192 = vadd.f32 %v2092, %v2191
  %2193 = vmatprep.mubr.f32.mxu0 0.0
  %2194 = vmatmul.mubr.f32.gmra.mxu0 %v2013
  %v2195 = vpop.f32.mrf.mxu0
  %v2196 = vadd.f32 %v2088, %v2195
  %v2197 = vpop.f32.mrf.mxu0
  %v2198 = vadd.f32 %v2092, %v2197
  %2199 = vmatprep.mubr.f32.mxu0 0.0
  %2200 = vmatmul.mubr.f32.gmra.mxu0 %v2014
  %v2201 = vpop.f32.mrf.mxu0
  %v2202 = vadd.f32 %v2088, %v2201
  %v2203 = vpop.f32.mrf.mxu0
  %v2204 = vadd.f32 %v2092, %v2203
  %2205 = vmatprep.mubr.f32.mxu0 0.0
  %2206 = vmatmul.mubr.f32.gmra.mxu0 %v2015
  %v2207 = vpop.f32.mrf.mxu0
  %v2208 = vadd.f32 %v2088, %v2207
  %v2209 = vpop.f32.mrf.mxu0
  %v2210 = vadd.f32 %v2092, %v2209
  %2211 = vmatprep.mubr.f32.mxu0 0.0
  %2212 = vmatmul.mubr.f32.gmra.mxu0 %v2016
  %v2213 = vpop.f32.mrf.mxu0
  %v2214 = vadd.f32 %v2088, %v2213
  %v2215 = vpop.f32.mrf.mxu0
  %v2216 = vadd.f32 %v2092, %v2215
  %2217 = vdwg.mxu0
  %2218 = vmatprep.subr.mxu0 %v2081
  %2219 = vmatpush1.msra.mxu0 %v2080
  %2220 = vmatprep.subr.mxu0 %v2077
  %2221 = vmatpush1.msra.mxu0 %v2076
  %2222 = vmatprep.subr.mxu0 %v2073
  %2223 = vmatpush1.msra.mxu0 %v2072
  %2224 = vmatprep.subr.mxu0 %v2069
  %2225 = vmatpush1.msra.mxu0 %v2068
  %2226 = vmatprep.subr.mxu0 %v2065
  %2227 = vmatpush1.msra.mxu0 %v2064
  %2228 = vmatprep.subr.mxu0 %v2061
  %2229 = vmatpush1.msra.mxu0 %v2060
  %2230 = vmatprep.subr.mxu0 %v2057
  %2231 = vmatpush1.msra.mxu0 %v2056
  %2232 = vmatprep.subr.mxu0 %v2053
  %2233 = vmatpush1.msra.mxu0 %v2052
  %2234 = vmatprep.subr.mxu0 %v2049
  %2235 = vmatpush1.msra.mxu0 %v2048
  %2236 = vmatprep.subr.mxu0 %v2045
  %2237 = vmatpush1.msra.mxu0 %v2044
  %2238 = vmatprep.subr.mxu0 %v2041
  %2239 = vmatpush1.msra.mxu0 %v2040
  %2240 = vmatprep.subr.mxu0 %v2037
  %2241 = vmatpush1.msra.mxu0 %v2036
  %2242 = vmatprep.subr.mxu0 %v2033
  %2243 = vmatpush1.msra.mxu0 %v2032
  %2244 = vmatprep.subr.mxu0 %v2029
  %2245 = vmatpush1.msra.mxu0 %v2028
  %2246 = vmatprep.subr.mxu0 %v2025
  %2247 = vmatpush1.msra.mxu0 %v2024
  %2248 = vmatprep.subr.mxu0 %v2021
  %2249 = vmatpush1.msra.mxu0 %v2020
  %2250 = vmatprep.subr.mxu0 0.0
  %2251 = vmatpush2.msra.mxu0 0.0
  %2252 = vmatprep.subr.mxu0 0.0
  %2253 = vmatpush2.msra.mxu0 0.0
  %2254 = vmatprep.subr.mxu0 0.0
  %2255 = vmatpush2.msra.mxu0 0.0
  %2256 = vmatprep.subr.mxu0 0.0
  %2257 = vmatpush2.msra.mxu0 0.0
  %2258 = vmatprep.subr.mxu0 0.0
  %2259 = vmatpush2.msra.mxu0 0.0
  %2260 = vmatprep.subr.mxu0 0.0
  %2261 = vmatpush2.msra.mxu0 0.0
  %2262 = vmatprep.subr.mxu0 0.0
  %2263 = vmatpush2.msra.mxu0 0.0
  %2264 = vmatprep.subr.mxu0 0.0
  %2265 = vmatpush2.msra.mxu0 0.0
  %2266 = vmatprep.subr.mxu0 0.0
  %2267 = vmatpush2.msra.mxu0 0.0
  %2268 = vmatprep.subr.mxu0 0.0
  %2269 = vmatpush2.msra.mxu0 0.0
  %2270 = vmatprep.subr.mxu0 0.0
  %2271 = vmatpush2.msra.mxu0 0.0
  %2272 = vmatprep.subr.mxu0 0.0
  %2273 = vmatpush2.msra.mxu0 0.0
  %2274 = vmatprep.subr.mxu0 0.0
  %2275 = vmatpush2.msra.mxu0 0.0
  %2276 = vmatprep.subr.mxu0 0.0
  %2277 = vmatpush2.msra.mxu0 0.0
  %2278 = vmatprep.subr.mxu0 0.0
  %2279 = vmatpush2.msra.mxu0 0.0
  %2280 = vmatprep.subr.mxu0 0.0
  %2281 = vmatpush2.msra.mxu0 0.0
  %2282 = vmatprep.mubr.f32.mxu0 0.0
  %2283 = vmatmul.mubr.f32.gmra.mxu0 %v2009
  %v2284 = vpop.f32.mrf.mxu0
  %v2285 = vadd.f32 %v2096, %v2284
  %v2286 = vpop.f32.mrf.mxu0
  %v2287 = vadd.f32 %v2100, %v2286
  %2288 = vmatprep.mubr.f32.mxu0 0.0
  %2289 = vmatmul.mubr.f32.gmra.mxu0 %v2010
  %v2290 = vpop.f32.mrf.mxu0
  %v2291 = vadd.f32 %v2096, %v2290
  %v2292 = vpop.f32.mrf.mxu0
  %v2293 = vadd.f32 %v2100, %v2292
  %2294 = vmatprep.mubr.f32.mxu0 0.0
  %2295 = vmatmul.mubr.f32.gmra.mxu0 %v2011
  %v2296 = vpop.f32.mrf.mxu0
  %v2297 = vadd.f32 %v2096, %v2296
  %v2298 = vpop.f32.mrf.mxu0
  %v2299 = vadd.f32 %v2100, %v2298
  %2300 = vmatprep.mubr.f32.mxu0 0.0
  %2301 = vmatmul.mubr.f32.gmra.mxu0 %v2012
  %v2302 = vpop.f32.mrf.mxu0
  %v2303 = vadd.f32 %v2096, %v2302
  %v2304 = vpop.f32.mrf.mxu0
  %v2305 = vadd.f32 %v2100, %v2304
  %2306 = vmatprep.mubr.f32.mxu0 0.0
  %2307 = vmatmul.mubr.f32.gmra.mxu0 %v2013
  %v2308 = vpop.f32.mrf.mxu0
  %v2309 = vadd.f32 %v2096, %v2308
  %v2310 = vpop.f32.mrf.mxu0
  %v2311 = vadd.f32 %v2100, %v2310
  %2312 = vmatprep.mubr.f32.mxu0 0.0
  %2313 = vmatmul.mubr.f32.gmra.mxu0 %v2014
  %v2314 = vpop.f32.mrf.mxu0
  %v2315 = vadd.f32 %v2096, %v2314
  %v2316 = vpop.f32.mrf.mxu0
  %v2317 = vadd.f32 %v2100, %v2316
  %2318 = vmatprep.mubr.f32.mxu0 0.0
  %2319 = vmatmul.mubr.f32.gmra.mxu0 %v2015
  %v2320 = vpop.f32.mrf.mxu0
  %v2321 = vadd.f32 %v2096, %v2320
  %v2322 = vpop.f32.mrf.mxu0
  %v2323 = vadd.f32 %v2100, %v2322
  %2324 = vmatprep.mubr.f32.mxu0 0.0
  %2325 = vmatmul.mubr.f32.gmra.mxu0 %v2016
  %v2326 = vpop.f32.mrf.mxu0
  %v2327 = vadd.f32 %v2096, %v2326
  %v2328 = vpop.f32.mrf.mxu0
  %v2329 = vadd.f32 %v2100, %v2328
  %2330 = vdwg.mxu0
  %2331 = vst [vmem:[#allocation3] sm:$0xff] %v2172
  %2332 = vst [vmem:[#allocation3 + $0x8] sm:$0xff] %v2174
  %2333 = vst [vmem:[#allocation3 + $0x10] sm:$0xff] %v2285
  %2334 = vst [vmem:[#allocation3 + $0x18] sm:$0xff] %v2287
  %2335 = vst [vmem:[#allocation3 + $0x20] sm:$0xff] %v2178
  %2336 = vst [vmem:[#allocation3 + $0x28] sm:$0xff] %v2180
  %2337 = vst [vmem:[#allocation3 + $0x30] sm:$0xff] %v2291
  %2338 = vst [vmem:[#allocation3 + $0x38] sm:$0xff] %v2293
  %2339 = vst [vmem:[#allocation3 + $0x40] sm:$0xff] %v2184
  %2340 = vst [vmem:[#allocation3 + $0x48] sm:$0xff] %v2186
  %2341 = vst [vmem:[#allocation3 + $0x50] sm:$0xff] %v2297
  %2342 = vst [vmem:[#allocation3 + $0x58] sm:$0xff] %v2299
  %2343 = vst [vmem:[#allocation3 + $0x60] sm:$0xff] %v2190
  %2344 = vst [vmem:[#allocation3 + $0x68] sm:$0xff] %v2192
  %2345 = vst [vmem:[#allocation3 + $0x70] sm:$0xff] %v2303
  %2346 = vst [vmem:[#allocation3 + $0x78] sm:$0xff] %v2305
  %2347 = vst [vmem:[#allocation3 + $0x80] sm:$0xff] %v2196
  %2348 = vst [vmem:[#allocation3 + $0x88] sm:$0xff] %v2198
  %2349 = vst [vmem:[#allocation3 + $0x90] sm:$0xff] %v2309
  %2350 = vst [vmem:[#allocation3 + $0x98] sm:$0xff] %v2311
  %2351 = vst [vmem:[#allocation3 + $0xa0] sm:$0xff] %v2202
  %2352 = vst [vmem:[#allocation3 + $0xa8] sm:$0xff] %v2204
  %2353 = vst [vmem:[#allocation3 + $0xb0] sm:$0xff] %v2315
  %2354 = vst [vmem:[#allocation3 + $0xb8] sm:$0xff] %v2317
  %2355 = vst [vmem:[#allocation3 + $0xc0] sm:$0xff] %v2208
  %2356 = vst [vmem:[#allocation3 + $0xc8] sm:$0xff] %v2210
  %2357 = vst [vmem:[#allocation3 + $0xd0] sm:$0xff] %v2321
  %2358 = vst [vmem:[#allocation3 + $0xd8] sm:$0xff] %v2323
  %2359 = vst [vmem:[#allocation3 + $0xe0] sm:$0xff] %v2214
  %2360 = vst [vmem:[#allocation3 + $0xe8] sm:$0xff] %v2216
  %2361 = vst [vmem:[#allocation3 + $0xf0] sm:$0xff] %v2327
  %2362 = vst [vmem:[#allocation3 + $0xf8] sm:$0xff] %v2329
  %s2363 = scalar_lea.vmem %s4, 512
  %v2364 = vld [vmem:[%s2363] sm:$0xff]
  %v2365 = vld [vmem:[%s2363 + $0x8] sm:$0xff]
  %v2366 = vld [vmem:[%s2363 + $0x10] sm:$0xff]
  %v2367 = vld [vmem:[%s2363 + $0x18] sm:$0xff]
  %v2368 = vld [vmem:[%s2363 + $0x20] sm:$0xff]
  %v2369 = vld [vmem:[%s2363 + $0x28] sm:$0xff]
  %v2370 = vld [vmem:[%s2363 + $0x30] sm:$0xff]
  %v2371 = vld [vmem:[%s2363 + $0x38] sm:$0xff]
  %v2372 = vld [vmem:[%s2363 + $0x40] sm:$0xff]
  %v2373 = vld [vmem:[%s2363 + $0x48] sm:$0xff]
  %v2374 = vld [vmem:[%s2363 + $0x50] sm:$0xff]
  %v2375 = vld [vmem:[%s2363 + $0x58] sm:$0xff]
  %v2376 = vld [vmem:[%s2363 + $0x60] sm:$0xff]
  %v2377 = vld [vmem:[%s2363 + $0x68] sm:$0xff]
  %v2378 = vld [vmem:[%s2363 + $0x70] sm:$0xff]
  %v2379 = vld [vmem:[%s2363 + $0x78] sm:$0xff]
  %v2380 = vld [vmem:[%s2363 + $0x80] sm:$0xff]
  %v2381 = vld [vmem:[%s2363 + $0x88] sm:$0xff]
  %v2382 = vld [vmem:[%s2363 + $0x90] sm:$0xff]
  %v2383 = vld [vmem:[%s2363 + $0x98] sm:$0xff]
  %v2384 = vld [vmem:[%s2363 + $0xa0] sm:$0xff]
  %v2385 = vld [vmem:[%s2363 + $0xa8] sm:$0xff]
  %v2386 = vld [vmem:[%s2363 + $0xb0] sm:$0xff]
  %v2387 = vld [vmem:[%s2363 + $0xb8] sm:$0xff]
  %v2388 = vld [vmem:[%s2363 + $0xc0] sm:$0xff]
  %v2389 = vld [vmem:[%s2363 + $0xc8] sm:$0xff]
  %v2390 = vld [vmem:[%s2363 + $0xd0] sm:$0xff]
  %v2391 = vld [vmem:[%s2363 + $0xd8] sm:$0xff]
  %v2392 = vld [vmem:[%s2363 + $0xe0] sm:$0xff]
  %v2393 = vld [vmem:[%s2363 + $0xe8] sm:$0xff]
  %v2394 = vld [vmem:[%s2363 + $0xf0] sm:$0xff]
  %v2395 = vld [vmem:[%s2363 + $0xf8] sm:$0xff]
  %v2396 = vld [vmem:[%s2363 + $0x100] sm:$0xff]
  %v2397 = vld [vmem:[%s2363 + $0x108] sm:$0xff]
  %v2398 = vld [vmem:[%s2363 + $0x110] sm:$0xff]
  %v2399 = vld [vmem:[%s2363 + $0x118] sm:$0xff]
  %v2400 = vld [vmem:[%s2363 + $0x120] sm:$0xff]
  %v2401 = vld [vmem:[%s2363 + $0x128] sm:$0xff]
  %v2402 = vld [vmem:[%s2363 + $0x130] sm:$0xff]
  %v2403 = vld [vmem:[%s2363 + $0x138] sm:$0xff]
  %v2404 = vld [vmem:[%s2363 + $0x140] sm:$0xff]
  %v2405 = vld [vmem:[%s2363 + $0x148] sm:$0xff]
  %v2406 = vld [vmem:[%s2363 + $0x150] sm:$0xff]
  %v2407 = vld [vmem:[%s2363 + $0x158] sm:$0xff]
  %v2408 = vld [vmem:[%s2363 + $0x160] sm:$0xff]
  %v2409 = vld [vmem:[%s2363 + $0x168] sm:$0xff]
  %v2410 = vld [vmem:[%s2363 + $0x170] sm:$0xff]
  %v2411 = vld [vmem:[%s2363 + $0x178] sm:$0xff]
  %v2412 = vld [vmem:[%s2363 + $0x180] sm:$0xff]
  %v2413 = vld [vmem:[%s2363 + $0x188] sm:$0xff]
  %v2414 = vld [vmem:[%s2363 + $0x190] sm:$0xff]
  %v2415 = vld [vmem:[%s2363 + $0x198] sm:$0xff]
  %v2416 = vld [vmem:[%s2363 + $0x1a0] sm:$0xff]
  %v2417 = vld [vmem:[%s2363 + $0x1a8] sm:$0xff]
  %v2418 = vld [vmem:[%s2363 + $0x1b0] sm:$0xff]
  %v2419 = vld [vmem:[%s2363 + $0x1b8] sm:$0xff]
  %v2420 = vld [vmem:[%s2363 + $0x1c0] sm:$0xff]
  %v2421 = vld [vmem:[%s2363 + $0x1c8] sm:$0xff]
  %v2422 = vld [vmem:[%s2363 + $0x1d0] sm:$0xff]
  %v2423 = vld [vmem:[%s2363 + $0x1d8] sm:$0xff]
  %v2424 = vld [vmem:[%s2363 + $0x1e0] sm:$0xff]
  %v2425 = vld [vmem:[%s2363 + $0x1e8] sm:$0xff]
  %v2426 = vld [vmem:[%s2363 + $0x1f0] sm:$0xff]
  %v2427 = vld [vmem:[%s2363 + $0x1f8] sm:$0xff]
  %v2428 = vld [vmem:[#allocation3] sm:$0xff]
  %v2429 = vld [vmem:[#allocation3 + $0x8] sm:$0xff]
  %v2430 = vld [vmem:[#allocation3 + $0x10] sm:$0xff]
  %v2431 = vld [vmem:[#allocation3 + $0x18] sm:$0xff]
  %2432 = vmatprep.subr.mxu0 %v2425
  %2433 = vmatpush1.msra.mxu0 %v2424
  %2434 = vmatprep.subr.mxu0 %v2421
  %2435 = vmatpush1.msra.mxu0 %v2420
  %2436 = vmatprep.subr.mxu0 %v2417
  %2437 = vmatpush1.msra.mxu0 %v2416
  %2438 = vmatprep.subr.mxu0 %v2413
  %2439 = vmatpush1.msra.mxu0 %v2412
  %2440 = vmatprep.subr.mxu0 %v2409
  %2441 = vmatpush1.msra.mxu0 %v2408
  %2442 = vmatprep.subr.mxu0 %v2405
  %2443 = vmatpush1.msra.mxu0 %v2404
  %2444 = vmatprep.subr.mxu0 %v2401
  %2445 = vmatpush1.msra.mxu0 %v2400
  %2446 = vmatprep.subr.mxu0 %v2397
  %2447 = vmatpush1.msra.mxu0 %v2396
  %2448 = vmatprep.subr.mxu0 %v2393
  %2449 = vmatpush1.msra.mxu0 %v2392
  %2450 = vmatprep.subr.mxu0 %v2389
  %2451 = vmatpush1.msra.mxu0 %v2388
  %2452 = vmatprep.subr.mxu0 %v2385
  %2453 = vmatpush1.msra.mxu0 %v2384
  %2454 = vmatprep.subr.mxu0 %v2381
  %2455 = vmatpush1.msra.mxu0 %v2380
  %2456 = vmatprep.subr.mxu0 %v2377
  %2457 = vmatpush1.msra.mxu0 %v2376
  %2458 = vmatprep.subr.mxu0 %v2373
  %2459 = vmatpush1.msra.mxu0 %v2372
  %2460 = vmatprep.subr.mxu0 %v2369
  %2461 = vmatpush1.msra.mxu0 %v2368
  %2462 = vmatprep.subr.mxu0 %v2365
  %2463 = vmatpush1.msra.mxu0 %v2364
  %2464 = vmatprep.subr.mxu0 0.0
  %2465 = vmatpush2.msra.mxu0 0.0
  %2466 = vmatprep.subr.mxu0 0.0
  %2467 = vmatpush2.msra.mxu0 0.0
  %2468 = vmatprep.subr.mxu0 0.0
  %2469 = vmatpush2.msra.mxu0 0.0
  %2470 = vmatprep.subr.mxu0 0.0
  %2471 = vmatpush2.msra.mxu0 0.0
  %2472 = vmatprep.subr.mxu0 0.0
  %2473 = vmatpush2.msra.mxu0 0.0
  %2474 = vmatprep.subr.mxu0 0.0
  %2475 = vmatpush2.msra.mxu0 0.0
  %2476 = vmatprep.subr.mxu0 0.0
  %2477 = vmatpush2.msra.mxu0 0.0
  %2478 = vmatprep.subr.mxu0 0.0
  %2479 = vmatpush2.msra.mxu0 0.0
  %2480 = vmatprep.subr.mxu0 0.0
  %2481 = vmatpush2.msra.mxu0 0.0
  %2482 = vmatprep.subr.mxu0 0.0
  %2483 = vmatpush2.msra.mxu0 0.0
  %2484 = vmatprep.subr.mxu0 0.0
  %2485 = vmatpush2.msra.mxu0 0.0
  %2486 = vmatprep.subr.mxu0 0.0
  %2487 = vmatpush2.msra.mxu0 0.0
  %2488 = vmatprep.subr.mxu0 0.0
  %2489 = vmatpush2.msra.mxu0 0.0
  %2490 = vmatprep.subr.mxu0 0.0
  %2491 = vmatpush2.msra.mxu0 0.0
  %2492 = vmatprep.subr.mxu0 0.0
  %2493 = vmatpush2.msra.mxu0 0.0
  %2494 = vmatprep.subr.mxu0 0.0
  %2495 = vmatpush2.msra.mxu0 0.0
  %2496 = vmatprep.mubr.f32.mxu0 0.0
  %2497 = vmatmul.mubr.f32.gmra.mxu0 0.0
  %v2498 = vpop.f32.mrf.mxu0
  %v2499 = vadd.f32 0.0, %v2498
  %v2500 = vpop.f32.mrf.mxu0
  %v2501 = vadd.f32 0.0, %v2500
  %2502 = vdwg.mxu0
  %2503 = vmatprep.subr.mxu0 %v2427
  %2504 = vmatpush1.msra.mxu0 %v2426
  %2505 = vmatprep.subr.mxu0 %v2423
  %2506 = vmatpush1.msra.mxu0 %v2422
  %2507 = vmatprep.subr.mxu0 %v2419
  %2508 = vmatpush1.msra.mxu0 %v2418
  %2509 = vmatprep.subr.mxu0 %v2415
  %2510 = vmatpush1.msra.mxu0 %v2414
  %2511 = vmatprep.subr.mxu0 %v2411
  %2512 = vmatpush1.msra.mxu0 %v2410
  %2513 = vmatprep.subr.mxu0 %v2407
  %2514 = vmatpush1.msra.mxu0 %v2406
  %2515 = vmatprep.subr.mxu0 %v2403
  %2516 = vmatpush1.msra.mxu0 %v2402
  %2517 = vmatprep.subr.mxu0 %v2399
  %2518 = vmatpush1.msra.mxu0 %v2398
  %2519 = vmatprep.subr.mxu0 %v2395
  %2520 = vmatpush1.msra.mxu0 %v2394
  %2521 = vmatprep.subr.mxu0 %v2391
  %2522 = vmatpush1.msra.mxu0 %v2390
  %2523 = vmatprep.subr.mxu0 %v2387
  %2524 = vmatpush1.msra.mxu0 %v2386
  %2525 = vmatprep.subr.mxu0 %v2383
  %2526 = vmatpush1.msra.mxu0 %v2382
  %2527 = vmatprep.subr.mxu0 %v2379
  %2528 = vmatpush1.msra.mxu0 %v2378
  %2529 = vmatprep.subr.mxu0 %v2375
  %2530 = vmatpush1.msra.mxu0 %v2374
  %2531 = vmatprep.subr.mxu0 %v2371
  %2532 = vmatpush1.msra.mxu0 %v2370
  %2533 = vmatprep.subr.mxu0 %v2367
  %2534 = vmatpush1.msra.mxu0 %v2366
  %2535 = vmatprep.subr.mxu0 0.0
  %2536 = vmatpush2.msra.mxu0 0.0
  %2537 = vmatprep.subr.mxu0 0.0
  %2538 = vmatpush2.msra.mxu0 0.0
  %2539 = vmatprep.subr.mxu0 0.0
  %2540 = vmatpush2.msra.mxu0 0.0
  %2541 = vmatprep.subr.mxu0 0.0
  %2542 = vmatpush2.msra.mxu0 0.0
  %2543 = vmatprep.subr.mxu0 0.0
  %2544 = vmatpush2.msra.mxu0 0.0
  %2545 = vmatprep.subr.mxu0 0.0
  %2546 = vmatpush2.msra.mxu0 0.0
  %2547 = vmatprep.subr.mxu0 0.0
  %2548 = vmatpush2.msra.mxu0 0.0
  %2549 = vmatprep.subr.mxu0 0.0
  %2550 = vmatpush2.msra.mxu0 0.0
  %2551 = vmatprep.subr.mxu0 0.0
  %2552 = vmatpush2.msra.mxu0 0.0
  %2553 = vmatprep.subr.mxu0 0.0
  %2554 = vmatpush2.msra.mxu0 0.0
  %2555 = vmatprep.subr.mxu0 0.0
  %2556 = vmatpush2.msra.mxu0 0.0
  %2557 = vmatprep.subr.mxu0 0.0
  %2558 = vmatpush2.msra.mxu0 0.0
  %2559 = vmatprep.subr.mxu0 0.0
  %2560 = vmatpush2.msra.mxu0 0.0
  %2561 = vmatprep.subr.mxu0 0.0
  %2562 = vmatpush2.msra.mxu0 0.0
  %2563 = vmatprep.subr.mxu0 0.0
  %2564 = vmatpush2.msra.mxu0 0.0
  %2565 = vmatprep.subr.mxu0 0.0
  %2566 = vmatpush2.msra.mxu0 0.0
  %2567 = vmatprep.mubr.f32.mxu0 0.0
  %2568 = vmatmul.mubr.f32.gmra.mxu0 0.0
  %v2569 = vpop.f32.mrf.mxu0
  %v2570 = vadd.f32 0.0, %v2569
  %v2571 = vpop.f32.mrf.mxu0
  %v2572 = vadd.f32 0.0, %v2571
  %2573 = vdwg.mxu0
  %v2574 = vadd.f32 %v2428, %v2499
  %v2575 = vadd.f32 %v2429, %v2501
  %v2576 = vadd.f32 %v2430, %v2570
  %v2577 = vadd.f32 %v2431, %v2572
  %v2578 = vxor.u32 %v2574, 2147483648
  %v2579 = vxor.u32 %v2575, 2147483648
  %v2580 = vxor.u32 %v2576, 2147483648
  %v2581 = vmul.f32 %v2578, 1.442695
  %v2582 = vpow.pop %v2581
  %v2583 = vmul.f32 %v2579, 1.442695
  %v2584 = vpow.pop %v2583
  %v2585 = vmul.f32 %v2580, 1.442695
  %v2586 = vpow.pop %v2585
  %v2587 = vadd.f32 %v2582, 1.0
  %v2588 = vadd.f32 %v2584, 1.0
  %v2589 = vadd.f32 %v2586, 1.0
  %v2590 = vrcp.pop %v2587
  %v2591 = vmul.f32 1.0, %v2590
  %v2592 = vrcp.pop %v2588
  %v2593 = vmul.f32 1.0, %v2592
  %v2594 = vrcp.pop %v2589
  %v2595 = vmul.f32 1.0, %v2594
  %v2596 = vtanh.pop %v2577
  %v2597 = vmul.f32 %v2593, 0.0
  %v2598 = vmul.f32 %v2591, %v2596
  %v2599 = vadd.f32 %v2597, %v2598
  %v2600 = vtanh.pop %v2599
  %v2601 = vmul.f32 %v2595, %v2600
  %v2602 = vld [vmem:[%s770] sm:$0xff]
  %v2603 = vld [vmem:[%s770 + $0x8] sm:$0xff]
  %v2604 = vld [vmem:[%s770 + $0x10] sm:$0xff]
  %v2605 = vld [vmem:[%s770 + $0x18] sm:$0xff]
  %2606 = vmatprep.subr.mxu0 %v2425
  %2607 = vmatpush1.msra.mxu0 %v2424
  %2608 = vmatprep.subr.mxu0 %v2421
  %2609 = vmatpush1.msra.mxu0 %v2420
  %2610 = vmatprep.subr.mxu0 %v2417
  %2611 = vmatpush1.msra.mxu0 %v2416
  %2612 = vmatprep.subr.mxu0 %v2413
  %2613 = vmatpush1.msra.mxu0 %v2412
  %2614 = vmatprep.subr.mxu0 %v2409
  %2615 = vmatpush1.msra.mxu0 %v2408
  %2616 = vmatprep.subr.mxu0 %v2405
  %2617 = vmatpush1.msra.mxu0 %v2404
  %2618 = vmatprep.subr.mxu0 %v2401
  %2619 = vmatpush1.msra.mxu0 %v2400
  %2620 = vmatprep.subr.mxu0 %v2397
  %2621 = vmatpush1.msra.mxu0 %v2396
  %2622 = vmatprep.subr.mxu0 %v2393
  %2623 = vmatpush1.msra.mxu0 %v2392
  %2624 = vmatprep.subr.mxu0 %v2389
  %2625 = vmatpush1.msra.mxu0 %v2388
  %2626 = vmatprep.subr.mxu0 %v2385
  %2627 = vmatpush1.msra.mxu0 %v2384
  %2628 = vmatprep.subr.mxu0 %v2381
  %2629 = vmatpush1.msra.mxu0 %v2380
  %2630 = vmatprep.subr.mxu0 %v2377
  %2631 = vmatpush1.msra.mxu0 %v2376
  %2632 = vmatprep.subr.mxu0 %v2373
  %2633 = vmatpush1.msra.mxu0 %v2372
  %2634 = vmatprep.subr.mxu0 %v2369
  %2635 = vmatpush1.msra.mxu0 %v2368
  %2636 = vmatprep.subr.mxu0 %v2365
  %2637 = vmatpush1.msra.mxu0 %v2364
  %2638 = vmatprep.subr.mxu0 0.0
  %2639 = vmatpush2.msra.mxu0 0.0
  %2640 = vmatprep.subr.mxu0 0.0
  %2641 = vmatpush2.msra.mxu0 0.0
  %2642 = vmatprep.subr.mxu0 0.0
  %2643 = vmatpush2.msra.mxu0 0.0
  %2644 = vmatprep.subr.mxu0 0.0
  %2645 = vmatpush2.msra.mxu0 0.0
  %2646 = vmatprep.subr.mxu0 0.0
  %2647 = vmatpush2.msra.mxu0 0.0
  %2648 = vmatprep.subr.mxu0 0.0
  %2649 = vmatpush2.msra.mxu0 0.0
  %2650 = vmatprep.subr.mxu0 0.0
  %2651 = vmatpush2.msra.mxu0 0.0
  %2652 = vmatprep.subr.mxu0 0.0
  %2653 = vmatpush2.msra.mxu0 0.0
  %2654 = vmatprep.subr.mxu0 0.0
  %2655 = vmatpush2.msra.mxu0 0.0
  %2656 = vmatprep.subr.mxu0 0.0
  %2657 = vmatpush2.msra.mxu0 0.0
  %2658 = vmatprep.subr.mxu0 0.0
  %2659 = vmatpush2.msra.mxu0 0.0
  %2660 = vmatprep.subr.mxu0 0.0
  %2661 = vmatpush2.msra.mxu0 0.0
  %2662 = vmatprep.subr.mxu0 0.0
  %2663 = vmatpush2.msra.mxu0 0.0
  %2664 = vmatprep.subr.mxu0 0.0
  %2665 = vmatpush2.msra.mxu0 0.0
  %2666 = vmatprep.subr.mxu0 0.0
  %2667 = vmatpush2.msra.mxu0 0.0
  %2668 = vmatprep.subr.mxu0 0.0
  %2669 = vmatpush2.msra.mxu0 0.0
  %2670 = vmatprep.mubr.f32.mxu0 0.0
  %2671 = vmatmul.mubr.f32.gmra.mxu0 %v2601
  %v2672 = vpop.f32.mrf.mxu0
  %v2673 = vadd.f32 0.0, %v2672
  %v2674 = vpop.f32.mrf.mxu0
  %v2675 = vadd.f32 0.0, %v2674
  %2676 = vdwg.mxu0
  %2677 = vmatprep.subr.mxu0 %v2427
  %2678 = vmatpush1.msra.mxu0 %v2426
  %2679 = vmatprep.subr.mxu0 %v2423
  %2680 = vmatpush1.msra.mxu0 %v2422
  %2681 = vmatprep.subr.mxu0 %v2419
  %2682 = vmatpush1.msra.mxu0 %v2418
  %2683 = vmatprep.subr.mxu0 %v2415
  %2684 = vmatpush1.msra.mxu0 %v2414
  %2685 = vmatprep.subr.mxu0 %v2411
  %2686 = vmatpush1.msra.mxu0 %v2410
  %2687 = vmatprep.subr.mxu0 %v2407
  %2688 = vmatpush1.msra.mxu0 %v2406
  %2689 = vmatprep.subr.mxu0 %v2403
  %2690 = vmatpush1.msra.mxu0 %v2402
  %2691 = vmatprep.subr.mxu0 %v2399
  %2692 = vmatpush1.msra.mxu0 %v2398
  %2693 = vmatprep.subr.mxu0 %v2395
  %2694 = vmatpush1.msra.mxu0 %v2394
  %2695 = vmatprep.subr.mxu0 %v2391
  %2696 = vmatpush1.msra.mxu0 %v2390
  %2697 = vmatprep.subr.mxu0 %v2387
  %2698 = vmatpush1.msra.mxu0 %v2386
  %2699 = vmatprep.subr.mxu0 %v2383
  %2700 = vmatpush1.msra.mxu0 %v2382
  %2701 = vmatprep.subr.mxu0 %v2379
  %2702 = vmatpush1.msra.mxu0 %v2378
  %2703 = vmatprep.subr.mxu0 %v2375
  %2704 = vmatpush1.msra.mxu0 %v2374
  %2705 = vmatprep.subr.mxu0 %v2371
  %2706 = vmatpush1.msra.mxu0 %v2370
  %2707 = vmatprep.subr.mxu0 %v2367
  %2708 = vmatpush1.msra.mxu0 %v2366
  %2709 = vmatprep.subr.mxu0 0.0
  %2710 = vmatpush2.msra.mxu0 0.0
  %2711 = vmatprep.subr.mxu0 0.0
  %2712 = vmatpush2.msra.mxu0 0.0
  %2713 = vmatprep.subr.mxu0 0.0
  %2714 = vmatpush2.msra.mxu0 0.0
  %2715 = vmatprep.subr.mxu0 0.0
  %2716 = vmatpush2.msra.mxu0 0.0
  %2717 = vmatprep.subr.mxu0 0.0
  %2718 = vmatpush2.msra.mxu0 0.0
  %2719 = vmatprep.subr.mxu0 0.0
  %2720 = vmatpush2.msra.mxu0 0.0
  %2721 = vmatprep.subr.mxu0 0.0
  %2722 = vmatpush2.msra.mxu0 0.0
  %2723 = vmatprep.subr.mxu0 0.0
  %2724 = vmatpush2.msra.mxu0 0.0
  %2725 = vmatprep.subr.mxu0 0.0
  %2726 = vmatpush2.msra.mxu0 0.0
  %2727 = vmatprep.subr.mxu0 0.0
  %2728 = vmatpush2.msra.mxu0 0.0
  %2729 = vmatprep.subr.mxu0 0.0
  %2730 = vmatpush2.msra.mxu0 0.0
  %2731 = vmatprep.subr.mxu0 0.0
  %2732 = vmatpush2.msra.mxu0 0.0
  %2733 = vmatprep.subr.mxu0 0.0
  %2734 = vmatpush2.msra.mxu0 0.0
  %2735 = vmatprep.subr.mxu0 0.0
  %2736 = vmatpush2.msra.mxu0 0.0
  %2737 = vmatprep.subr.mxu0 0.0
  %2738 = vmatpush2.msra.mxu0 0.0
  %2739 = vmatprep.subr.mxu0 0.0
  %2740 = vmatpush2.msra.mxu0 0.0
  %2741 = vmatprep.mubr.f32.mxu0 0.0
  %2742 = vmatmul.mubr.f32.gmra.mxu0 %v2601
  %v2743 = vpop.f32.mrf.mxu0
  %v2744 = vadd.f32 0.0, %v2743
  %v2745 = vpop.f32.mrf.mxu0
  %v2746 = vadd.f32 0.0, %v2745
  %2747 = vdwg.mxu0
  %v2748 = vadd.f32 %v2602, %v2673
  %v2749 = vadd.f32 %v2603, %v2675
  %v2750 = vadd.f32 %v2604, %v2744
  %v2751 = vadd.f32 %v2605, %v2746
  %v2752 = vxor.u32 %v2748, 2147483648
  %v2753 = vxor.u32 %v2749, 2147483648
  %v2754 = vxor.u32 %v2750, 2147483648
  %v2755 = vmul.f32 %v2752, 1.442695
  %v2756 = vpow.pop %v2755
  %v2757 = vmul.f32 %v2753, 1.442695
  %v2758 = vpow.pop %v2757
  %v2759 = vmul.f32 %v2754, 1.442695
  %v2760 = vpow.pop %v2759
  %v2761 = vadd.f32 %v2756, 1.0
  %v2762 = vadd.f32 %v2758, 1.0
  %v2763 = vadd.f32 %v2760, 1.0
  %v2764 = vrcp.pop %v2761
  %v2765 = vmul.f32 1.0, %v2764
  %v2766 = vrcp.pop %v2762
  %v2767 = vmul.f32 1.0, %v2766
  %v2768 = vrcp.pop %v2763
  %v2769 = vmul.f32 1.0, %v2768
  %v2770 = vtanh.pop %v2751
  %v2771 = vmul.f32 %v2767, %v2599
  %v2772 = vmul.f32 %v2765, %v2770
  %v2773 = vadd.f32 %v2771, %v2772
  %v2774 = vtanh.pop %v2773
  %v2775 = vmul.f32 %v2769, %v2774
  %v2776 = vld [vmem:[%s947] sm:$0xff]
  %v2777 = vld [vmem:[%s947 + $0x8] sm:$0xff]
  %v2778 = vld [vmem:[%s947 + $0x10] sm:$0xff]
  %v2779 = vld [vmem:[%s947 + $0x18] sm:$0xff]
  %2780 = vmatprep.subr.mxu0 %v2425
  %2781 = vmatpush1.msra.mxu0 %v2424
  %2782 = vmatprep.subr.mxu0 %v2421
  %2783 = vmatpush1.msra.mxu0 %v2420
  %2784 = vmatprep.subr.mxu0 %v2417
  %2785 = vmatpush1.msra.mxu0 %v2416
  %2786 = vmatprep.subr.mxu0 %v2413
  %2787 = vmatpush1.msra.mxu0 %v2412
  %2788 = vmatprep.subr.mxu0 %v2409
  %2789 = vmatpush1.msra.mxu0 %v2408
  %2790 = vmatprep.subr.mxu0 %v2405
  %2791 = vmatpush1.msra.mxu0 %v2404
  %2792 = vmatprep.subr.mxu0 %v2401
  %2793 = vmatpush1.msra.mxu0 %v2400
  %2794 = vmatprep.subr.mxu0 %v2397
  %2795 = vmatpush1.msra.mxu0 %v2396
  %2796 = vmatprep.subr.mxu0 %v2393
  %2797 = vmatpush1.msra.mxu0 %v2392
  %2798 = vmatprep.subr.mxu0 %v2389
  %2799 = vmatpush1.msra.mxu0 %v2388
  %2800 = vmatprep.subr.mxu0 %v2385
  %2801 = vmatpush1.msra.mxu0 %v2384
  %2802 = vmatprep.subr.mxu0 %v2381
  %2803 = vmatpush1.msra.mxu0 %v2380
  %2804 = vmatprep.subr.mxu0 %v2377
  %2805 = vmatpush1.msra.mxu0 %v2376
  %2806 = vmatprep.subr.mxu0 %v2373
  %2807 = vmatpush1.msra.mxu0 %v2372
  %2808 = vmatprep.subr.mxu0 %v2369
  %2809 = vmatpush1.msra.mxu0 %v2368
  %2810 = vmatprep.subr.mxu0 %v2365
  %2811 = vmatpush1.msra.mxu0 %v2364
  %2812 = vmatprep.subr.mxu0 0.0
  %2813 = vmatpush2.msra.mxu0 0.0
  %2814 = vmatprep.subr.mxu0 0.0
  %2815 = vmatpush2.msra.mxu0 0.0
  %2816 = vmatprep.subr.mxu0 0.0
  %2817 = vmatpush2.msra.mxu0 0.0
  %2818 = vmatprep.subr.mxu0 0.0
  %2819 = vmatpush2.msra.mxu0 0.0
  %2820 = vmatprep.subr.mxu0 0.0
  %2821 = vmatpush2.msra.mxu0 0.0
  %2822 = vmatprep.subr.mxu0 0.0
  %2823 = vmatpush2.msra.mxu0 0.0
  %2824 = vmatprep.subr.mxu0 0.0
  %2825 = vmatpush2.msra.mxu0 0.0
  %2826 = vmatprep.subr.mxu0 0.0
  %2827 = vmatpush2.msra.mxu0 0.0
  %2828 = vmatprep.subr.mxu0 0.0
  %2829 = vmatpush2.msra.mxu0 0.0
  %2830 = vmatprep.subr.mxu0 0.0
  %2831 = vmatpush2.msra.mxu0 0.0
  %2832 = vmatprep.subr.mxu0 0.0
  %2833 = vmatpush2.msra.mxu0 0.0
  %2834 = vmatprep.subr.mxu0 0.0
  %2835 = vmatpush2.msra.mxu0 0.0
  %2836 = vmatprep.subr.mxu0 0.0
  %2837 = vmatpush2.msra.mxu0 0.0
  %2838 = vmatprep.subr.mxu0 0.0
  %2839 = vmatpush2.msra.mxu0 0.0
  %2840 = vmatprep.subr.mxu0 0.0
  %2841 = vmatpush2.msra.mxu0 0.0
  %2842 = vmatprep.subr.mxu0 0.0
  %2843 = vmatpush2.msra.mxu0 0.0
  %2844 = vmatprep.mubr.f32.mxu0 0.0
  %2845 = vmatmul.mubr.f32.gmra.mxu0 %v2775
  %v2846 = vpop.f32.mrf.mxu0
  %v2847 = vadd.f32 0.0, %v2846
  %v2848 = vpop.f32.mrf.mxu0
  %v2849 = vadd.f32 0.0, %v2848
  %2850 = vdwg.mxu0
  %2851 = vmatprep.subr.mxu0 %v2427
  %2852 = vmatpush1.msra.mxu0 %v2426
  %2853 = vmatprep.subr.mxu0 %v2423
  %2854 = vmatpush1.msra.mxu0 %v2422
  %2855 = vmatprep.subr.mxu0 %v2419
  %2856 = vmatpush1.msra.mxu0 %v2418
  %2857 = vmatprep.subr.mxu0 %v2415
  %2858 = vmatpush1.msra.mxu0 %v2414
  %2859 = vmatprep.subr.mxu0 %v2411
  %2860 = vmatpush1.msra.mxu0 %v2410
  %2861 = vmatprep.subr.mxu0 %v2407
  %2862 = vmatpush1.msra.mxu0 %v2406
  %2863 = vmatprep.subr.mxu0 %v2403
  %2864 = vmatpush1.msra.mxu0 %v2402
  %2865 = vmatprep.subr.mxu0 %v2399
  %2866 = vmatpush1.msra.mxu0 %v2398
  %2867 = vmatprep.subr.mxu0 %v2395
  %2868 = vmatpush1.msra.mxu0 %v2394
  %2869 = vmatprep.subr.mxu0 %v2391
  %2870 = vmatpush1.msra.mxu0 %v2390
  %2871 = vmatprep.subr.mxu0 %v2387
  %2872 = vmatpush1.msra.mxu0 %v2386
  %2873 = vmatprep.subr.mxu0 %v2383
  %2874 = vmatpush1.msra.mxu0 %v2382
  %2875 = vmatprep.subr.mxu0 %v2379
  %2876 = vmatpush1.msra.mxu0 %v2378
  %2877 = vmatprep.subr.mxu0 %v2375
  %2878 = vmatpush1.msra.mxu0 %v2374
  %2879 = vmatprep.subr.mxu0 %v2371
  %2880 = vmatpush1.msra.mxu0 %v2370
  %2881 = vmatprep.subr.mxu0 %v2367
  %2882 = vmatpush1.msra.mxu0 %v2366
  %2883 = vmatprep.subr.mxu0 0.0
  %2884 = vmatpush2.msra.mxu0 0.0
  %2885 = vmatprep.subr.mxu0 0.0
  %2886 = vmatpush2.msra.mxu0 0.0
  %2887 = vmatprep.subr.mxu0 0.0
  %2888 = vmatpush2.msra.mxu0 0.0
  %2889 = vmatprep.subr.mxu0 0.0
  %2890 = vmatpush2.msra.mxu0 0.0
  %2891 = vmatprep.subr.mxu0 0.0
  %2892 = vmatpush2.msra.mxu0 0.0
  %2893 = vmatprep.subr.mxu0 0.0
  %2894 = vmatpush2.msra.mxu0 0.0
  %2895 = vmatprep.subr.mxu0 0.0
  %2896 = vmatpush2.msra.mxu0 0.0
  %2897 = vmatprep.subr.mxu0 0.0
  %2898 = vmatpush2.msra.mxu0 0.0
  %2899 = vmatprep.subr.mxu0 0.0
  %2900 = vmatpush2.msra.mxu0 0.0
  %2901 = vmatprep.subr.mxu0 0.0
  %2902 = vmatpush2.msra.mxu0 0.0
  %2903 = vmatprep.subr.mxu0 0.0
  %2904 = vmatpush2.msra.mxu0 0.0
  %2905 = vmatprep.subr.mxu0 0.0
  %2906 = vmatpush2.msra.mxu0 0.0
  %2907 = vmatprep.subr.mxu0 0.0
  %2908 = vmatpush2.msra.mxu0 0.0
  %2909 = vmatprep.subr.mxu0 0.0
  %2910 = vmatpush2.msra.mxu0 0.0
  %2911 = vmatprep.subr.mxu0 0.0
  %2912 = vmatpush2.msra.mxu0 0.0
  %2913 = vmatprep.subr.mxu0 0.0
  %2914 = vmatpush2.msra.mxu0 0.0
  %2915 = vmatprep.mubr.f32.mxu0 0.0
  %2916 = vmatmul.mubr.f32.gmra.mxu0 %v2775
  %v2917 = vpop.f32.mrf.mxu0
  %v2918 = vadd.f32 0.0, %v2917
  %v2919 = vpop.f32.mrf.mxu0
  %v2920 = vadd.f32 0.0, %v2919
  %2921 = vdwg.mxu0
  %v2922 = vadd.f32 %v2776, %v2847
  %v2923 = vadd.f32 %v2777, %v2849
  %v2924 = vadd.f32 %v2778, %v2918
  %v2925 = vadd.f32 %v2779, %v2920
  %v2926 = vxor.u32 %v2922, 2147483648
  %v2927 = vxor.u32 %v2923, 2147483648
  %v2928 = vxor.u32 %v2924, 2147483648
  %v2929 = vmul.f32 %v2926, 1.442695
  %v2930 = vpow.pop %v2929
  %v2931 = vmul.f32 %v2927, 1.442695
  %v2932 = vpow.pop %v2931
  %v2933 = vmul.f32 %v2928, 1.442695
  %v2934 = vpow.pop %v2933
  %v2935 = vadd.f32 %v2930, 1.0
  %v2936 = vadd.f32 %v2932, 1.0
  %v2937 = vadd.f32 %v2934, 1.0
  %v2938 = vrcp.pop %v2935
  %v2939 = vmul.f32 1.0, %v2938
  %v2940 = vrcp.pop %v2936
  %v2941 = vmul.f32 1.0, %v2940
  %v2942 = vrcp.pop %v2937
  %v2943 = vmul.f32 1.0, %v2942
  %v2944 = vtanh.pop %v2925
  %v2945 = vmul.f32 %v2941, %v2773
  %v2946 = vmul.f32 %v2939, %v2944
  %v2947 = vadd.f32 %v2945, %v2946
  %v2948 = vtanh.pop %v2947
  %v2949 = vmul.f32 %v2943, %v2948
  %v2950 = vld [vmem:[%s1124] sm:$0xff]
  %v2951 = vld [vmem:[%s1124 + $0x8] sm:$0xff]
  %v2952 = vld [vmem:[%s1124 + $0x10] sm:$0xff]
  %v2953 = vld [vmem:[%s1124 + $0x18] sm:$0xff]
  %2954 = vmatprep.subr.mxu0 %v2425
  %2955 = vmatpush1.msra.mxu0 %v2424
  %2956 = vmatprep.subr.mxu0 %v2421
  %2957 = vmatpush1.msra.mxu0 %v2420
  %2958 = vmatprep.subr.mxu0 %v2417
  %2959 = vmatpush1.msra.mxu0 %v2416
  %2960 = vmatprep.subr.mxu0 %v2413
  %2961 = vmatpush1.msra.mxu0 %v2412
  %2962 = vmatprep.subr.mxu0 %v2409
  %2963 = vmatpush1.msra.mxu0 %v2408
  %2964 = vmatprep.subr.mxu0 %v2405
  %2965 = vmatpush1.msra.mxu0 %v2404
  %2966 = vmatprep.subr.mxu0 %v2401
  %2967 = vmatpush1.msra.mxu0 %v2400
  %2968 = vmatprep.subr.mxu0 %v2397
  %2969 = vmatpush1.msra.mxu0 %v2396
  %2970 = vmatprep.subr.mxu0 %v2393
  %2971 = vmatpush1.msra.mxu0 %v2392
  %2972 = vmatprep.subr.mxu0 %v2389
  %2973 = vmatpush1.msra.mxu0 %v2388
  %2974 = vmatprep.subr.mxu0 %v2385
  %2975 = vmatpush1.msra.mxu0 %v2384
  %2976 = vmatprep.subr.mxu0 %v2381
  %2977 = vmatpush1.msra.mxu0 %v2380
  %2978 = vmatprep.subr.mxu0 %v2377
  %2979 = vmatpush1.msra.mxu0 %v2376
  %2980 = vmatprep.subr.mxu0 %v2373
  %2981 = vmatpush1.msra.mxu0 %v2372
  %2982 = vmatprep.subr.mxu0 %v2369
  %2983 = vmatpush1.msra.mxu0 %v2368
  %2984 = vmatprep.subr.mxu0 %v2365
  %2985 = vmatpush1.msra.mxu0 %v2364
  %2986 = vmatprep.subr.mxu0 0.0
  %2987 = vmatpush2.msra.mxu0 0.0
  %2988 = vmatprep.subr.mxu0 0.0
  %2989 = vmatpush2.msra.mxu0 0.0
  %2990 = vmatprep.subr.mxu0 0.0
  %2991 = vmatpush2.msra.mxu0 0.0
  %2992 = vmatprep.subr.mxu0 0.0
  %2993 = vmatpush2.msra.mxu0 0.0
  %2994 = vmatprep.subr.mxu0 0.0
  %2995 = vmatpush2.msra.mxu0 0.0
  %2996 = vmatprep.subr.mxu0 0.0
  %2997 = vmatpush2.msra.mxu0 0.0
  %2998 = vmatprep.subr.mxu0 0.0
  %2999 = vmatpush2.msra.mxu0 0.0
  %3000 = vmatprep.subr.mxu0 0.0
  %3001 = vmatpush2.msra.mxu0 0.0
  %3002 = vmatprep.subr.mxu0 0.0
  %3003 = vmatpush2.msra.mxu0 0.0
  %3004 = vmatprep.subr.mxu0 0.0
  %3005 = vmatpush2.msra.mxu0 0.0
  %3006 = vmatprep.subr.mxu0 0.0
  %3007 = vmatpush2.msra.mxu0 0.0
  %3008 = vmatprep.subr.mxu0 0.0
  %3009 = vmatpush2.msra.mxu0 0.0
  %3010 = vmatprep.subr.mxu0 0.0
  %3011 = vmatpush2.msra.mxu0 0.0
  %3012 = vmatprep.subr.mxu0 0.0
  %3013 = vmatpush2.msra.mxu0 0.0
  %3014 = vmatprep.subr.mxu0 0.0
  %3015 = vmatpush2.msra.mxu0 0.0
  %3016 = vmatprep.subr.mxu0 0.0
  %3017 = vmatpush2.msra.mxu0 0.0
  %3018 = vmatprep.mubr.f32.mxu0 0.0
  %3019 = vmatmul.mubr.f32.gmra.mxu0 %v2949
  %v3020 = vpop.f32.mrf.mxu0
  %v3021 = vadd.f32 0.0, %v3020
  %v3022 = vpop.f32.mrf.mxu0
  %v3023 = vadd.f32 0.0, %v3022
  %3024 = vdwg.mxu0
  %3025 = vmatprep.subr.mxu0 %v2427
  %3026 = vmatpush1.msra.mxu0 %v2426
  %3027 = vmatprep.subr.mxu0 %v2423
  %3028 = vmatpush1.msra.mxu0 %v2422
  %3029 = vmatprep.subr.mxu0 %v2419
  %3030 = vmatpush1.msra.mxu0 %v2418
  %3031 = vmatprep.subr.mxu0 %v2415
  %3032 = vmatpush1.msra.mxu0 %v2414
  %3033 = vmatprep.subr.mxu0 %v2411
  %3034 = vmatpush1.msra.mxu0 %v2410
  %3035 = vmatprep.subr.mxu0 %v2407
  %3036 = vmatpush1.msra.mxu0 %v2406
  %3037 = vmatprep.subr.mxu0 %v2403
  %3038 = vmatpush1.msra.mxu0 %v2402
  %3039 = vmatprep.subr.mxu0 %v2399
  %3040 = vmatpush1.msra.mxu0 %v2398
  %3041 = vmatprep.subr.mxu0 %v2395
  %3042 = vmatpush1.msra.mxu0 %v2394
  %3043 = vmatprep.subr.mxu0 %v2391
  %3044 = vmatpush1.msra.mxu0 %v2390
  %3045 = vmatprep.subr.mxu0 %v2387
  %3046 = vmatpush1.msra.mxu0 %v2386
  %3047 = vmatprep.subr.mxu0 %v2383
  %3048 = vmatpush1.msra.mxu0 %v2382
  %3049 = vmatprep.subr.mxu0 %v2379
  %3050 = vmatpush1.msra.mxu0 %v2378
  %3051 = vmatprep.subr.mxu0 %v2375
  %3052 = vmatpush1.msra.mxu0 %v2374
  %3053 = vmatprep.subr.mxu0 %v2371
  %3054 = vmatpush1.msra.mxu0 %v2370
  %3055 = vmatprep.subr.mxu0 %v2367
  %3056 = vmatpush1.msra.mxu0 %v2366
  %3057 = vmatprep.subr.mxu0 0.0
  %3058 = vmatpush2.msra.mxu0 0.0
  %3059 = vmatprep.subr.mxu0 0.0
  %3060 = vmatpush2.msra.mxu0 0.0
  %3061 = vmatprep.subr.mxu0 0.0
  %3062 = vmatpush2.msra.mxu0 0.0
  %3063 = vmatprep.subr.mxu0 0.0
  %3064 = vmatpush2.msra.mxu0 0.0
  %3065 = vmatprep.subr.mxu0 0.0
  %3066 = vmatpush2.msra.mxu0 0.0
  %3067 = vmatprep.subr.mxu0 0.0
  %3068 = vmatpush2.msra.mxu0 0.0
  %3069 = vmatprep.subr.mxu0 0.0
  %3070 = vmatpush2.msra.mxu0 0.0
  %3071 = vmatprep.subr.mxu0 0.0
  %3072 = vmatpush2.msra.mxu0 0.0
  %3073 = vmatprep.subr.mxu0 0.0
  %3074 = vmatpush2.msra.mxu0 0.0
  %3075 = vmatprep.subr.mxu0 0.0
  %3076 = vmatpush2.msra.mxu0 0.0
  %3077 = vmatprep.subr.mxu0 0.0
  %3078 = vmatpush2.msra.mxu0 0.0
  %3079 = vmatprep.subr.mxu0 0.0
  %3080 = vmatpush2.msra.mxu0 0.0
  %3081 = vmatprep.subr.mxu0 0.0
  %3082 = vmatpush2.msra.mxu0 0.0
  %3083 = vmatprep.subr.mxu0 0.0
  %3084 = vmatpush2.msra.mxu0 0.0
  %3085 = vmatprep.subr.mxu0 0.0
  %3086 = vmatpush2.msra.mxu0 0.0
  %3087 = vmatprep.subr.mxu0 0.0
  %3088 = vmatpush2.msra.mxu0 0.0
  %3089 = vmatprep.mubr.f32.mxu0 0.0
  %3090 = vmatmul.mubr.f32.gmra.mxu0 %v2949
  %v3091 = vpop.f32.mrf.mxu0
  %v3092 = vadd.f32 0.0, %v3091
  %v3093 = vpop.f32.mrf.mxu0
  %v3094 = vadd.f32 0.0, %v3093
  %3095 = vdwg.mxu0
  %v3096 = vadd.f32 %v2950, %v3021
  %v3097 = vadd.f32 %v2951, %v3023
  %v3098 = vadd.f32 %v2952, %v3092
  %v3099 = vadd.f32 %v2953, %v3094
  %v3100 = vxor.u32 %v3096, 2147483648
  %v3101 = vxor.u32 %v3097, 2147483648
  %v3102 = vxor.u32 %v3098, 2147483648
  %v3103 = vmul.f32 %v3100, 1.442695
  %v3104 = vpow.pop %v3103
  %v3105 = vmul.f32 %v3101, 1.442695
  %v3106 = vpow.pop %v3105
  %v3107 = vmul.f32 %v3102, 1.442695
  %v3108 = vpow.pop %v3107
  %v3109 = vadd.f32 %v3104, 1.0
  %v3110 = vadd.f32 %v3106, 1.0
  %v3111 = vadd.f32 %v3108, 1.0
  %v3112 = vrcp.pop %v3109
  %v3113 = vmul.f32 1.0, %v3112
  %v3114 = vrcp.pop %v3110
  %v3115 = vmul.f32 1.0, %v3114
  %v3116 = vrcp.pop %v3111
  %v3117 = vmul.f32 1.0, %v3116
  %v3118 = vtanh.pop %v3099
  %v3119 = vmul.f32 %v3115, %v2947
  %v3120 = vmul.f32 %v3113, %v3118
  %v3121 = vadd.f32 %v3119, %v3120
  %v3122 = vtanh.pop %v3121
  %v3123 = vmul.f32 %v3117, %v3122
  %v3124 = vld [vmem:[%s1301] sm:$0xff]
  %v3125 = vld [vmem:[%s1301 + $0x8] sm:$0xff]
  %v3126 = vld [vmem:[%s1301 + $0x10] sm:$0xff]
  %v3127 = vld [vmem:[%s1301 + $0x18] sm:$0xff]
  %3128 = vmatprep.subr.mxu0 %v2425
  %3129 = vmatpush1.msra.mxu0 %v2424
  %3130 = vmatprep.subr.mxu0 %v2421
  %3131 = vmatpush1.msra.mxu0 %v2420
  %3132 = vmatprep.subr.mxu0 %v2417
  %3133 = vmatpush1.msra.mxu0 %v2416
  %3134 = vmatprep.subr.mxu0 %v2413
  %3135 = vmatpush1.msra.mxu0 %v2412
  %3136 = vmatprep.subr.mxu0 %v2409
  %3137 = vmatpush1.msra.mxu0 %v2408
  %3138 = vmatprep.subr.mxu0 %v2405
  %3139 = vmatpush1.msra.mxu0 %v2404
  %3140 = vmatprep.subr.mxu0 %v2401
  %3141 = vmatpush1.msra.mxu0 %v2400
  %3142 = vmatprep.subr.mxu0 %v2397
  %3143 = vmatpush1.msra.mxu0 %v2396
  %3144 = vmatprep.subr.mxu0 %v2393
  %3145 = vmatpush1.msra.mxu0 %v2392
  %3146 = vmatprep.subr.mxu0 %v2389
  %3147 = vmatpush1.msra.mxu0 %v2388
  %3148 = vmatprep.subr.mxu0 %v2385
  %3149 = vmatpush1.msra.mxu0 %v2384
  %3150 = vmatprep.subr.mxu0 %v2381
  %3151 = vmatpush1.msra.mxu0 %v2380
  %3152 = vmatprep.subr.mxu0 %v2377
  %3153 = vmatpush1.msra.mxu0 %v2376
  %3154 = vmatprep.subr.mxu0 %v2373
  %3155 = vmatpush1.msra.mxu0 %v2372
  %3156 = vmatprep.subr.mxu0 %v2369
  %3157 = vmatpush1.msra.mxu0 %v2368
  %3158 = vmatprep.subr.mxu0 %v2365
  %3159 = vmatpush1.msra.mxu0 %v2364
  %3160 = vmatprep.subr.mxu0 0.0
  %3161 = vmatpush2.msra.mxu0 0.0
  %3162 = vmatprep.subr.mxu0 0.0
  %3163 = vmatpush2.msra.mxu0 0.0
  %3164 = vmatprep.subr.mxu0 0.0
  %3165 = vmatpush2.msra.mxu0 0.0
  %3166 = vmatprep.subr.mxu0 0.0
  %3167 = vmatpush2.msra.mxu0 0.0
  %3168 = vmatprep.subr.mxu0 0.0
  %3169 = vmatpush2.msra.mxu0 0.0
  %3170 = vmatprep.subr.mxu0 0.0
  %3171 = vmatpush2.msra.mxu0 0.0
  %3172 = vmatprep.subr.mxu0 0.0
  %3173 = vmatpush2.msra.mxu0 0.0
  %3174 = vmatprep.subr.mxu0 0.0
  %3175 = vmatpush2.msra.mxu0 0.0
  %3176 = vmatprep.subr.mxu0 0.0
  %3177 = vmatpush2.msra.mxu0 0.0
  %3178 = vmatprep.subr.mxu0 0.0
  %3179 = vmatpush2.msra.mxu0 0.0
  %3180 = vmatprep.subr.mxu0 0.0
  %3181 = vmatpush2.msra.mxu0 0.0
  %3182 = vmatprep.subr.mxu0 0.0
  %3183 = vmatpush2.msra.mxu0 0.0
  %3184 = vmatprep.subr.mxu0 0.0
  %3185 = vmatpush2.msra.mxu0 0.0
  %3186 = vmatprep.subr.mxu0 0.0
  %3187 = vmatpush2.msra.mxu0 0.0
  %3188 = vmatprep.subr.mxu0 0.0
  %3189 = vmatpush2.msra.mxu0 0.0
  %3190 = vmatprep.subr.mxu0 0.0
  %3191 = vmatpush2.msra.mxu0 0.0
  %3192 = vmatprep.mubr.f32.mxu0 0.0
  %3193 = vmatmul.mubr.f32.gmra.mxu0 %v3123
  %v3194 = vpop.f32.mrf.mxu0
  %v3195 = vadd.f32 0.0, %v3194
  %v3196 = vpop.f32.mrf.mxu0
  %v3197 = vadd.f32 0.0, %v3196
  %3198 = vdwg.mxu0
  %3199 = vmatprep.subr.mxu0 %v2427
  %3200 = vmatpush1.msra.mxu0 %v2426
  %3201 = vmatprep.subr.mxu0 %v2423
  %3202 = vmatpush1.msra.mxu0 %v2422
  %3203 = vmatprep.subr.mxu0 %v2419
  %3204 = vmatpush1.msra.mxu0 %v2418
  %3205 = vmatprep.subr.mxu0 %v2415
  %3206 = vmatpush1.msra.mxu0 %v2414
  %3207 = vmatprep.subr.mxu0 %v2411
  %3208 = vmatpush1.msra.mxu0 %v2410
  %3209 = vmatprep.subr.mxu0 %v2407
  %3210 = vmatpush1.msra.mxu0 %v2406
  %3211 = vmatprep.subr.mxu0 %v2403
  %3212 = vmatpush1.msra.mxu0 %v2402
  %3213 = vmatprep.subr.mxu0 %v2399
  %3214 = vmatpush1.msra.mxu0 %v2398
  %3215 = vmatprep.subr.mxu0 %v2395
  %3216 = vmatpush1.msra.mxu0 %v2394
  %3217 = vmatprep.subr.mxu0 %v2391
  %3218 = vmatpush1.msra.mxu0 %v2390
  %3219 = vmatprep.subr.mxu0 %v2387
  %3220 = vmatpush1.msra.mxu0 %v2386
  %3221 = vmatprep.subr.mxu0 %v2383
  %3222 = vmatpush1.msra.mxu0 %v2382
  %3223 = vmatprep.subr.mxu0 %v2379
  %3224 = vmatpush1.msra.mxu0 %v2378
  %3225 = vmatprep.subr.mxu0 %v2375
  %3226 = vmatpush1.msra.mxu0 %v2374
  %3227 = vmatprep.subr.mxu0 %v2371
  %3228 = vmatpush1.msra.mxu0 %v2370
  %3229 = vmatprep.subr.mxu0 %v2367
  %3230 = vmatpush1.msra.mxu0 %v2366
  %3231 = vmatprep.subr.mxu0 0.0
  %3232 = vmatpush2.msra.mxu0 0.0
  %3233 = vmatprep.subr.mxu0 0.0
  %3234 = vmatpush2.msra.mxu0 0.0
  %3235 = vmatprep.subr.mxu0 0.0
  %3236 = vmatpush2.msra.mxu0 0.0
  %3237 = vmatprep.subr.mxu0 0.0
  %3238 = vmatpush2.msra.mxu0 0.0
  %3239 = vmatprep.subr.mxu0 0.0
  %3240 = vmatpush2.msra.mxu0 0.0
  %3241 = vmatprep.subr.mxu0 0.0
  %3242 = vmatpush2.msra.mxu0 0.0
  %3243 = vmatprep.subr.mxu0 0.0
  %3244 = vmatpush2.msra.mxu0 0.0
  %3245 = vmatprep.subr.mxu0 0.0
  %3246 = vmatpush2.msra.mxu0 0.0
  %3247 = vmatprep.subr.mxu0 0.0
  %3248 = vmatpush2.msra.mxu0 0.0
  %3249 = vmatprep.subr.mxu0 0.0
  %3250 = vmatpush2.msra.mxu0 0.0
  %3251 = vmatprep.subr.mxu0 0.0
  %3252 = vmatpush2.msra.mxu0 0.0
  %3253 = vmatprep.subr.mxu0 0.0
  %3254 = vmatpush2.msra.mxu0 0.0
  %3255 = vmatprep.subr.mxu0 0.0
  %3256 = vmatpush2.msra.mxu0 0.0
  %3257 = vmatprep.subr.mxu0 0.0
  %3258 = vmatpush2.msra.mxu0 0.0
  %3259 = vmatprep.subr.mxu0 0.0
  %3260 = vmatpush2.msra.mxu0 0.0
  %3261 = vmatprep.subr.mxu0 0.0
  %3262 = vmatpush2.msra.mxu0 0.0
  %3263 = vmatprep.mubr.f32.mxu0 0.0
  %3264 = vmatmul.mubr.f32.gmra.mxu0 %v3123
  %v3265 = vpop.f32.mrf.mxu0
  %v3266 = vadd.f32 0.0, %v3265
  %v3267 = vpop.f32.mrf.mxu0
  %v3268 = vadd.f32 0.0, %v3267
  %3269 = vdwg.mxu0
  %v3270 = vadd.f32 %v3124, %v3195
  %v3271 = vadd.f32 %v3125, %v3197
  %v3272 = vadd.f32 %v3126, %v3266
  %v3273 = vadd.f32 %v3127, %v3268
  %v3274 = vxor.u32 %v3270, 2147483648
  %v3275 = vxor.u32 %v3271, 2147483648
  %v3276 = vxor.u32 %v3272, 2147483648
  %v3277 = vmul.f32 %v3274, 1.442695
  %v3278 = vpow.pop %v3277
  %v3279 = vmul.f32 %v3275, 1.442695
  %v3280 = vpow.pop %v3279
  %v3281 = vmul.f32 %v3276, 1.442695
  %v3282 = vpow.pop %v3281
  %v3283 = vadd.f32 %v3278, 1.0
  %v3284 = vadd.f32 %v3280, 1.0
  %v3285 = vadd.f32 %v3282, 1.0
  %v3286 = vrcp.pop %v3283
  %v3287 = vmul.f32 1.0, %v3286
  %v3288 = vrcp.pop %v3284
  %v3289 = vmul.f32 1.0, %v3288
  %v3290 = vrcp.pop %v3285
  %v3291 = vmul.f32 1.0, %v3290
  %v3292 = vtanh.pop %v3273
  %v3293 = vmul.f32 %v3289, %v3121
  %v3294 = vmul.f32 %v3287, %v3292
  %v3295 = vadd.f32 %v3293, %v3294
  %v3296 = vtanh.pop %v3295
  %v3297 = vmul.f32 %v3291, %v3296
  %v3298 = vld [vmem:[%s1478] sm:$0xff]
  %v3299 = vld [vmem:[%s1478 + $0x8] sm:$0xff]
  %v3300 = vld [vmem:[%s1478 + $0x10] sm:$0xff]
  %v3301 = vld [vmem:[%s1478 + $0x18] sm:$0xff]
  %3302 = vmatprep.subr.mxu0 %v2425
  %3303 = vmatpush1.msra.mxu0 %v2424
  %3304 = vmatprep.subr.mxu0 %v2421
  %3305 = vmatpush1.msra.mxu0 %v2420
  %3306 = vmatprep.subr.mxu0 %v2417
  %3307 = vmatpush1.msra.mxu0 %v2416
  %3308 = vmatprep.subr.mxu0 %v2413
  %3309 = vmatpush1.msra.mxu0 %v2412
  %3310 = vmatprep.subr.mxu0 %v2409
  %3311 = vmatpush1.msra.mxu0 %v2408
  %3312 = vmatprep.subr.mxu0 %v2405
  %3313 = vmatpush1.msra.mxu0 %v2404
  %3314 = vmatprep.subr.mxu0 %v2401
  %3315 = vmatpush1.msra.mxu0 %v2400
  %3316 = vmatprep.subr.mxu0 %v2397
  %3317 = vmatpush1.msra.mxu0 %v2396
  %3318 = vmatprep.subr.mxu0 %v2393
  %3319 = vmatpush1.msra.mxu0 %v2392
  %3320 = vmatprep.subr.mxu0 %v2389
  %3321 = vmatpush1.msra.mxu0 %v2388
  %3322 = vmatprep.subr.mxu0 %v2385
  %3323 = vmatpush1.msra.mxu0 %v2384
  %3324 = vmatprep.subr.mxu0 %v2381
  %3325 = vmatpush1.msra.mxu0 %v2380
  %3326 = vmatprep.subr.mxu0 %v2377
  %3327 = vmatpush1.msra.mxu0 %v2376
  %3328 = vmatprep.subr.mxu0 %v2373
  %3329 = vmatpush1.msra.mxu0 %v2372
  %3330 = vmatprep.subr.mxu0 %v2369
  %3331 = vmatpush1.msra.mxu0 %v2368
  %3332 = vmatprep.subr.mxu0 %v2365
  %3333 = vmatpush1.msra.mxu0 %v2364
  %3334 = vmatprep.subr.mxu0 0.0
  %3335 = vmatpush2.msra.mxu0 0.0
  %3336 = vmatprep.subr.mxu0 0.0
  %3337 = vmatpush2.msra.mxu0 0.0
  %3338 = vmatprep.subr.mxu0 0.0
  %3339 = vmatpush2.msra.mxu0 0.0
  %3340 = vmatprep.subr.mxu0 0.0
  %3341 = vmatpush2.msra.mxu0 0.0
  %3342 = vmatprep.subr.mxu0 0.0
  %3343 = vmatpush2.msra.mxu0 0.0
  %3344 = vmatprep.subr.mxu0 0.0
  %3345 = vmatpush2.msra.mxu0 0.0
  %3346 = vmatprep.subr.mxu0 0.0
  %3347 = vmatpush2.msra.mxu0 0.0
  %3348 = vmatprep.subr.mxu0 0.0
  %3349 = vmatpush2.msra.mxu0 0.0
  %3350 = vmatprep.subr.mxu0 0.0
  %3351 = vmatpush2.msra.mxu0 0.0
  %3352 = vmatprep.subr.mxu0 0.0
  %3353 = vmatpush2.msra.mxu0 0.0
  %3354 = vmatprep.subr.mxu0 0.0
  %3355 = vmatpush2.msra.mxu0 0.0
  %3356 = vmatprep.subr.mxu0 0.0
  %3357 = vmatpush2.msra.mxu0 0.0
  %3358 = vmatprep.subr.mxu0 0.0
  %3359 = vmatpush2.msra.mxu0 0.0
  %3360 = vmatprep.subr.mxu0 0.0
  %3361 = vmatpush2.msra.mxu0 0.0
  %3362 = vmatprep.subr.mxu0 0.0
  %3363 = vmatpush2.msra.mxu0 0.0
  %3364 = vmatprep.subr.mxu0 0.0
  %3365 = vmatpush2.msra.mxu0 0.0
  %3366 = vmatprep.mubr.f32.mxu0 0.0
  %3367 = vmatmul.mubr.f32.gmra.mxu0 %v3297
  %v3368 = vpop.f32.mrf.mxu0
  %v3369 = vadd.f32 0.0, %v3368
  %v3370 = vpop.f32.mrf.mxu0
  %v3371 = vadd.f32 0.0, %v3370
  %3372 = vdwg.mxu0
  %3373 = vmatprep.subr.mxu0 %v2427
  %3374 = vmatpush1.msra.mxu0 %v2426
  %3375 = vmatprep.subr.mxu0 %v2423
  %3376 = vmatpush1.msra.mxu0 %v2422
  %3377 = vmatprep.subr.mxu0 %v2419
  %3378 = vmatpush1.msra.mxu0 %v2418
  %3379 = vmatprep.subr.mxu0 %v2415
  %3380 = vmatpush1.msra.mxu0 %v2414
  %3381 = vmatprep.subr.mxu0 %v2411
  %3382 = vmatpush1.msra.mxu0 %v2410
  %3383 = vmatprep.subr.mxu0 %v2407
  %3384 = vmatpush1.msra.mxu0 %v2406
  %3385 = vmatprep.subr.mxu0 %v2403
  %3386 = vmatpush1.msra.mxu0 %v2402
  %3387 = vmatprep.subr.mxu0 %v2399
  %3388 = vmatpush1.msra.mxu0 %v2398
  %3389 = vmatprep.subr.mxu0 %v2395
  %3390 = vmatpush1.msra.mxu0 %v2394
  %3391 = vmatprep.subr.mxu0 %v2391
  %3392 = vmatpush1.msra.mxu0 %v2390
  %3393 = vmatprep.subr.mxu0 %v2387
  %3394 = vmatpush1.msra.mxu0 %v2386
  %3395 = vmatprep.subr.mxu0 %v2383
  %3396 = vmatpush1.msra.mxu0 %v2382
  %3397 = vmatprep.subr.mxu0 %v2379
  %3398 = vmatpush1.msra.mxu0 %v2378
  %3399 = vmatprep.subr.mxu0 %v2375
  %3400 = vmatpush1.msra.mxu0 %v2374
  %3401 = vmatprep.subr.mxu0 %v2371
  %3402 = vmatpush1.msra.mxu0 %v2370
  %3403 = vmatprep.subr.mxu0 %v2367
  %3404 = vmatpush1.msra.mxu0 %v2366
  %3405 = vmatprep.subr.mxu0 0.0
  %3406 = vmatpush2.msra.mxu0 0.0
  %3407 = vmatprep.subr.mxu0 0.0
  %3408 = vmatpush2.msra.mxu0 0.0
  %3409 = vmatprep.subr.mxu0 0.0
  %3410 = vmatpush2.msra.mxu0 0.0
  %3411 = vmatprep.subr.mxu0 0.0
  %3412 = vmatpush2.msra.mxu0 0.0
  %3413 = vmatprep.subr.mxu0 0.0
  %3414 = vmatpush2.msra.mxu0 0.0
  %3415 = vmatprep.subr.mxu0 0.0
  %3416 = vmatpush2.msra.mxu0 0.0
  %3417 = vmatprep.subr.mxu0 0.0
  %3418 = vmatpush2.msra.mxu0 0.0
  %3419 = vmatprep.subr.mxu0 0.0
  %3420 = vmatpush2.msra.mxu0 0.0
  %3421 = vmatprep.subr.mxu0 0.0
  %3422 = vmatpush2.msra.mxu0 0.0
  %3423 = vmatprep.subr.mxu0 0.0
  %3424 = vmatpush2.msra.mxu0 0.0
  %3425 = vmatprep.subr.mxu0 0.0
  %3426 = vmatpush2.msra.mxu0 0.0
  %3427 = vmatprep.subr.mxu0 0.0
  %3428 = vmatpush2.msra.mxu0 0.0
  %3429 = vmatprep.subr.mxu0 0.0
  %3430 = vmatpush2.msra.mxu0 0.0
  %3431 = vmatprep.subr.mxu0 0.0
  %3432 = vmatpush2.msra.mxu0 0.0
  %3433 = vmatprep.subr.mxu0 0.0
  %3434 = vmatpush2.msra.mxu0 0.0
  %3435 = vmatprep.subr.mxu0 0.0
  %3436 = vmatpush2.msra.mxu0 0.0
  %3437 = vmatprep.mubr.f32.mxu0 0.0
  %3438 = vmatmul.mubr.f32.gmra.mxu0 %v3297
  %v3439 = vpop.f32.mrf.mxu0
  %v3440 = vadd.f32 0.0, %v3439
  %v3441 = vpop.f32.mrf.mxu0
  %v3442 = vadd.f32 0.0, %v3441
  %3443 = vdwg.mxu0
  %v3444 = vadd.f32 %v3298, %v3369
  %v3445 = vadd.f32 %v3299, %v3371
  %v3446 = vadd.f32 %v3300, %v3440
  %v3447 = vadd.f32 %v3301, %v3442
  %v3448 = vxor.u32 %v3444, 2147483648
  %v3449 = vxor.u32 %v3445, 2147483648
  %v3450 = vxor.u32 %v3446, 2147483648
  %v3451 = vmul.f32 %v3448, 1.442695
  %v3452 = vpow.pop %v3451
  %v3453 = vmul.f32 %v3449, 1.442695
  %v3454 = vpow.pop %v3453
  %v3455 = vmul.f32 %v3450, 1.442695
  %v3456 = vpow.pop %v3455
  %v3457 = vadd.f32 %v3452, 1.0
  %v3458 = vadd.f32 %v3454, 1.0
  %v3459 = vadd.f32 %v3456, 1.0
  %v3460 = vrcp.pop %v3457
  %v3461 = vmul.f32 1.0, %v3460
  %v3462 = vrcp.pop %v3458
  %v3463 = vmul.f32 1.0, %v3462
  %v3464 = vrcp.pop %v3459
  %v3465 = vmul.f32 1.0, %v3464
  %v3466 = vtanh.pop %v3447
  %v3467 = vmul.f32 %v3463, %v3295
  %v3468 = vmul.f32 %v3461, %v3466
  %v3469 = vadd.f32 %v3467, %v3468
  %v3470 = vtanh.pop %v3469
  %v3471 = vmul.f32 %v3465, %v3470
  %v3472 = vld [vmem:[%s1655] sm:$0xff]
  %v3473 = vld [vmem:[%s1655 + $0x8] sm:$0xff]
  %v3474 = vld [vmem:[%s1655 + $0x10] sm:$0xff]
  %v3475 = vld [vmem:[%s1655 + $0x18] sm:$0xff]
  %3476 = vmatprep.subr.mxu0 %v2425
  %3477 = vmatpush1.msra.mxu0 %v2424
  %3478 = vmatprep.subr.mxu0 %v2421
  %3479 = vmatpush1.msra.mxu0 %v2420
  %3480 = vmatprep.subr.mxu0 %v2417
  %3481 = vmatpush1.msra.mxu0 %v2416
  %3482 = vmatprep.subr.mxu0 %v2413
  %3483 = vmatpush1.msra.mxu0 %v2412
  %3484 = vmatprep.subr.mxu0 %v2409
  %3485 = vmatpush1.msra.mxu0 %v2408
  %3486 = vmatprep.subr.mxu0 %v2405
  %3487 = vmatpush1.msra.mxu0 %v2404
  %3488 = vmatprep.subr.mxu0 %v2401
  %3489 = vmatpush1.msra.mxu0 %v2400
  %3490 = vmatprep.subr.mxu0 %v2397
  %3491 = vmatpush1.msra.mxu0 %v2396
  %3492 = vmatprep.subr.mxu0 %v2393
  %3493 = vmatpush1.msra.mxu0 %v2392
  %3494 = vmatprep.subr.mxu0 %v2389
  %3495 = vmatpush1.msra.mxu0 %v2388
  %3496 = vmatprep.subr.mxu0 %v2385
  %3497 = vmatpush1.msra.mxu0 %v2384
  %3498 = vmatprep.subr.mxu0 %v2381
  %3499 = vmatpush1.msra.mxu0 %v2380
  %3500 = vmatprep.subr.mxu0 %v2377
  %3501 = vmatpush1.msra.mxu0 %v2376
  %3502 = vmatprep.subr.mxu0 %v2373
  %3503 = vmatpush1.msra.mxu0 %v2372
  %3504 = vmatprep.subr.mxu0 %v2369
  %3505 = vmatpush1.msra.mxu0 %v2368
  %3506 = vmatprep.subr.mxu0 %v2365
  %3507 = vmatpush1.msra.mxu0 %v2364
  %3508 = vmatprep.subr.mxu0 0.0
  %3509 = vmatpush2.msra.mxu0 0.0
  %3510 = vmatprep.subr.mxu0 0.0
  %3511 = vmatpush2.msra.mxu0 0.0
  %3512 = vmatprep.subr.mxu0 0.0
  %3513 = vmatpush2.msra.mxu0 0.0
  %3514 = vmatprep.subr.mxu0 0.0
  %3515 = vmatpush2.msra.mxu0 0.0
  %3516 = vmatprep.subr.mxu0 0.0
  %3517 = vmatpush2.msra.mxu0 0.0
  %3518 = vmatprep.subr.mxu0 0.0
  %3519 = vmatpush2.msra.mxu0 0.0
  %3520 = vmatprep.subr.mxu0 0.0
  %3521 = vmatpush2.msra.mxu0 0.0
  %3522 = vmatprep.subr.mxu0 0.0
  %3523 = vmatpush2.msra.mxu0 0.0
  %3524 = vmatprep.subr.mxu0 0.0
  %3525 = vmatpush2.msra.mxu0 0.0
  %3526 = vmatprep.subr.mxu0 0.0
  %3527 = vmatpush2.msra.mxu0 0.0
  %3528 = vmatprep.subr.mxu0 0.0
  %3529 = vmatpush2.msra.mxu0 0.0
  %3530 = vmatprep.subr.mxu0 0.0
  %3531 = vmatpush2.msra.mxu0 0.0
  %3532 = vmatprep.subr.mxu0 0.0
  %3533 = vmatpush2.msra.mxu0 0.0
  %3534 = vmatprep.subr.mxu0 0.0
  %3535 = vmatpush2.msra.mxu0 0.0
  %3536 = vmatprep.subr.mxu0 0.0
  %3537 = vmatpush2.msra.mxu0 0.0
  %3538 = vmatprep.subr.mxu0 0.0
  %3539 = vmatpush2.msra.mxu0 0.0
  %3540 = vmatprep.mubr.f32.mxu0 0.0
  %3541 = vmatmul.mubr.f32.gmra.mxu0 %v3471
  %v3542 = vpop.f32.mrf.mxu0
  %v3543 = vadd.f32 0.0, %v3542
  %v3544 = vpop.f32.mrf.mxu0
  %v3545 = vadd.f32 0.0, %v3544
  %3546 = vdwg.mxu0
  %3547 = vmatprep.subr.mxu0 %v2427
  %3548 = vmatpush1.msra.mxu0 %v2426
  %3549 = vmatprep.subr.mxu0 %v2423
  %3550 = vmatpush1.msra.mxu0 %v2422
  %3551 = vmatprep.subr.mxu0 %v2419
  %3552 = vmatpush1.msra.mxu0 %v2418
  %3553 = vmatprep.subr.mxu0 %v2415
  %3554 = vmatpush1.msra.mxu0 %v2414
  %3555 = vmatprep.subr.mxu0 %v2411
  %3556 = vmatpush1.msra.mxu0 %v2410
  %3557 = vmatprep.subr.mxu0 %v2407
  %3558 = vmatpush1.msra.mxu0 %v2406
  %3559 = vmatprep.subr.mxu0 %v2403
  %3560 = vmatpush1.msra.mxu0 %v2402
  %3561 = vmatprep.subr.mxu0 %v2399
  %3562 = vmatpush1.msra.mxu0 %v2398
  %3563 = vmatprep.subr.mxu0 %v2395
  %3564 = vmatpush1.msra.mxu0 %v2394
  %3565 = vmatprep.subr.mxu0 %v2391
  %3566 = vmatpush1.msra.mxu0 %v2390
  %3567 = vmatprep.subr.mxu0 %v2387
  %3568 = vmatpush1.msra.mxu0 %v2386
  %3569 = vmatprep.subr.mxu0 %v2383
  %3570 = vmatpush1.msra.mxu0 %v2382
  %3571 = vmatprep.subr.mxu0 %v2379
  %3572 = vmatpush1.msra.mxu0 %v2378
  %3573 = vmatprep.subr.mxu0 %v2375
  %3574 = vmatpush1.msra.mxu0 %v2374
  %3575 = vmatprep.subr.mxu0 %v2371
  %3576 = vmatpush1.msra.mxu0 %v2370
  %3577 = vmatprep.subr.mxu0 %v2367
  %3578 = vmatpush1.msra.mxu0 %v2366
  %3579 = vmatprep.subr.mxu0 0.0
  %3580 = vmatpush2.msra.mxu0 0.0
  %3581 = vmatprep.subr.mxu0 0.0
  %3582 = vmatpush2.msra.mxu0 0.0
  %3583 = vmatprep.subr.mxu0 0.0
  %3584 = vmatpush2.msra.mxu0 0.0
  %3585 = vmatprep.subr.mxu0 0.0
  %3586 = vmatpush2.msra.mxu0 0.0
  %3587 = vmatprep.subr.mxu0 0.0
  %3588 = vmatpush2.msra.mxu0 0.0
  %3589 = vmatprep.subr.mxu0 0.0
  %3590 = vmatpush2.msra.mxu0 0.0
  %3591 = vmatprep.subr.mxu0 0.0
  %3592 = vmatpush2.msra.mxu0 0.0
  %3593 = vmatprep.subr.mxu0 0.0
  %3594 = vmatpush2.msra.mxu0 0.0
  %3595 = vmatprep.subr.mxu0 0.0
  %3596 = vmatpush2.msra.mxu0 0.0
  %3597 = vmatprep.subr.mxu0 0.0
  %3598 = vmatpush2.msra.mxu0 0.0
  %3599 = vmatprep.subr.mxu0 0.0
  %3600 = vmatpush2.msra.mxu0 0.0
  %3601 = vmatprep.subr.mxu0 0.0
  %3602 = vmatpush2.msra.mxu0 0.0
  %3603 = vmatprep.subr.mxu0 0.0
  %3604 = vmatpush2.msra.mxu0 0.0
  %3605 = vmatprep.subr.mxu0 0.0
  %3606 = vmatpush2.msra.mxu0 0.0
  %3607 = vmatprep.subr.mxu0 0.0
  %3608 = vmatpush2.msra.mxu0 0.0
  %3609 = vmatprep.subr.mxu0 0.0
  %3610 = vmatpush2.msra.mxu0 0.0
  %3611 = vmatprep.mubr.f32.mxu0 0.0
  %3612 = vmatmul.mubr.f32.gmra.mxu0 %v3471
  %v3613 = vpop.f32.mrf.mxu0
  %v3614 = vadd.f32 0.0, %v3613
  %v3615 = vpop.f32.mrf.mxu0
  %v3616 = vadd.f32 0.0, %v3615
  %3617 = vdwg.mxu0
  %v3618 = vadd.f32 %v3472, %v3543
  %v3619 = vadd.f32 %v3473, %v3545
  %v3620 = vadd.f32 %v3474, %v3614
  %v3621 = vadd.f32 %v3475, %v3616
  %v3622 = vxor.u32 %v3618, 2147483648
  %v3623 = vxor.u32 %v3619, 2147483648
  %v3624 = vxor.u32 %v3620, 2147483648
  %v3625 = vmul.f32 %v3622, 1.442695
  %v3626 = vpow.pop %v3625
  %v3627 = vmul.f32 %v3623, 1.442695
  %v3628 = vpow.pop %v3627
  %v3629 = vmul.f32 %v3624, 1.442695
  %v3630 = vpow.pop %v3629
  %v3631 = vadd.f32 %v3626, 1.0
  %v3632 = vadd.f32 %v3628, 1.0
  %v3633 = vadd.f32 %v3630, 1.0
  %v3634 = vrcp.pop %v3631
  %v3635 = vmul.f32 1.0, %v3634
  %v3636 = vrcp.pop %v3632
  %v3637 = vmul.f32 1.0, %v3636
  %v3638 = vrcp.pop %v3633
  %v3639 = vmul.f32 1.0, %v3638
  %v3640 = vtanh.pop %v3621
  %v3641 = vmul.f32 %v3637, %v3469
  %v3642 = vmul.f32 %v3635, %v3640
  %v3643 = vadd.f32 %v3641, %v3642
  %v3644 = vtanh.pop %v3643
  %v3645 = vmul.f32 %v3639, %v3644
  %v3646 = vld [vmem:[%s1832] sm:$0xff]
  %v3647 = vld [vmem:[%s1832 + $0x8] sm:$0xff]
  %v3648 = vld [vmem:[%s1832 + $0x10] sm:$0xff]
  %v3649 = vld [vmem:[%s1832 + $0x18] sm:$0xff]
  %3650 = vmatprep.subr.mxu0 %v2425
  %3651 = vmatpush1.msra.mxu0 %v2424
  %3652 = vmatprep.subr.mxu0 %v2421
  %3653 = vmatpush1.msra.mxu0 %v2420
  %3654 = vmatprep.subr.mxu0 %v2417
  %3655 = vmatpush1.msra.mxu0 %v2416
  %3656 = vmatprep.subr.mxu0 %v2413
  %3657 = vmatpush1.msra.mxu0 %v2412
  %3658 = vmatprep.subr.mxu0 %v2409
  %3659 = vmatpush1.msra.mxu0 %v2408
  %3660 = vmatprep.subr.mxu0 %v2405
  %3661 = vmatpush1.msra.mxu0 %v2404
  %3662 = vmatprep.subr.mxu0 %v2401
  %3663 = vmatpush1.msra.mxu0 %v2400
  %3664 = vmatprep.subr.mxu0 %v2397
  %3665 = vmatpush1.msra.mxu0 %v2396
  %3666 = vmatprep.subr.mxu0 %v2393
  %3667 = vmatpush1.msra.mxu0 %v2392
  %3668 = vmatprep.subr.mxu0 %v2389
  %3669 = vmatpush1.msra.mxu0 %v2388
  %3670 = vmatprep.subr.mxu0 %v2385
  %3671 = vmatpush1.msra.mxu0 %v2384
  %3672 = vmatprep.subr.mxu0 %v2381
  %3673 = vmatpush1.msra.mxu0 %v2380
  %3674 = vmatprep.subr.mxu0 %v2377
  %3675 = vmatpush1.msra.mxu0 %v2376
  %3676 = vmatprep.subr.mxu0 %v2373
  %3677 = vmatpush1.msra.mxu0 %v2372
  %3678 = vmatprep.subr.mxu0 %v2369
  %3679 = vmatpush1.msra.mxu0 %v2368
  %3680 = vmatprep.subr.mxu0 %v2365
  %3681 = vmatpush1.msra.mxu0 %v2364
  %3682 = vmatprep.subr.mxu0 0.0
  %3683 = vmatpush2.msra.mxu0 0.0
  %3684 = vmatprep.subr.mxu0 0.0
  %3685 = vmatpush2.msra.mxu0 0.0
  %3686 = vmatprep.subr.mxu0 0.0
  %3687 = vmatpush2.msra.mxu0 0.0
  %3688 = vmatprep.subr.mxu0 0.0
  %3689 = vmatpush2.msra.mxu0 0.0
  %3690 = vmatprep.subr.mxu0 0.0
  %3691 = vmatpush2.msra.mxu0 0.0
  %3692 = vmatprep.subr.mxu0 0.0
  %3693 = vmatpush2.msra.mxu0 0.0
  %3694 = vmatprep.subr.mxu0 0.0
  %3695 = vmatpush2.msra.mxu0 0.0
  %3696 = vmatprep.subr.mxu0 0.0
  %3697 = vmatpush2.msra.mxu0 0.0
  %3698 = vmatprep.subr.mxu0 0.0
  %3699 = vmatpush2.msra.mxu0 0.0
  %3700 = vmatprep.subr.mxu0 0.0
  %3701 = vmatpush2.msra.mxu0 0.0
  %3702 = vmatprep.subr.mxu0 0.0
  %3703 = vmatpush2.msra.mxu0 0.0
  %3704 = vmatprep.subr.mxu0 0.0
  %3705 = vmatpush2.msra.mxu0 0.0
  %3706 = vmatprep.subr.mxu0 0.0
  %3707 = vmatpush2.msra.mxu0 0.0
  %3708 = vmatprep.subr.mxu0 0.0
  %3709 = vmatpush2.msra.mxu0 0.0
  %3710 = vmatprep.subr.mxu0 0.0
  %3711 = vmatpush2.msra.mxu0 0.0
  %3712 = vmatprep.subr.mxu0 0.0
  %3713 = vmatpush2.msra.mxu0 0.0
  %3714 = vmatprep.mubr.f32.mxu0 0.0
  %3715 = vmatmul.mubr.f32.gmra.mxu0 %v3645
  %v3716 = vpop.f32.mrf.mxu0
  %v3717 = vadd.f32 0.0, %v3716
  %v3718 = vpop.f32.mrf.mxu0
  %v3719 = vadd.f32 0.0, %v3718
  %3720 = vdwg.mxu0
  %3721 = vmatprep.subr.mxu0 %v2427
  %3722 = vmatpush1.msra.mxu0 %v2426
  %3723 = vmatprep.subr.mxu0 %v2423
  %3724 = vmatpush1.msra.mxu0 %v2422
  %3725 = vmatprep.subr.mxu0 %v2419
  %3726 = vmatpush1.msra.mxu0 %v2418
  %3727 = vmatprep.subr.mxu0 %v2415
  %3728 = vmatpush1.msra.mxu0 %v2414
  %3729 = vmatprep.subr.mxu0 %v2411
  %3730 = vmatpush1.msra.mxu0 %v2410
  %3731 = vmatprep.subr.mxu0 %v2407
  %3732 = vmatpush1.msra.mxu0 %v2406
  %3733 = vmatprep.subr.mxu0 %v2403
  %3734 = vmatpush1.msra.mxu0 %v2402
  %3735 = vmatprep.subr.mxu0 %v2399
  %3736 = vmatpush1.msra.mxu0 %v2398
  %3737 = vmatprep.subr.mxu0 %v2395
  %3738 = vmatpush1.msra.mxu0 %v2394
  %3739 = vmatprep.subr.mxu0 %v2391
  %3740 = vmatpush1.msra.mxu0 %v2390
  %3741 = vmatprep.subr.mxu0 %v2387
  %3742 = vmatpush1.msra.mxu0 %v2386
  %3743 = vmatprep.subr.mxu0 %v2383
  %3744 = vmatpush1.msra.mxu0 %v2382
  %3745 = vmatprep.subr.mxu0 %v2379
  %3746 = vmatpush1.msra.mxu0 %v2378
  %3747 = vmatprep.subr.mxu0 %v2375
  %3748 = vmatpush1.msra.mxu0 %v2374
  %3749 = vmatprep.subr.mxu0 %v2371
  %3750 = vmatpush1.msra.mxu0 %v2370
  %3751 = vmatprep.subr.mxu0 %v2367
  %3752 = vmatpush1.msra.mxu0 %v2366
  %3753 = vmatprep.subr.mxu0 0.0
  %3754 = vmatpush2.msra.mxu0 0.0
  %3755 = vmatprep.subr.mxu0 0.0
  %3756 = vmatpush2.msra.mxu0 0.0
  %3757 = vmatprep.subr.mxu0 0.0
  %3758 = vmatpush2.msra.mxu0 0.0
  %3759 = vmatprep.subr.mxu0 0.0
  %3760 = vmatpush2.msra.mxu0 0.0
  %3761 = vmatprep.subr.mxu0 0.0
  %3762 = vmatpush2.msra.mxu0 0.0
  %3763 = vmatprep.subr.mxu0 0.0
  %3764 = vmatpush2.msra.mxu0 0.0
  %3765 = vmatprep.subr.mxu0 0.0
  %3766 = vmatpush2.msra.mxu0 0.0
  %3767 = vmatprep.subr.mxu0 0.0
  %3768 = vmatpush2.msra.mxu0 0.0
  %3769 = vmatprep.subr.mxu0 0.0
  %3770 = vmatpush2.msra.mxu0 0.0
  %3771 = vmatprep.subr.mxu0 0.0
  %3772 = vmatpush2.msra.mxu0 0.0
  %3773 = vmatprep.subr.mxu0 0.0
  %3774 = vmatpush2.msra.mxu0 0.0
  %3775 = vmatprep.subr.mxu0 0.0
  %3776 = vmatpush2.msra.mxu0 0.0
  %3777 = vmatprep.subr.mxu0 0.0
  %3778 = vmatpush2.msra.mxu0 0.0
  %3779 = vmatprep.subr.mxu0 0.0
  %3780 = vmatpush2.msra.mxu0 0.0
  %3781 = vmatprep.subr.mxu0 0.0
  %3782 = vmatpush2.msra.mxu0 0.0
  %3783 = vmatprep.subr.mxu0 0.0
  %3784 = vmatpush2.msra.mxu0 0.0
  %3785 = vmatprep.mubr.f32.mxu0 0.0
  %3786 = vmatmul.mubr.f32.gmra.mxu0 %v3645
  %v3787 = vpop.f32.mrf.mxu0
  %v3788 = vadd.f32 0.0, %v3787
  %v3789 = vpop.f32.mrf.mxu0
  %v3790 = vadd.f32 0.0, %v3789
  %3791 = vdwg.mxu0
  %v3792 = vadd.f32 %v3646, %v3717
  %v3793 = vadd.f32 %v3647, %v3719
  %v3794 = vadd.f32 %v3648, %v3788
  %v3795 = vadd.f32 %v3649, %v3790
  %v3796 = vxor.u32 %v3792, 2147483648
  %v3797 = vxor.u32 %v3793, 2147483648
  %v3798 = vxor.u32 %v3794, 2147483648
  %v3799 = vmul.f32 %v3796, 1.442695
  %v3800 = vpow.pop %v3799
  %v3801 = vmul.f32 %v3797, 1.442695
  %v3802 = vpow.pop %v3801
  %v3803 = vmul.f32 %v3798, 1.442695
  %v3804 = vpow.pop %v3803
  %v3805 = vadd.f32 %v3800, 1.0
  %v3806 = vadd.f32 %v3802, 1.0
  %v3807 = vadd.f32 %v3804, 1.0
  %v3808 = vrcp.pop %v3805
  %v3809 = vmul.f32 1.0, %v3808
  %v3810 = vrcp.pop %v3806
  %v3811 = vmul.f32 1.0, %v3810
  %v3812 = vrcp.pop %v3807
  %v3813 = vmul.f32 1.0, %v3812
  %v3814 = vtanh.pop %v3795
  %v3815 = vmul.f32 %v3811, %v3643
  %v3816 = vmul.f32 %v3809, %v3814
  %v3817 = vadd.f32 %v3815, %v3816
  %v3818 = vtanh.pop %v3817
  %v3819 = vmul.f32 %v3813, %v3818
  %v3820 = vld [vmem:[%s6] sm:$0xff]
  %v3821 = vld [vmem:[%s6 + $0x8] sm:$0xff]
  %v3822 = vld [vmem:[%s6 + $0x10] sm:$0xff]
  %v3823 = vld [vmem:[%s6 + $0x18] sm:$0xff]
  %v3824 = vld [vmem:[%s6 + $0x20] sm:$0xff]
  %v3825 = vld [vmem:[%s6 + $0x28] sm:$0xff]
  %v3826 = vld [vmem:[%s6 + $0x30] sm:$0xff]
  %v3827 = vld [vmem:[%s6 + $0x38] sm:$0xff]
  %v3828 = vld [vmem:[%s6 + $0x40] sm:$0xff]
  %v3829 = vld [vmem:[%s6 + $0x48] sm:$0xff]
  %v3830 = vld [vmem:[%s6 + $0x50] sm:$0xff]
  %v3831 = vld [vmem:[%s6 + $0x58] sm:$0xff]
  %v3832 = vld [vmem:[%s6 + $0x60] sm:$0xff]
  %v3833 = vld [vmem:[%s6 + $0x68] sm:$0xff]
  %v3834 = vld [vmem:[%s6 + $0x70] sm:$0xff]
  %v3835 = vld [vmem:[%s6 + $0x78] sm:$0xff]
  %v3836 = vld [vmem:[%s7] sm:$0x1]
  %v3838 = vlaneseq
  %v3839 = vshrl.u32 %v3838, 7
  %v3840 = vsub.s32 0, %v3839
  %v3841 = vrot.slane %v3836, %v3840
  %3843 = vmatprep.subr.mxu0 0.0
  %3844 = vmatpush1.msra.mxu0 %v3835
  %3845 = vmatprep.subr.mxu0 0.0
  %3846 = vmatpush1.msra.mxu0 %v3834
  %3847 = vmatprep.subr.mxu0 0.0
  %3848 = vmatpush1.msra.mxu0 %v3833
  %3849 = vmatprep.subr.mxu0 0.0
  %3850 = vmatpush1.msra.mxu0 %v3832
  %3851 = vmatprep.subr.mxu0 0.0
  %3852 = vmatpush1.msra.mxu0 %v3831
  %3853 = vmatprep.subr.mxu0 0.0
  %3854 = vmatpush1.msra.mxu0 %v3830
  %3855 = vmatprep.subr.mxu0 0.0
  %3856 = vmatpush1.msra.mxu0 %v3829
  %3857 = vmatprep.subr.mxu0 0.0
  %3858 = vmatpush1.msra.mxu0 %v3828
  %3859 = vmatprep.subr.mxu0 0.0
  %3860 = vmatpush1.msra.mxu0 %v3827
  %3861 = vmatprep.subr.mxu0 0.0
  %3862 = vmatpush1.msra.mxu0 %v3826
  %3863 = vmatprep.subr.mxu0 0.0
  %3864 = vmatpush1.msra.mxu0 %v3825
  %3865 = vmatprep.subr.mxu0 0.0
  %3866 = vmatpush1.msra.mxu0 %v3824
  %3867 = vmatprep.subr.mxu0 0.0
  %3868 = vmatpush1.msra.mxu0 %v3823
  %3869 = vmatprep.subr.mxu0 0.0
  %3870 = vmatpush1.msra.mxu0 %v3822
  %3871 = vmatprep.subr.mxu0 0.0
  %3872 = vmatpush1.msra.mxu0 %v3821
  %3873 = vmatprep.subr.mxu0 0.0
  %3874 = vmatpush1.msra.mxu0 %v3820
  %3875 = vmatprep.subr.mxu0 0.0
  %3876 = vmatpush2.msra.mxu0 0.0
  %3877 = vmatprep.subr.mxu0 0.0
  %3878 = vmatpush2.msra.mxu0 0.0
  %3879 = vmatprep.subr.mxu0 0.0
  %3880 = vmatpush2.msra.mxu0 0.0
  %3881 = vmatprep.subr.mxu0 0.0
  %3882 = vmatpush2.msra.mxu0 0.0
  %3883 = vmatprep.subr.mxu0 0.0
  %3884 = vmatpush2.msra.mxu0 0.0
  %3885 = vmatprep.subr.mxu0 0.0
  %3886 = vmatpush2.msra.mxu0 0.0
  %3887 = vmatprep.subr.mxu0 0.0
  %3888 = vmatpush2.msra.mxu0 0.0
  %3889 = vmatprep.subr.mxu0 0.0
  %3890 = vmatpush2.msra.mxu0 0.0
  %3891 = vmatprep.subr.mxu0 0.0
  %3892 = vmatpush2.msra.mxu0 0.0
  %3893 = vmatprep.subr.mxu0 0.0
  %3894 = vmatpush2.msra.mxu0 0.0
  %3895 = vmatprep.subr.mxu0 0.0
  %3896 = vmatpush2.msra.mxu0 0.0
  %3897 = vmatprep.subr.mxu0 0.0
  %3898 = vmatpush2.msra.mxu0 0.0
  %3899 = vmatprep.subr.mxu0 0.0
  %3900 = vmatpush2.msra.mxu0 0.0
  %3901 = vmatprep.subr.mxu0 0.0
  %3902 = vmatpush2.msra.mxu0 0.0
  %3903 = vmatprep.subr.mxu0 0.0
  %3904 = vmatpush2.msra.mxu0 0.0
  %3905 = vmatprep.subr.mxu0 0.0
  %3906 = vmatpush2.msra.mxu0 0.0
  %3907 = vmatprep.mubr.f32.mxu0 0.0
  %3908 = vmatmul.mubr.f32.gmra.mxu0 %v3819
  %v3909 = vpop.f32.mrf.mxu0
  %v3910 = vadd.f32 %v3841, %v3909
  %v3911 = vpop.f32.mrf.mxu0
  %3912 = vdwg.mxu0
  %v3913 = vmax.f32 %v3910, 0.0
  %v3914 = vld [vmem:[%s8] sm:$0xff]
  %v3915 = vld [vmem:[%s8 + $0x8] sm:$0xff]
  %v3916 = vld [vmem:[%s8 + $0x10] sm:$0xff]
  %v3917 = vld [vmem:[%s8 + $0x18] sm:$0xff]
  %v3918 = vld [vmem:[%s8 + $0x20] sm:$0xff]
  %v3919 = vld [vmem:[%s8 + $0x28] sm:$0xff]
  %v3920 = vld [vmem:[%s8 + $0x30] sm:$0xff]
  %v3921 = vld [vmem:[%s8 + $0x38] sm:$0xff]
  %v3922 = vld [vmem:[%s8 + $0x40] sm:$0xff]
  %v3923 = vld [vmem:[%s8 + $0x48] sm:$0xff]
  %v3924 = vld [vmem:[%s8 + $0x50] sm:$0xff]
  %v3925 = vld [vmem:[%s8 + $0x58] sm:$0xff]
  %v3926 = vld [vmem:[%s8 + $0x60] sm:$0xff]
  %v3927 = vld [vmem:[%s8 + $0x68] sm:$0xff]
  %v3928 = vld [vmem:[%s8 + $0x70] sm:$0xff]
  %v3929 = vld [vmem:[%s8 + $0x78] sm:$0xff]
  %v3930 = vld [vmem:[%s9] sm:$0x1]
  %v3932 = vlaneseq
  %v3933 = vshrl.u32 %v3932, 7
  %v3934 = vsub.s32 0, %v3933
  %v3935 = vrot.slane %v3930, %v3934
  %3937 = vmatprep.subr.mxu0 0.0
  %3938 = vmatpush1.msra.mxu0 %v3929
  %3939 = vmatprep.subr.mxu0 0.0
  %3940 = vmatpush1.msra.mxu0 %v3928
  %3941 = vmatprep.subr.mxu0 0.0
  %3942 = vmatpush1.msra.mxu0 %v3927
  %3943 = vmatprep.subr.mxu0 0.0
  %3944 = vmatpush1.msra.mxu0 %v3926
  %3945 = vmatprep.subr.mxu0 0.0
  %3946 = vmatpush1.msra.mxu0 %v3925
  %3947 = vmatprep.subr.mxu0 0.0
  %3948 = vmatpush1.msra.mxu0 %v3924
  %3949 = vmatprep.subr.mxu0 0.0
  %3950 = vmatpush1.msra.mxu0 %v3923
  %3951 = vmatprep.subr.mxu0 0.0
  %3952 = vmatpush1.msra.mxu0 %v3922
  %3953 = vmatprep.subr.mxu0 0.0
  %3954 = vmatpush1.msra.mxu0 %v3921
  %3955 = vmatprep.subr.mxu0 0.0
  %3956 = vmatpush1.msra.mxu0 %v3920
  %3957 = vmatprep.subr.mxu0 0.0
  %3958 = vmatpush1.msra.mxu0 %v3919
  %3959 = vmatprep.subr.mxu0 0.0
  %3960 = vmatpush1.msra.mxu0 %v3918
  %3961 = vmatprep.subr.mxu0 0.0
  %3962 = vmatpush1.msra.mxu0 %v3917
  %3963 = vmatprep.subr.mxu0 0.0
  %3964 = vmatpush1.msra.mxu0 %v3916
  %3965 = vmatprep.subr.mxu0 0.0
  %3966 = vmatpush1.msra.mxu0 %v3915
  %3967 = vmatprep.subr.mxu0 0.0
  %3968 = vmatpush1.msra.mxu0 %v3914
  %3969 = vmatprep.subr.mxu0 0.0
  %3970 = vmatpush2.msra.mxu0 0.0
  %3971 = vmatprep.subr.mxu0 0.0
  %3972 = vmatpush2.msra.mxu0 0.0
  %3973 = vmatprep.subr.mxu0 0.0
  %3974 = vmatpush2.msra.mxu0 0.0
  %3975 = vmatprep.subr.mxu0 0.0
  %3976 = vmatpush2.msra.mxu0 0.0
  %3977 = vmatprep.subr.mxu0 0.0
  %3978 = vmatpush2.msra.mxu0 0.0
  %3979 = vmatprep.subr.mxu0 0.0
  %3980 = vmatpush2.msra.mxu0 0.0
  %3981 = vmatprep.subr.mxu0 0.0
  %3982 = vmatpush2.msra.mxu0 0.0
  %3983 = vmatprep.subr.mxu0 0.0
  %3984 = vmatpush2.msra.mxu0 0.0
  %3985 = vmatprep.subr.mxu0 0.0
  %3986 = vmatpush2.msra.mxu0 0.0
  %3987 = vmatprep.subr.mxu0 0.0
  %3988 = vmatpush2.msra.mxu0 0.0
  %3989 = vmatprep.subr.mxu0 0.0
  %3990 = vmatpush2.msra.mxu0 0.0
  %3991 = vmatprep.subr.mxu0 0.0
  %3992 = vmatpush2.msra.mxu0 0.0
  %3993 = vmatprep.subr.mxu0 0.0
  %3994 = vmatpush2.msra.mxu0 0.0
  %3995 = vmatprep.subr.mxu0 0.0
  %3996 = vmatpush2.msra.mxu0 0.0
  %3997 = vmatprep.subr.mxu0 0.0
  %3998 = vmatpush2.msra.mxu0 0.0
  %3999 = vmatprep.subr.mxu0 0.0
  %4000 = vmatpush2.msra.mxu0 0.0
  %4001 = vmatprep.mubr.f32.mxu0 0.0
  %4002 = vmatmul.mubr.f32.gmra.mxu0 %v3913
  %v4003 = vpop.f32.mrf.mxu0
  %v4004 = vadd.f32 %v3935, %v4003
  %v4005 = vpop.f32.mrf.mxu0
  %4006 = vdwg.mxu0
  %4007 = vst [vmem:[%s10] sm:$0xff] %v4004
  // Predicated region
  $region42: #{lstm_forward.1} parent=0 // pred_check
    _
  $region43: #{lstm_forward.1} parent=0 // pred_check_branch
    %4009 = sbr.rel (0) target = $region45
  $region44: #{lstm_forward.1} parent=0 // pred_region
    _
  $region45: #{lstm_forward.1} parent=0 // pred_fallthru
    _
  // Predicated region
  $region46: #{lstm_forward.1} parent=0 // pred_check
    _
  $region47: #{lstm_forward.1} parent=0 // pred_check_branch
    %4011 = sbr.rel (0) target = $region49
  $region48: #{lstm_forward.1} parent=0 // pred_region
    _
  $region49: #{lstm_forward.1} parent=0 // pred_fallthru
    _

</llo_original>
